<compile_context>
chip_gen: v7x
topology: tpu7x:2x2x1
jax: 0.10.0
libtpu: 0.0.40
codegen_flags: <defaults>
</compile_context>

<pallas_src>
import jax
import jax.numpy as jnp
import numpy as np
from jax.experimental import pallas as pl
from jax.experimental.pallas import tpu as pltpu

# ----------------------------- static problem geometry -----------------------------
CIN = 3
COUT1, COUT1_PAD = 6, 8            # conv1 out channels, padded to 8 for sublane alignment
K1, STRIDE1, POOL1 = 75, 2, 10
COUT2 = 8
K2, STRIDE2, POOL2 = 50, 2, 3
P2 = STRIDE2 * POOL2               # 6   conv2 input phases
P1 = STRIDE1 * POOL1 * P2          # 120 conv1 input phases (stride1 * pool1 * conv2-phase)
S1 = (STRIDE1 * (POOL1 * (P2 - 1) + (POOL1 - 1)) + K1 - 1) // P1 + 1   # 2 conv1 taps
S2 = (STRIDE2 * (POOL2 - 1) + K2 - 1) // P2 + 1                        # 9 conv2 taps
M1 = 166                           # conv1 GEMM output columns (= pooled1 len 996 / P2)
M2 = 158                           # pooled2 length
LPH1 = M1 + S1 - 1                 # 167
L_IN = 19993                       # pinned by fc1's 1264 = 8 * 158 flattened features
N_HID, N_CLS = 128, 3
D1 = P1 * CIN                      # 360
R1 = POOL1 * P2 * COUT1_PAD        # 480 rows of expanded conv1 weight   (w1, p2, co)
C1 = S1 * D1                       # 720 cols of expanded conv1 weight   (s, q, ci)
D2 = P2 * COUT1_PAD                # 48
R2 = POOL2 * COUT2                 # 24  rows of expanded conv2 weight   (w2, co)
C2 = S2 * D2                       # 432 cols of expanded conv2 weight   (s, p, ci)


# ----------------------------- fused Pallas kernel -----------------------------

def _fused_kernel(x1_ref, w1_ref, b1_ref, w2_ref, b2_ref,
                  wf1_ref, bf1_ref, wf2_ref, bf2_ref, o_ref, x2_ref):
    """Entire forward for ONE batch element, everything VMEM-resident.

    x1_ref : (1, 720, 166)  host-assembled conv1 GEMM input (120 phases x 2 taps)
    w1_ref : (480, 720)     expanded conv1 weight, rows (w1, p2, co)
    w2_ref : (24, 432)      expanded conv2 weight, rows (w2, co), cols (s, p, ci)
    wf1_ref: (8, 158, 128)  fc1 weight reshaped to (channel, pos, hidden)
    o_ref  : (1, 1, 3)      softmax probabilities
    x2_ref : (432, 158)     VMEM scratch for the conv2 tap assembly
    """
    # ---- conv1 + bias + ReLU : one K=720 GEMM ----
    y1 = jnp.dot(w1_ref[...], x1_ref[0], preferred_element_type=jnp.float32)  # (480,166)
    y1 = jnp.maximum(y1 + b1_ref[...], 0.0)

    # ---- pool1: max over the 10 w1-groups (48-row aligned slices) ----
    # result row p2*8 + co, col t  ==  pool1_out[co, 6t + p2]  (= conv2 phase layout)
    pooled1 = y1[0:D2, :]
    for j in range(1, POOL1):
        pooled1 = jnp.maximum(pooled1, y1[j * D2:(j + 1) * D2, :])            # (48,166)

    # ---- conv2 tap assembly into VMEM scratch: x2[s*48 + r, m] = pooled1[r, m+s] ----
    for s in range(S2):
        x2_ref[s * D2:(s + 1) * D2, :] = pooled1[:, s:s + M2]

    # ---- conv2 + bias + ReLU : one K=432 GEMM ; pool2 over the 3 w2-groups ----
    y2 = jnp.dot(w2_ref[...], x2_ref[...], preferred_element_type=jnp.float32)  # (24,158)
    y2 = jnp.maximum(y2 + b2_ref[...], 0.0)
    h2 = y2[0:COUT2, :]
    for w in range(1, POOL2):
        h2 = jnp.maximum(h2, y2[w * COUT2:(w + 1) * COUT2, :])                # (8,158)

    # ---- fc1 + ReLU : contract (c, l) against wf1 reshaped (8,158,128), no flatten ----
    h = jnp.dot(h2[0:1, :], wf1_ref[0], preferred_element_type=jnp.float32)   # (1,128)
    for c in range(1, COUT2):
        h = h + jnp.dot(h2[c:c + 1, :], wf1_ref[c], preferred_element_type=jnp.float32)
    h = jnp.maximum(h + bf1_ref[...], 0.0)

    # ---- fc2 + softmax(dim=1) ----
    z = jnp.dot(h, wf2_ref[...], preferred_element_type=jnp.float32) + bf2_ref[...]
    z = z - jnp.max(z, axis=-1, keepdims=True)
    e = jnp.exp(z)
    o_ref[0] = e / jnp.sum(e, axis=-1, keepdims=True)


# ----------------------------- host-side layout plumbing -----------------------------

def _phase_split_conv1(x):
    """(B, 3, L) -> (B, 720, 166) conv1 GEMM input.

    Row s*360 + q*3 + ci, col t  ==  x[ci, 120*(t+s) + q].  Tail zero-padding (47 cols of
    the raw signal) only ever meets zero weight columns (max used index is 19992)."""
    B, C, L = x.shape
    pad = P1 * LPH1 - L
    xp = jnp.pad(x, ((0, 0), (0, 0), (0, pad)))
    xp = xp.reshape(B, C, LPH1, P1)            # [b, ci, t, q]
    xp = jnp.transpose(xp, (0, 3, 1, 2))        # [b, q, ci, t]
    xp = xp.reshape(B, D1, LPH1)                # row q*3 + ci
    return jnp.concatenate([xp[:, :, s:s + M1] for s in range(S1)], axis=1)  # (B,720,166)


def feature_extractor_forward(x, params):
    B = x.shape[0]
    x1 = _phase_split_conv1(x)                  # the only XLA glue (<1 MB)
    out = pl.pallas_call(
        _fused_kernel,
        out_shape=jax.ShapeDtypeStruct((B, 1, N_CLS), jnp.float32),
        grid=(B,),
        in_specs=[
            pl.BlockSpec((1, C1, M1), lambda i: (i, 0, 0)),        # per-batch input block
            pl.BlockSpec((R1, C1), lambda i: (0, 0)),              # conv1 expanded weight
            pl.BlockSpec((R1, 1), lambda i: (0, 0)),               # conv1 bias
            pl.BlockSpec((R2, C2), lambda i: (0, 0)),              # conv2 expanded weight
            pl.BlockSpec((R2, 1), lambda i: (0, 0)),               # conv2 bias
            pl.BlockSpec((COUT2, M2, N_HID), lambda i: (0, 0, 0)),  # fc1 weight (8,158,128)
            pl.BlockSpec((1, N_HID), lambda i: (0, 0)),            # fc1 bias
            pl.BlockSpec((N_HID, N_CLS), lambda i: (0, 0)),        # fc2 weight
            pl.BlockSpec((1, N_CLS), lambda i: (0, 0)),            # fc2 bias
        ],
        out_specs=pl.BlockSpec((1, 1, N_CLS), lambda i: (i, 0, 0)),
        scratch_shapes=[pltpu.VMEM((C2, M2), jnp.float32)],        # conv2 tap assembly
        compiler_params=pltpu.CompilerParams(
            dimension_semantics=("parallel",),          # batch -> both v7x TensorCores
            vmem_limit_bytes=16 * 1024 * 1024),         # actual use ~8 MB incl. buffers
    )(x1, params["w1e"], params["b1e"], params["w2e"], params["b2e"],
      params["wf1r"], params["bf1"], params["wf2"], params["bf2"])
    return out.reshape(B, N_CLS)


# ----------------------------- parameter expansion (host, numpy) -----------------------------

def _expand_conv1_params(w, b):
    """(6,3,75) conv1 -> (480,720) GEMM weight whose pooled output is already in conv2's
    6-phase layout.  Row r = w1*48 + p2*8 + co (cout padded 6->8, pad rows zero);
    col = s*360 + q*3 + ci holds w[co,ci,k] with 120*s + q = 20*p2 + 2*w1 + k."""
    w = np.asarray(w, np.float32)
    b = np.asarray(b, np.float32)
    W = np.zeros((R1, C1), np.float32)
    Bm = np.zeros((R1, 1), np.float32)
    for w1 in range(POOL1):
        for p2 in range(P2):
            for co in range(COUT1):
                r = w1 * D2 + p2 * COUT1_PAD + co
                Bm[r, 0] = b[co]
                base = STRIDE1 * (POOL1 * p2 + w1)          # 20*p2 + 2*w1
                for k in range(K1):
                    s, q = divmod(base + k, P1)
                    col = s * D1 + q * CIN
                    W[r, col:col + CIN] = w[co, :, k]
    return jnp.asarray(W), jnp.asarray(Bm)


def _expand_conv2_params(w, b):
    """(8,6,50) conv2 -> (24,432).  Row r = w2*8 + co; col = s*48 + p*8 + ci over the
    padded 8 conv1 channels (pad-channel columns zero); value w[co,ci,k], k = 6s+p-2*w2."""
    w = np.asarray(w, np.float32)
    b = np.asarray(b, np.float32)
    W = np.zeros((R2, C2), np.float32)
    Bm = np.zeros((R2, 1), np.float32)
    for w2 in range(POOL2):
        for co in range(COUT2):
            r = w2 * COUT2 + co
            Bm[r, 0] = b[co]
            base = STRIDE2 * w2
            for k in range(K2):
                s, p = divmod(base + k, P2)
                col = s * D2 + p * COUT1_PAD
                W[r, col:col + COUT1] = w[co, :, k]
    return jnp.asarray(W), jnp.asarray(Bm)


def init_params(key):
    ks = jax.random.split(key, 8)

    def u(k, shape, fan_in):
        bound = 1.0 / np.sqrt(fan_in)
        return jax.random.uniform(k, shape, jnp.float32, -bound, bound)

    raw = {  # PyTorch-shaped parameters (used by the plain-JAX reference)
        "w1": u(ks[0], (COUT1, CIN, K1), CIN * K1),      "b1": u(ks[1], (COUT1,), CIN * K1),
        "w2": u(ks[2], (COUT2, COUT1, K2), COUT1 * K2),  "b2": u(ks[3], (COUT2,), COUT1 * K2),
        "wf1": u(ks[4], (N_HID, COUT2 * M2), COUT2 * M2),
        "bf1": u(ks[5], (N_HID,), COUT2 * M2),
        "wf2": u(ks[6], (N_CLS, N_HID), N_HID),          "bf2": u(ks[7], (N_CLS,), N_HID),
    }
    w1e, b1e = _expand_conv1_params(raw["w1"], raw["b1"])      # (480,720), (480,1)
    w2e, b2e = _expand_conv2_params(raw["w2"], raw["b2"])      # (24,432),  (24,1)
    wf1r = np.asarray(raw["wf1"]).reshape(N_HID, COUT2, M2).transpose(1, 2, 0)  # (8,158,128)
    params = {  # kernel-layout parameters
        "w1e": w1e, "b1e": b1e, "w2e": w2e, "b2e": b2e,
        "wf1r": jnp.asarray(wf1r),
        "bf1": jnp.asarray(np.asarray(raw["bf1"]).reshape(1, N_HID)),
        "wf2": jnp.asarray(np.asarray(raw["wf2"]).T),
        "bf2": jnp.asarray(np.asarray(raw["bf2"]).reshape(1, N_CLS)),
    }
    return raw, params


# ----------------------------- plain-JAX reference (f32 HIGHEST) -----------------------------

def reference_forward(x, raw):
    hi = jax.lax.Precision.HIGHEST

    def conv1d(h, w, b, stride):
        y = jax.lax.conv_general_dilated(
            h, w, window_strides=(stride,), padding="VALID",
            dimension_numbers=("NCH", "OIH", "NCH"), precision=hi)
        return y + b[None, :, None]

    def maxpool(h, k):
        B, C, L = h.shape
        Lp = L // k
        return jnp.max(h[:, :, : Lp * k].reshape(B, C, Lp, k), axis=-1)

    h = jax.nn.relu(conv1d(x, raw["w1"], raw["b1"], STRIDE1))
    h = maxpool(h, POOL1)
    h = jax.nn.relu(conv1d(h, raw["w2"], raw["b2"], STRIDE2))
    h = maxpool(h, POOL2)
    h = h.reshape(h.shape[0], -1)
    h = jax.nn.relu(jnp.dot(h, raw["wf1"].T, precision=hi) + raw["bf1"])
    logits = jnp.dot(h, raw["wf2"].T, precision=hi) + raw["bf2"]
    return jax.nn.softmax(logits, axis=1)


# ----------------------------- main -----------------------------

if __name__ == "__main__":
    key = jax.random.PRNGKey(0)
    pkey, xkey = jax.random.split(key)
    raw, params = init_params(pkey)

    # fc1 hard-codes 1264 = 8 * 158 flattened features, which pins the input length:
    # L=19993 -> conv1:9960 -> pool1:996 -> conv2:474 -> pool2:158.
    B, C, L = 2, CIN, L_IN
    x = jax.random.normal(xkey, (B, C, L), dtype=jnp.float32)

    fwd = jax.jit(feature_extractor_forward)
    out = jax.block_until_ready(fwd(x, params))
    assert out.shape == (B, N_CLS), out.shape

    ref = jax.block_until_ready(reference_forward(x, raw))
    if not np.allclose(np.asarray(out), np.asarray(ref), atol=1e-2, rtol=1e-2):
        raise AssertionError("Pallas output mismatch vs plain-JAX reference")
    assert np.allclose(np.asarray(out).sum(axis=1), 1.0, atol=1e-4)

    print("KERNEL_OK")
</pallas_src>

<mosaic_0001>
module attributes {stable_mosaic.version = 11 : i64} {
  func.func @_fused_kernel(%arg0: i32, %arg1: memref<1x720x166xf32, #tpu.memory_space<vmem>>, %arg2: memref<480x720xf32, #tpu.memory_space<vmem>>, %arg3: memref<480x1xf32, #tpu.memory_space<vmem>>, %arg4: memref<24x432xf32, #tpu.memory_space<vmem>>, %arg5: memref<24x1xf32, #tpu.memory_space<vmem>>, %arg6: memref<8x158x128xf32, #tpu.memory_space<vmem>>, %arg7: memref<1x128xf32, #tpu.memory_space<vmem>>, %arg8: memref<128x3xf32, #tpu.memory_space<vmem>>, %arg9: memref<1x3xf32, #tpu.memory_space<vmem>>, %arg10: memref<1x1x3xf32, #tpu.memory_space<vmem>>, %arg11: memref<432x158xf32, #tpu.memory_space<vmem>>) attributes {dimension_semantics = [#tpu.dimension_semantics<parallel>], iteration_bounds = array<i64: 2>, scalar_prefetch = 0 : i64, scratch_operands = 1 : i64, tpu.core_type = #tpu.core_type<tc>, window_params = [{transform_indices = @transform_0, window_bounds = array<i64: 1, 720, 166>}, {pipeline_mode = #tpu.pipeline_mode<synchronous>, transform_indices = @transform_1, window_bounds = array<i64: 480, 720>}, {pipeline_mode = #tpu.pipeline_mode<synchronous>, transform_indices = @transform_2, window_bounds = array<i64: 480, 1>}, {pipeline_mode = #tpu.pipeline_mode<synchronous>, transform_indices = @transform_3, window_bounds = array<i64: 24, 432>}, {pipeline_mode = #tpu.pipeline_mode<synchronous>, transform_indices = @transform_4, window_bounds = array<i64: 24, 1>}, {pipeline_mode = #tpu.pipeline_mode<synchronous>, transform_indices = @transform_5, window_bounds = array<i64: 8, 158, 128>}, {pipeline_mode = #tpu.pipeline_mode<synchronous>, transform_indices = @transform_6, window_bounds = array<i64: 1, 128>}, {pipeline_mode = #tpu.pipeline_mode<synchronous>, transform_indices = @transform_7, window_bounds = array<i64: 128, 3>}, {pipeline_mode = #tpu.pipeline_mode<synchronous>, transform_indices = @transform_8, window_bounds = array<i64: 1, 3>}, {transform_indices = @transform_9, window_bounds = array<i64: 1, 1, 3>}]} {
    %c0 = arith.constant 0 : index
    %c0_0 = arith.constant 0 : index
    %0 = vector.load %arg2[%c0, %c0_0] : memref<480x720xf32, #tpu.memory_space<vmem>>, vector<480x720xf32>
    %c0_1 = arith.constant 0 : index
    %c0_2 = arith.constant 0 : index
    %c0_3 = arith.constant 0 : index
    %1 = vector.load %arg1[%c0_1, %c0_2, %c0_3] : memref<1x720x166xf32, #tpu.memory_space<vmem>>, vector<1x720x166xf32>
    %2 = vector.shape_cast %1 : vector<1x720x166xf32> to vector<720x166xf32>
    %cst = arith.constant dense<0.000000e+00> : vector<480x166xf32>
    %3 = tpu.matmul %0, %2, %cst {dimension_numbers = #tpu.dot_dimension_numbers<[1], [0], [0], [1], [0, 0, 1, 1], [], []>} : vector<480x720xf32>, vector<720x166xf32>, vector<480x166xf32> -> vector<480x166xf32>
    %c0_4 = arith.constant 0 : index
    %c0_5 = arith.constant 0 : index
    %4 = vector.load %arg3[%c0_4, %c0_5] : memref<480x1xf32, #tpu.memory_space<vmem>>, vector<480x1xf32>
    %5 = vector.broadcast %4 : vector<480x1xf32> to vector<480x166xf32>
    %6 = arith.addf %3, %5 : vector<480x166xf32>
    %cst_6 = arith.constant 0.000000e+00 : f32
    %7 = vector.broadcast %cst_6 : f32 to vector<480x166xf32>
    %8 = arith.maximumf %6, %7 : vector<480x166xf32>
    %9 = vector.extract_strided_slice %8 {offsets = [0, 0], sizes = [48, 166], strides = [1, 1]} : vector<480x166xf32> to vector<48x166xf32>
    %10 = vector.extract_strided_slice %8 {offsets = [48, 0], sizes = [48, 166], strides = [1, 1]} : vector<480x166xf32> to vector<48x166xf32>
    %11 = arith.maximumf %9, %10 : vector<48x166xf32>
    %12 = vector.extract_strided_slice %8 {offsets = [96, 0], sizes = [48, 166], strides = [1, 1]} : vector<480x166xf32> to vector<48x166xf32>
    %13 = arith.maximumf %11, %12 : vector<48x166xf32>
    %14 = vector.extract_strided_slice %8 {offsets = [144, 0], sizes = [48, 166], strides = [1, 1]} : vector<480x166xf32> to vector<48x166xf32>
    %15 = arith.maximumf %13, %14 : vector<48x166xf32>
    %16 = vector.extract_strided_slice %8 {offsets = [192, 0], sizes = [48, 166], strides = [1, 1]} : vector<480x166xf32> to vector<48x166xf32>
    %17 = arith.maximumf %15, %16 : vector<48x166xf32>
    %18 = vector.extract_strided_slice %8 {offsets = [240, 0], sizes = [48, 166], strides = [1, 1]} : vector<480x166xf32> to vector<48x166xf32>
    %19 = arith.maximumf %17, %18 : vector<48x166xf32>
    %20 = vector.extract_strided_slice %8 {offsets = [288, 0], sizes = [48, 166], strides = [1, 1]} : vector<480x166xf32> to vector<48x166xf32>
    %21 = arith.maximumf %19, %20 : vector<48x166xf32>
    %22 = vector.extract_strided_slice %8 {offsets = [336, 0], sizes = [48, 166], strides = [1, 1]} : vector<480x166xf32> to vector<48x166xf32>
    %23 = arith.maximumf %21, %22 : vector<48x166xf32>
    %24 = vector.extract_strided_slice %8 {offsets = [384, 0], sizes = [48, 166], strides = [1, 1]} : vector<480x166xf32> to vector<48x166xf32>
    %25 = arith.maximumf %23, %24 : vector<48x166xf32>
    %26 = vector.extract_strided_slice %8 {offsets = [432, 0], sizes = [48, 166], strides = [1, 1]} : vector<480x166xf32> to vector<48x166xf32>
    %27 = arith.maximumf %25, %26 : vector<48x166xf32>
    %28 = vector.extract_strided_slice %27 {offsets = [0, 0], sizes = [48, 158], strides = [1, 1]} : vector<48x166xf32> to vector<48x158xf32>
    %c0_7 = arith.constant 0 : index
    %c0_8 = arith.constant 0 : index
    %29 = vector.load %arg11[%c0_7, %c0_8] : memref<432x158xf32, #tpu.memory_space<vmem>>, vector<48x158xf32>
    tpu.vector_store %arg11[%c0_7, %c0_8], %28 {strides = array<i32>} : memref<432x158xf32, #tpu.memory_space<vmem>>, vector<48x158xf32>,
    %30 = vector.extract_strided_slice %27 {offsets = [0, 1], sizes = [48, 158], strides = [1, 1]} : vector<48x166xf32> to vector<48x158xf32>
    %c48 = arith.constant 48 : index
    %c0_9 = arith.constant 0 : index
    %31 = vector.load %arg11[%c48, %c0_9] : memref<432x158xf32, #tpu.memory_space<vmem>>, vector<48x158xf32>
    tpu.vector_store %arg11[%c48, %c0_9], %30 {strides = array<i32>} : memref<432x158xf32, #tpu.memory_space<vmem>>, vector<48x158xf32>,
    %32 = vector.extract_strided_slice %27 {offsets = [0, 2], sizes = [48, 158], strides = [1, 1]} : vector<48x166xf32> to vector<48x158xf32>
    %c96 = arith.constant 96 : index
    %c0_10 = arith.constant 0 : index
    %33 = vector.load %arg11[%c96, %c0_10] : memref<432x158xf32, #tpu.memory_space<vmem>>, vector<48x158xf32>
    tpu.vector_store %arg11[%c96, %c0_10], %32 {strides = array<i32>} : memref<432x158xf32, #tpu.memory_space<vmem>>, vector<48x158xf32>,
    %34 = vector.extract_strided_slice %27 {offsets = [0, 3], sizes = [48, 158], strides = [1, 1]} : vector<48x166xf32> to vector<48x158xf32>
    %c144 = arith.constant 144 : index
    %c0_11 = arith.constant 0 : index
    %35 = vector.load %arg11[%c144, %c0_11] : memref<432x158xf32, #tpu.memory_space<vmem>>, vector<48x158xf32>
    tpu.vector_store %arg11[%c144, %c0_11], %34 {strides = array<i32>} : memref<432x158xf32, #tpu.memory_space<vmem>>, vector<48x158xf32>,
    %36 = vector.extract_strided_slice %27 {offsets = [0, 4], sizes = [48, 158], strides = [1, 1]} : vector<48x166xf32> to vector<48x158xf32>
    %c192 = arith.constant 192 : index
    %c0_12 = arith.constant 0 : index
    %37 = vector.load %arg11[%c192, %c0_12] : memref<432x158xf32, #tpu.memory_space<vmem>>, vector<48x158xf32>
    tpu.vector_store %arg11[%c192, %c0_12], %36 {strides = array<i32>} : memref<432x158xf32, #tpu.memory_space<vmem>>, vector<48x158xf32>,
    %38 = vector.extract_strided_slice %27 {offsets = [0, 5], sizes = [48, 158], strides = [1, 1]} : vector<48x166xf32> to vector<48x158xf32>
    %c240 = arith.constant 240 : index
    %c0_13 = arith.constant 0 : index
    %39 = vector.load %arg11[%c240, %c0_13] : memref<432x158xf32, #tpu.memory_space<vmem>>, vector<48x158xf32>
    tpu.vector_store %arg11[%c240, %c0_13], %38 {strides = array<i32>} : memref<432x158xf32, #tpu.memory_space<vmem>>, vector<48x158xf32>,
    %40 = vector.extract_strided_slice %27 {offsets = [0, 6], sizes = [48, 158], strides = [1, 1]} : vector<48x166xf32> to vector<48x158xf32>
    %c288 = arith.constant 288 : index
    %c0_14 = arith.constant 0 : index
    %41 = vector.load %arg11[%c288, %c0_14] : memref<432x158xf32, #tpu.memory_space<vmem>>, vector<48x158xf32>
    tpu.vector_store %arg11[%c288, %c0_14], %40 {strides = array<i32>} : memref<432x158xf32, #tpu.memory_space<vmem>>, vector<48x158xf32>,
    %42 = vector.extract_strided_slice %27 {offsets = [0, 7], sizes = [48, 158], strides = [1, 1]} : vector<48x166xf32> to vector<48x158xf32>
    %c336 = arith.constant 336 : index
    %c0_15 = arith.constant 0 : index
    %43 = vector.load %arg11[%c336, %c0_15] : memref<432x158xf32, #tpu.memory_space<vmem>>, vector<48x158xf32>
    tpu.vector_store %arg11[%c336, %c0_15], %42 {strides = array<i32>} : memref<432x158xf32, #tpu.memory_space<vmem>>, vector<48x158xf32>,
    %44 = vector.extract_strided_slice %27 {offsets = [0, 8], sizes = [48, 158], strides = [1, 1]} : vector<48x166xf32> to vector<48x158xf32>
    %c384 = arith.constant 384 : index
    %c0_16 = arith.constant 0 : index
    %45 = vector.load %arg11[%c384, %c0_16] : memref<432x158xf32, #tpu.memory_space<vmem>>, vector<48x158xf32>
    tpu.vector_store %arg11[%c384, %c0_16], %44 {strides = array<i32>} : memref<432x158xf32, #tpu.memory_space<vmem>>, vector<48x158xf32>,
    %c0_17 = arith.constant 0 : index
    %c0_18 = arith.constant 0 : index
    %46 = vector.load %arg4[%c0_17, %c0_18] : memref<24x432xf32, #tpu.memory_space<vmem>>, vector<24x432xf32>
    %c0_19 = arith.constant 0 : index
    %c0_20 = arith.constant 0 : index
    %47 = vector.load %arg11[%c0_19, %c0_20] : memref<432x158xf32, #tpu.memory_space<vmem>>, vector<432x158xf32>
    %cst_21 = arith.constant dense<0.000000e+00> : vector<24x158xf32>
    %48 = tpu.matmul %46, %47, %cst_21 {dimension_numbers = #tpu.dot_dimension_numbers<[1], [0], [0], [1], [0, 0, 1, 1], [], []>} : vector<24x432xf32>, vector<432x158xf32>, vector<24x158xf32> -> vector<24x158xf32>
    %c0_22 = arith.constant 0 : index
    %c0_23 = arith.constant 0 : index
    %49 = vector.load %arg5[%c0_22, %c0_23] : memref<24x1xf32, #tpu.memory_space<vmem>>, vector<24x1xf32>
    %50 = vector.broadcast %49 : vector<24x1xf32> to vector<24x158xf32>
    %51 = arith.addf %48, %50 : vector<24x158xf32>
    %cst_24 = arith.constant 0.000000e+00 : f32
    %52 = vector.broadcast %cst_24 : f32 to vector<24x158xf32>
    %53 = arith.maximumf %51, %52 : vector<24x158xf32>
    %54 = vector.extract_strided_slice %53 {offsets = [0, 0], sizes = [8, 158], strides = [1, 1]} : vector<24x158xf32> to vector<8x158xf32>
    %55 = vector.extract_strided_slice %53 {offsets = [8, 0], sizes = [8, 158], strides = [1, 1]} : vector<24x158xf32> to vector<8x158xf32>
    %56 = arith.maximumf %54, %55 : vector<8x158xf32>
    %57 = vector.extract_strided_slice %53 {offsets = [16, 0], sizes = [8, 158], strides = [1, 1]} : vector<24x158xf32> to vector<8x158xf32>
    %58 = arith.maximumf %56, %57 : vector<8x158xf32>
    %59 = vector.extract_strided_slice %58 {offsets = [0, 0], sizes = [1, 158], strides = [1, 1]} : vector<8x158xf32> to vector<1x158xf32>
    %c0_25 = arith.constant 0 : index
    %c0_26 = arith.constant 0 : index
    %c0_27 = arith.constant 0 : index
    %60 = vector.load %arg6[%c0_25, %c0_26, %c0_27] : memref<8x158x128xf32, #tpu.memory_space<vmem>>, vector<1x158x128xf32>
    %61 = vector.shape_cast %60 : vector<1x158x128xf32> to vector<158x128xf32>
    %cst_28 = arith.constant dense<0.000000e+00> : vector<1x128xf32>
    %62 = tpu.matmul %59, %61, %cst_28 {dimension_numbers = #tpu.dot_dimension_numbers<[1], [0], [0], [1], [0, 0, 1, 1], [], []>} : vector<1x158xf32>, vector<158x128xf32>, vector<1x128xf32> -> vector<1x128xf32>
    %63 = vector.extract_strided_slice %58 {offsets = [1, 0], sizes = [1, 158], strides = [1, 1]} : vector<8x158xf32> to vector<1x158xf32>
    %c1 = arith.constant 1 : index
    %c0_29 = arith.constant 0 : index
    %c0_30 = arith.constant 0 : index
    %64 = vector.load %arg6[%c1, %c0_29, %c0_30] : memref<8x158x128xf32, #tpu.memory_space<vmem>>, vector<1x158x128xf32>
    %65 = vector.shape_cast %64 : vector<1x158x128xf32> to vector<158x128xf32>
    %cst_31 = arith.constant dense<0.000000e+00> : vector<1x128xf32>
    %66 = tpu.matmul %63, %65, %cst_31 {dimension_numbers = #tpu.dot_dimension_numbers<[1], [0], [0], [1], [0, 0, 1, 1], [], []>} : vector<1x158xf32>, vector<158x128xf32>, vector<1x128xf32> -> vector<1x128xf32>
    %67 = arith.addf %62, %66 : vector<1x128xf32>
    %68 = vector.extract_strided_slice %58 {offsets = [2, 0], sizes = [1, 158], strides = [1, 1]} : vector<8x158xf32> to vector<1x158xf32>
    %c2 = arith.constant 2 : index
    %c0_32 = arith.constant 0 : index
    %c0_33 = arith.constant 0 : index
    %69 = vector.load %arg6[%c2, %c0_32, %c0_33] : memref<8x158x128xf32, #tpu.memory_space<vmem>>, vector<1x158x128xf32>
    %70 = vector.shape_cast %69 : vector<1x158x128xf32> to vector<158x128xf32>
    %cst_34 = arith.constant dense<0.000000e+00> : vector<1x128xf32>
    %71 = tpu.matmul %68, %70, %cst_34 {dimension_numbers = #tpu.dot_dimension_numbers<[1], [0], [0], [1], [0, 0, 1, 1], [], []>} : vector<1x158xf32>, vector<158x128xf32>, vector<1x128xf32> -> vector<1x128xf32>
    %72 = arith.addf %67, %71 : vector<1x128xf32>
    %73 = vector.extract_strided_slice %58 {offsets = [3, 0], sizes = [1, 158], strides = [1, 1]} : vector<8x158xf32> to vector<1x158xf32>
    %c3 = arith.constant 3 : index
    %c0_35 = arith.constant 0 : index
    %c0_36 = arith.constant 0 : index
    %74 = vector.load %arg6[%c3, %c0_35, %c0_36] : memref<8x158x128xf32, #tpu.memory_space<vmem>>, vector<1x158x128xf32>
    %75 = vector.shape_cast %74 : vector<1x158x128xf32> to vector<158x128xf32>
    %cst_37 = arith.constant dense<0.000000e+00> : vector<1x128xf32>
    %76 = tpu.matmul %73, %75, %cst_37 {dimension_numbers = #tpu.dot_dimension_numbers<[1], [0], [0], [1], [0, 0, 1, 1], [], []>} : vector<1x158xf32>, vector<158x128xf32>, vector<1x128xf32> -> vector<1x128xf32>
    %77 = arith.addf %72, %76 : vector<1x128xf32>
    %78 = vector.extract_strided_slice %58 {offsets = [4, 0], sizes = [1, 158], strides = [1, 1]} : vector<8x158xf32> to vector<1x158xf32>
    %c4 = arith.constant 4 : index
    %c0_38 = arith.constant 0 : index
    %c0_39 = arith.constant 0 : index
    %79 = vector.load %arg6[%c4, %c0_38, %c0_39] : memref<8x158x128xf32, #tpu.memory_space<vmem>>, vector<1x158x128xf32>
    %80 = vector.shape_cast %79 : vector<1x158x128xf32> to vector<158x128xf32>
    %cst_40 = arith.constant dense<0.000000e+00> : vector<1x128xf32>
    %81 = tpu.matmul %78, %80, %cst_40 {dimension_numbers = #tpu.dot_dimension_numbers<[1], [0], [0], [1], [0, 0, 1, 1], [], []>} : vector<1x158xf32>, vector<158x128xf32>, vector<1x128xf32> -> vector<1x128xf32>
    %82 = arith.addf %77, %81 : vector<1x128xf32>
    %83 = vector.extract_strided_slice %58 {offsets = [5, 0], sizes = [1, 158], strides = [1, 1]} : vector<8x158xf32> to vector<1x158xf32>
    %c5 = arith.constant 5 : index
    %c0_41 = arith.constant 0 : index
    %c0_42 = arith.constant 0 : index
    %84 = vector.load %arg6[%c5, %c0_41, %c0_42] : memref<8x158x128xf32, #tpu.memory_space<vmem>>, vector<1x158x128xf32>
    %85 = vector.shape_cast %84 : vector<1x158x128xf32> to vector<158x128xf32>
    %cst_43 = arith.constant dense<0.000000e+00> : vector<1x128xf32>
    %86 = tpu.matmul %83, %85, %cst_43 {dimension_numbers = #tpu.dot_dimension_numbers<[1], [0], [0], [1], [0, 0, 1, 1], [], []>} : vector<1x158xf32>, vector<158x128xf32>, vector<1x128xf32> -> vector<1x128xf32>
    %87 = arith.addf %82, %86 : vector<1x128xf32>
    %88 = vector.extract_strided_slice %58 {offsets = [6, 0], sizes = [1, 158], strides = [1, 1]} : vector<8x158xf32> to vector<1x158xf32>
    %c6 = arith.constant 6 : index
    %c0_44 = arith.constant 0 : index
    %c0_45 = arith.constant 0 : index
    %89 = vector.load %arg6[%c6, %c0_44, %c0_45] : memref<8x158x128xf32, #tpu.memory_space<vmem>>, vector<1x158x128xf32>
    %90 = vector.shape_cast %89 : vector<1x158x128xf32> to vector<158x128xf32>
    %cst_46 = arith.constant dense<0.000000e+00> : vector<1x128xf32>
    %91 = tpu.matmul %88, %90, %cst_46 {dimension_numbers = #tpu.dot_dimension_numbers<[1], [0], [0], [1], [0, 0, 1, 1], [], []>} : vector<1x158xf32>, vector<158x128xf32>, vector<1x128xf32> -> vector<1x128xf32>
    %92 = arith.addf %87, %91 : vector<1x128xf32>
    %93 = vector.extract_strided_slice %58 {offsets = [7, 0], sizes = [1, 158], strides = [1, 1]} : vector<8x158xf32> to vector<1x158xf32>
    %c7 = arith.constant 7 : index
    %c0_47 = arith.constant 0 : index
    %c0_48 = arith.constant 0 : index
    %94 = vector.load %arg6[%c7, %c0_47, %c0_48] : memref<8x158x128xf32, #tpu.memory_space<vmem>>, vector<1x158x128xf32>
    %95 = vector.shape_cast %94 : vector<1x158x128xf32> to vector<158x128xf32>
    %cst_49 = arith.constant dense<0.000000e+00> : vector<1x128xf32>
    %96 = tpu.matmul %93, %95, %cst_49 {dimension_numbers = #tpu.dot_dimension_numbers<[1], [0], [0], [1], [0, 0, 1, 1], [], []>} : vector<1x158xf32>, vector<158x128xf32>, vector<1x128xf32> -> vector<1x128xf32>
    %97 = arith.addf %92, %96 : vector<1x128xf32>
    %c0_50 = arith.constant 0 : index
    %c0_51 = arith.constant 0 : index
    %98 = vector.load %arg7[%c0_50, %c0_51] : memref<1x128xf32, #tpu.memory_space<vmem>>, vector<1x128xf32>
    %99 = arith.addf %97, %98 : vector<1x128xf32>
    %cst_52 = arith.constant 0.000000e+00 : f32
    %100 = vector.broadcast %cst_52 : f32 to vector<1x128xf32>
    %101 = arith.maximumf %99, %100 : vector<1x128xf32>
    %c0_53 = arith.constant 0 : index
    %c0_54 = arith.constant 0 : index
    %102 = vector.load %arg8[%c0_53, %c0_54] : memref<128x3xf32, #tpu.memory_space<vmem>>, vector<128x3xf32>
    %cst_55 = arith.constant dense<0.000000e+00> : vector<1x3xf32>
    %103 = tpu.matmul %101, %102, %cst_55 {dimension_numbers = #tpu.dot_dimension_numbers<[1], [0], [0], [1], [0, 0, 1, 1], [], []>} : vector<1x128xf32>, vector<128x3xf32>, vector<1x3xf32> -> vector<1x3xf32>
    %c0_56 = arith.constant 0 : index
    %c0_57 = arith.constant 0 : index
    %104 = vector.load %arg9[%c0_56, %c0_57] : memref<1x3xf32, #tpu.memory_space<vmem>>, vector<1x3xf32>
    %105 = arith.addf %103, %104 : vector<1x3xf32>
    %cst_58 = arith.constant dense<0xFF800000> : vector<1xf32>
    %106 = vector.multi_reduction <maximumf>, %105, %cst_58 [1] : vector<1x3xf32> to vector<1xf32>
    %107 = vector.shape_cast %106 : vector<1xf32> to vector<1x1xf32>
    %108 = vector.broadcast %107 : vector<1x1xf32> to vector<1x3xf32>
    %109 = arith.subf %105, %108 : vector<1x3xf32>
    %110 = math.exp %109 : vector<1x3xf32>
    %cst_59 = arith.constant dense<0.000000e+00> : vector<1xf32>
    %111 = vector.multi_reduction <add>, %110, %cst_59 [1] : vector<1x3xf32> to vector<1xf32>
    %112 = vector.shape_cast %111 : vector<1xf32> to vector<1x1xf32>
    %113 = vector.broadcast %112 : vector<1x1xf32> to vector<1x3xf32>
    %114 = arith.divf %110, %113 : vector<1x3xf32>
    %c0_60 = arith.constant 0 : index
    %c0_61 = arith.constant 0 : index
    %c0_62 = arith.constant 0 : index
    %115 = vector.load %arg10[%c0_60, %c0_61, %c0_62] : memref<1x1x3xf32, #tpu.memory_space<vmem>>, vector<1x1x3xf32>
    %116 = vector.shape_cast %115 : vector<1x1x3xf32> to vector<1x3xf32>
    %117 = vector.shape_cast %114 : vector<1x3xf32> to vector<1x1x3xf32>
    tpu.vector_store %arg10[%c0_60, %c0_61, %c0_62], %117 {strides = array<i32>} : memref<1x1x3xf32, #tpu.memory_space<vmem>>, vector<1x1x3xf32>,
    return
  }
  func.func @transform_0(%arg0: i32) -> (i32, i32, i32) {
    %c0_i32 = arith.constant 0 : i32
    %c0_i32_0 = arith.constant 0 : i32
    %c0_i32_1 = arith.constant 0 : i32
    return %arg0, %c0_i32, %c0_i32_0 : i32, i32, i32
  }
  func.func @transform_1(%arg0: i32) -> (i32, i32) {
    %c0_i32 = arith.constant 0 : i32
    %c0_i32_0 = arith.constant 0 : i32
    %c0_i32_1 = arith.constant 0 : i32
    return %c0_i32, %c0_i32_0 : i32, i32
  }
  func.func @transform_2(%arg0: i32) -> (i32, i32) {
    %c0_i32 = arith.constant 0 : i32
    %c0_i32_0 = arith.constant 0 : i32
    %c0_i32_1 = arith.constant 0 : i32
    return %c0_i32, %c0_i32_0 : i32, i32
  }
  func.func @transform_3(%arg0: i32) -> (i32, i32) {
    %c0_i32 = arith.constant 0 : i32
    %c0_i32_0 = arith.constant 0 : i32
    %c0_i32_1 = arith.constant 0 : i32
    return %c0_i32, %c0_i32_0 : i32, i32
  }
  func.func @transform_4(%arg0: i32) -> (i32, i32) {
    %c0_i32 = arith.constant 0 : i32
    %c0_i32_0 = arith.constant 0 : i32
    %c0_i32_1 = arith.constant 0 : i32
    return %c0_i32, %c0_i32_0 : i32, i32
  }
  func.func @transform_5(%arg0: i32) -> (i32, i32, i32) {
    %c0_i32 = arith.constant 0 : i32
    %c0_i32_0 = arith.constant 0 : i32
    %c0_i32_1 = arith.constant 0 : i32
    %c0_i32_2 = arith.constant 0 : i32
    return %c0_i32, %c0_i32_0, %c0_i32_1 : i32, i32, i32
  }
  func.func @transform_6(%arg0: i32) -> (i32, i32) {
    %c0_i32 = arith.constant 0 : i32
    %c0_i32_0 = arith.constant 0 : i32
    %c0_i32_1 = arith.constant 0 : i32
    return %c0_i32, %c0_i32_0 : i32, i32
  }
  func.func @transform_7(%arg0: i32) -> (i32, i32) {
    %c0_i32 = arith.constant 0 : i32
    %c0_i32_0 = arith.constant 0 : i32
    %c0_i32_1 = arith.constant 0 : i32
    return %c0_i32, %c0_i32_0 : i32, i32
  }
  func.func @transform_8(%arg0: i32) -> (i32, i32) {
    %c0_i32 = arith.constant 0 : i32
    %c0_i32_0 = arith.constant 0 : i32
    %c0_i32_1 = arith.constant 0 : i32
    return %c0_i32, %c0_i32_0 : i32, i32
  }
  func.func @transform_9(%arg0: i32) -> (i32, i32, i32) {
    %c0_i32 = arith.constant 0 : i32
    %c0_i32_0 = arith.constant 0 : i32
    %c0_i32_1 = arith.constant 0 : i32
    return %arg0, %c0_i32, %c0_i32_0 : i32, i32, i32
  }
}

</mosaic_0001>

<llo_original>
// kernel: feature_extractor_forward.1
$region0: #{feature_extractor_forward.1}
  #allocation0 [shape = 'u32[]', space=smem, size = 0x4, offset = 0x4, fixed_abs, tag = 'smem constant byte address 0x4 - core index']
  #allocation1 [shape = 'u32[144,128]{1,0:T(1,128)}', space=vmem, size = 0x12000, scoped, tag = 'internal scratch']
  #allocation2 [shape = 'f32[432,158]{1,0:T(8,128)}', space=vmem, size = 0x6c000, scoped, tag = 'scratch operand']
  %s0 = inlined_call_operand.vmem [shape: f32[2,720,166], index: 0, kind: input, shape index: {}]
  %s1 = inlined_call_operand.vmem [shape: f32[480,720], index: 1, kind: input, shape index: {}]
  %s2 = inlined_call_operand.vmem [shape: f32[480,1], index: 2, kind: input, shape index: {}]
  %s3 = inlined_call_operand.vmem [shape: f32[24,432], index: 3, kind: input, shape index: {}]
  %s4 = inlined_call_operand.vmem [shape: f32[24,1], index: 4, kind: input, shape index: {}]
  %s5 = inlined_call_operand.vmem [shape: f32[8,158,128], index: 5, kind: input, shape index: {}]
  %s6 = inlined_call_operand.vmem [shape: f32[1,128], index: 6, kind: input, shape index: {}]
  %s7 = inlined_call_operand.vmem [shape: f32[128,3], index: 7, kind: input, shape index: {}]
  %s8 = inlined_call_operand.vmem [shape: f32[1,3], index: 8, kind: input, shape index: {}]
  %s9 = inlined_call_operand.hbm [shape: f32[2,1,3], index: 9, kind: output, shape index: {}]
  %s10 = sld [smem:[#allocation0]]
  $region69: #{feature_extractor_forward.1} parent=0
    _
  %s12 = ssub.s32 1, %s10
  %s13 = scalar_select 0, %s12, %s10
  $region1: #{feature_extractor_forward.1} parent=0
    #allocation3 [shape = 'u8[1024]{0}', space=vmem, size = 0x400, scoped, tag = 'output window, operand 0']
    #allocation4 [shape = 's32[2]{0}', space=sflag, size = 0x8, scoped, tag = 'scoped memory for feature_extractor_forward.1']
    %14 = vsyncpa [#allocation4], 0
    %s15 = scalar_lea.sflag [#allocation4], 1
    %16 = vsyncpa %s15, 0
    loop: start=0, step=1, limit=4
    $region2: #{feature_extractor_forward.1} parent=1 // loop_pre_header
      _
    $region3: #{feature_extractor_forward.1} parent=1 // loop_header
      %s18 = sphi 0, %s22
      %p19 = scmp.ge.s32.totalorder %s18, 4
      %s28 = sphi 0, %s30
      %s31 = sphi 0, %s28
      %s32 = sphi 0, %s31
      %s48 = sphi 0, %s32
      %s52 = sphi 0, %s52
      %s54 = sphi 0, %s52
      %s55 = sphi 0, %s54
      %s69 = sphi 0, %s55
      %s73 = sphi 0, %s73
      %s75 = sphi 0, %s73
      %s76 = sphi 0, %s75
      %s90 = sphi 0, %s76
      %s94 = sphi 0, %s94
      %s96 = sphi 0, %s94
      %s97 = sphi 0, %s96
      %s111 = sphi 0, %s97
      %s115 = sphi 0, %s115
      %s117 = sphi 0, %s115
      %s118 = sphi 0, %s117
      %s132 = sphi 0, %s118
      %s136 = sphi 0, %s136
      %s138 = sphi 0, %s136
      %s139 = sphi 0, %s138
      %s153 = sphi 0, %s139
      %s157 = sphi 0, %s157
      %s159 = sphi 0, %s157
      %s160 = sphi 0, %s159
      %s174 = sphi 0, %s160
      %s178 = sphi 0, %s178
      %s180 = sphi 0, %s178
      %s181 = sphi 0, %s180
      %s195 = sphi 0, %s181
      %s199 = sphi 0, %s199
      %s201 = sphi 0, %s199
      %s202 = sphi 0, %s201
      %s216 = sphi 0, %s202
      %s222 = sphi 0, %s224
      %s225 = sphi 0, %s222
      %s226 = sphi 0, %s225
      %s242 = sphi 0, %s226
    $region4: #{feature_extractor_forward.1} parent=1 // loop_header_branch
      %21 = sbr.rel (%p19) target = $region8
    $region5: #{feature_extractor_forward.1} parent=1 // loop_body
      %s23 = ssub.s32 %s18, 1
      %s24 = ssub.s32 %s18, 2
      %s25 = sadd.s32 %s18, 1
      %s26 = ssub.s32 %s18, %s25
      %p27 = scmp.eq.s32.totalorder %s26, 0
      %s29 = sadd.s32 %s28, 1
      %s30 = scalar_select %p27, %s28, %s29
      %p33 = pneg %p27
      %p34 = scmp.eq.s32.totalorder %s18, 1
      %p35 = por %p33, %p34
      %p36 = scmp.ne.s32.totalorder %s28, %s31
      %p37 = scmp.eq.s32.totalorder %s18, 0
      %p38 = por %p36, %p37
      %p39 = scmp.ne.s32.totalorder %s28, %s31
      %p40 = scmp.eq.s32.totalorder %s23, 1
      %p41 = por %p39, %p40
      %p42 = scmp.ne.s32.totalorder %s31, %s32
      %p43 = scmp.eq.s32.totalorder %s23, 0
      %p44 = por %p42, %p43
      %p45 = scmp.ne.s32.totalorder %s31, %s32
      %p46 = scmp.eq.s32.totalorder %s24, 1
      %p47 = por %p45, %p46
      %p49 = scmp.ne.s32.totalorder %s32, %s48
      %p50 = scmp.eq.s32.totalorder %s24, 0
      %p51 = por %p49, %p50
      %s53 = sadd.s32 %s52, 1
      %p56 = scmp.eq.s32.totalorder %s18, 1
      %p57 = scmp.ne.s32.totalorder %s52, %s54
      %p58 = scmp.eq.s32.totalorder %s18, 0
      %p59 = por %p57, %p58
      %p60 = scmp.ne.s32.totalorder %s52, %s54
      %p61 = scmp.eq.s32.totalorder %s23, 1
      %p62 = por %p60, %p61
      %p63 = scmp.ne.s32.totalorder %s54, %s55
      %p64 = scmp.eq.s32.totalorder %s23, 0
      %p65 = por %p63, %p64
      %p66 = scmp.ne.s32.totalorder %s54, %s55
      %p67 = scmp.eq.s32.totalorder %s24, 1
      %p68 = por %p66, %p67
      %p70 = scmp.ne.s32.totalorder %s55, %s69
      %p71 = scmp.eq.s32.totalorder %s24, 0
      %p72 = por %p70, %p71
      %s74 = sadd.s32 %s73, 1
      %p77 = scmp.eq.s32.totalorder %s18, 1
      %p78 = scmp.ne.s32.totalorder %s73, %s75
      %p79 = scmp.eq.s32.totalorder %s18, 0
      %p80 = por %p78, %p79
      %p81 = scmp.ne.s32.totalorder %s73, %s75
      %p82 = scmp.eq.s32.totalorder %s23, 1
      %p83 = por %p81, %p82
      %p84 = scmp.ne.s32.totalorder %s75, %s76
      %p85 = scmp.eq.s32.totalorder %s23, 0
      %p86 = por %p84, %p85
      %p87 = scmp.ne.s32.totalorder %s75, %s76
      %p88 = scmp.eq.s32.totalorder %s24, 1
      %p89 = por %p87, %p88
      %p91 = scmp.ne.s32.totalorder %s76, %s90
      %p92 = scmp.eq.s32.totalorder %s24, 0
      %p93 = por %p91, %p92
      %s95 = sadd.s32 %s94, 1
      %p98 = scmp.eq.s32.totalorder %s18, 1
      %p99 = scmp.ne.s32.totalorder %s94, %s96
      %p100 = scmp.eq.s32.totalorder %s18, 0
      %p101 = por %p99, %p100
      %p102 = scmp.ne.s32.totalorder %s94, %s96
      %p103 = scmp.eq.s32.totalorder %s23, 1
      %p104 = por %p102, %p103
      %p105 = scmp.ne.s32.totalorder %s96, %s97
      %p106 = scmp.eq.s32.totalorder %s23, 0
      %p107 = por %p105, %p106
      %p108 = scmp.ne.s32.totalorder %s96, %s97
      %p109 = scmp.eq.s32.totalorder %s24, 1
      %p110 = por %p108, %p109
      %p112 = scmp.ne.s32.totalorder %s97, %s111
      %p113 = scmp.eq.s32.totalorder %s24, 0
      %p114 = por %p112, %p113
      %s116 = sadd.s32 %s115, 1
      %p119 = scmp.eq.s32.totalorder %s18, 1
      %p120 = scmp.ne.s32.totalorder %s115, %s117
      %p121 = scmp.eq.s32.totalorder %s18, 0
      %p122 = por %p120, %p121
      %p123 = scmp.ne.s32.totalorder %s115, %s117
      %p124 = scmp.eq.s32.totalorder %s23, 1
      %p125 = por %p123, %p124
      %p126 = scmp.ne.s32.totalorder %s117, %s118
      %p127 = scmp.eq.s32.totalorder %s23, 0
      %p128 = por %p126, %p127
      %p129 = scmp.ne.s32.totalorder %s117, %s118
      %p130 = scmp.eq.s32.totalorder %s24, 1
      %p131 = por %p129, %p130
      %p133 = scmp.ne.s32.totalorder %s118, %s132
      %p134 = scmp.eq.s32.totalorder %s24, 0
      %p135 = por %p133, %p134
      %s137 = sadd.s32 %s136, 1
      %p140 = scmp.eq.s32.totalorder %s18, 1
      %p141 = scmp.ne.s32.totalorder %s136, %s138
      %p142 = scmp.eq.s32.totalorder %s18, 0
      %p143 = por %p141, %p142
      %p144 = scmp.ne.s32.totalorder %s136, %s138
      %p145 = scmp.eq.s32.totalorder %s23, 1
      %p146 = por %p144, %p145
      %p147 = scmp.ne.s32.totalorder %s138, %s139
      %p148 = scmp.eq.s32.totalorder %s23, 0
      %p149 = por %p147, %p148
      %p150 = scmp.ne.s32.totalorder %s138, %s139
      %p151 = scmp.eq.s32.totalorder %s24, 1
      %p152 = por %p150, %p151
      %p154 = scmp.ne.s32.totalorder %s139, %s153
      %p155 = scmp.eq.s32.totalorder %s24, 0
      %p156 = por %p154, %p155
      %s158 = sadd.s32 %s157, 1
      %p161 = scmp.eq.s32.totalorder %s18, 1
      %p162 = scmp.ne.s32.totalorder %s157, %s159
      %p163 = scmp.eq.s32.totalorder %s18, 0
      %p164 = por %p162, %p163
      %p165 = scmp.ne.s32.totalorder %s157, %s159
      %p166 = scmp.eq.s32.totalorder %s23, 1
      %p167 = por %p165, %p166
      %p168 = scmp.ne.s32.totalorder %s159, %s160
      %p169 = scmp.eq.s32.totalorder %s23, 0
      %p170 = por %p168, %p169
      %p171 = scmp.ne.s32.totalorder %s159, %s160
      %p172 = scmp.eq.s32.totalorder %s24, 1
      %p173 = por %p171, %p172
      %p175 = scmp.ne.s32.totalorder %s160, %s174
      %p176 = scmp.eq.s32.totalorder %s24, 0
      %p177 = por %p175, %p176
      %s179 = sadd.s32 %s178, 1
      %p182 = scmp.eq.s32.totalorder %s18, 1
      %p183 = scmp.ne.s32.totalorder %s178, %s180
      %p184 = scmp.eq.s32.totalorder %s18, 0
      %p185 = por %p183, %p184
      %p186 = scmp.ne.s32.totalorder %s178, %s180
      %p187 = scmp.eq.s32.totalorder %s23, 1
      %p188 = por %p186, %p187
      %p189 = scmp.ne.s32.totalorder %s180, %s181
      %p190 = scmp.eq.s32.totalorder %s23, 0
      %p191 = por %p189, %p190
      %p192 = scmp.ne.s32.totalorder %s180, %s181
      %p193 = scmp.eq.s32.totalorder %s24, 1
      %p194 = por %p192, %p193
      %p196 = scmp.ne.s32.totalorder %s181, %s195
      %p197 = scmp.eq.s32.totalorder %s24, 0
      %p198 = por %p196, %p197
      %s200 = sadd.s32 %s199, 1
      %p203 = scmp.eq.s32.totalorder %s18, 1
      %p204 = scmp.ne.s32.totalorder %s199, %s201
      %p205 = scmp.eq.s32.totalorder %s18, 0
      %p206 = por %p204, %p205
      %p207 = scmp.ne.s32.totalorder %s199, %s201
      %p208 = scmp.eq.s32.totalorder %s23, 1
      %p209 = por %p207, %p208
      %p210 = scmp.ne.s32.totalorder %s201, %s202
      %p211 = scmp.eq.s32.totalorder %s23, 0
      %p212 = por %p210, %p211
      %p213 = scmp.ne.s32.totalorder %s201, %s202
      %p214 = scmp.eq.s32.totalorder %s24, 1
      %p215 = por %p213, %p214
      %p217 = scmp.ne.s32.totalorder %s202, %s216
      %p218 = scmp.eq.s32.totalorder %s24, 0
      %p219 = por %p217, %p218
      %s220 = ssub.s32 %s18, %s25
      %p221 = scmp.eq.s32.totalorder %s220, 0
      %s223 = sadd.s32 %s222, 1
      %s224 = scalar_select %p221, %s222, %s223
      %p227 = pneg %p221
      %p228 = scmp.eq.s32.totalorder %s18, 1
      %p229 = por %p227, %p228
      %p230 = scmp.ne.s32.totalorder %s222, %s225
      %p231 = scmp.eq.s32.totalorder %s18, 0
      %p232 = por %p230, %p231
      %p233 = scmp.ne.s32.totalorder %s222, %s225
      %p234 = scmp.eq.s32.totalorder %s23, 1
      %p235 = por %p233, %p234
      %p236 = scmp.ne.s32.totalorder %s225, %s226
      %p237 = scmp.eq.s32.totalorder %s23, 0
      %p238 = por %p236, %p237
      %p239 = scmp.ne.s32.totalorder %s225, %s226
      %p240 = scmp.eq.s32.totalorder %s24, 1
      %p241 = por %p239, %p240
      %p243 = scmp.ne.s32.totalorder %s226, %s242
      %p244 = scmp.eq.s32.totalorder %s24, 0
      %p245 = por %p243, %p244
      %p246 = scmp.le.s32.totalorder 1, %s18
      %p247 = scmp.lt.s32.totalorder %s18, 3
      %p248 = pnand %p246, %p247
      %p249 = pneg %p248
      // Predicated region
      $region9: #{feature_extractor_forward.1} parent=5 // pred_check
        _
      $region10: #{feature_extractor_forward.1} parent=5 // pred_check_branch
        %251 = sbr.rel (%p248) target = $region12
      $region11: #{feature_extractor_forward.1} parent=5 // pred_region
        %s252 = ssub.s32 %s18, 1
        // Predicated region
        $region13: #{feature_extractor_forward.1} parent=11 // pred_check
          %p253 = pneg %p65
        $region14: #{feature_extractor_forward.1} parent=11 // pred_check_branch
          %255 = sbr.rel (%p253) target = $region16
        $region15: #{feature_extractor_forward.1} parent=11 // pred_region
          _
        $region16: #{feature_extractor_forward.1} parent=11 // pred_fallthru
          _
        // Predicated region
        $region17: #{feature_extractor_forward.1} parent=11 // pred_check
          %p256 = pneg %p86
        $region18: #{feature_extractor_forward.1} parent=11 // pred_check_branch
          %258 = sbr.rel (%p256) target = $region20
        $region19: #{feature_extractor_forward.1} parent=11 // pred_region
          _
        $region20: #{feature_extractor_forward.1} parent=11 // pred_fallthru
          _
        // Predicated region
        $region21: #{feature_extractor_forward.1} parent=11 // pred_check
          %p259 = pneg %p107
        $region22: #{feature_extractor_forward.1} parent=11 // pred_check_branch
          %261 = sbr.rel (%p259) target = $region24
        $region23: #{feature_extractor_forward.1} parent=11 // pred_region
          _
        $region24: #{feature_extractor_forward.1} parent=11 // pred_fallthru
          _
        // Predicated region
        $region25: #{feature_extractor_forward.1} parent=11 // pred_check
          %p262 = pneg %p128
        $region26: #{feature_extractor_forward.1} parent=11 // pred_check_branch
          %264 = sbr.rel (%p262) target = $region28
        $region27: #{feature_extractor_forward.1} parent=11 // pred_region
          _
        $region28: #{feature_extractor_forward.1} parent=11 // pred_fallthru
          _
        // Predicated region
        $region29: #{feature_extractor_forward.1} parent=11 // pred_check
          %p265 = pneg %p149
        $region30: #{feature_extractor_forward.1} parent=11 // pred_check_branch
          %267 = sbr.rel (%p265) target = $region32
        $region31: #{feature_extractor_forward.1} parent=11 // pred_region
          _
        $region32: #{feature_extractor_forward.1} parent=11 // pred_fallthru
          _
        // Predicated region
        $region33: #{feature_extractor_forward.1} parent=11 // pred_check
          %p268 = pneg %p170
        $region34: #{feature_extractor_forward.1} parent=11 // pred_check_branch
          %270 = sbr.rel (%p268) target = $region36
        $region35: #{feature_extractor_forward.1} parent=11 // pred_region
          _
        $region36: #{feature_extractor_forward.1} parent=11 // pred_fallthru
          _
        // Predicated region
        $region37: #{feature_extractor_forward.1} parent=11 // pred_check
          %p271 = pneg %p191
        $region38: #{feature_extractor_forward.1} parent=11 // pred_check_branch
          %273 = sbr.rel (%p271) target = $region40
        $region39: #{feature_extractor_forward.1} parent=11 // pred_region
          _
        $region40: #{feature_extractor_forward.1} parent=11 // pred_fallthru
          _
        // Predicated region
        $region41: #{feature_extractor_forward.1} parent=11 // pred_check
          %p274 = pneg %p212
        $region42: #{feature_extractor_forward.1} parent=11 // pred_check_branch
          %276 = sbr.rel (%p274) target = $region44
        $region43: #{feature_extractor_forward.1} parent=11 // pred_region
          _
        $region44: #{feature_extractor_forward.1} parent=11 // pred_fallthru
          _
      $region12: #{feature_extractor_forward.1} parent=5 // pred_fallthru
        _
      %p277 = scmp.lt.s32.totalorder %s18, 2
      // Predicated region
      $region45: #{feature_extractor_forward.1} parent=5 // pred_check
        %p278 = pneg %p277
      $region46: #{feature_extractor_forward.1} parent=5 // pred_check_branch
        %280 = sbr.rel (%p278) target = $region48
      $region47: #{feature_extractor_forward.1} parent=5 // pred_region
        // Predicated region
        $region49: #{feature_extractor_forward.1} parent=47 // pred_check
          %p281 = pneg %p38
        $region50: #{feature_extractor_forward.1} parent=47 // pred_check_branch
          %283 = sbr.rel (%p281) target = $region52
        $region51: #{feature_extractor_forward.1} parent=47 // pred_region
          %p284 = scmp.lt.s32.totalorder %s18, 1
          %s285 = scalar_select %p284, %s18, 1
          %s286 = smul.addr %s285, 180
          %s287 = smul.addr %s286, 8
          %s288 = scalar_lea.vmem %s0, %s287
        $region52: #{feature_extractor_forward.1} parent=47 // pred_fallthru
          _
      $region48: #{feature_extractor_forward.1} parent=5 // pred_fallthru
        _
      %p289 = scmp.le.s32.totalorder 1, %s18
      %p290 = scmp.lt.s32.totalorder %s18, 3
      %p291 = pnand %p289, %p290
      %p292 = pneg %p291
      // Predicated region
      $region53: #{feature_extractor_forward.1} parent=5 // pred_check
        _
      $region54: #{feature_extractor_forward.1} parent=5 // pred_check_branch
        %294 = sbr.rel (%p291) target = $region56
      $region55: #{feature_extractor_forward.1} parent=5 // pred_region
        %s295 = ssub.s32 %s18, 1
        %p296 = scmp.lt.s32.totalorder %s23, 1
        %s297 = scalar_select %p296, %s23, 1
        %s298 = smul.addr %s297, 180
        %s299 = smul.addr %s298, 8
        %s300 = scalar_lea.vmem %s0, %s299
        %p301 = pneg %p44
        %p302 = pneg %p41
        %p303 = pneg %p65
        %p304 = pneg %p62
        %p305 = pneg %p86
        %p306 = pneg %p83
        %p307 = pneg %p107
        %p308 = pneg %p104
        %p309 = pneg %p128
        %p310 = pneg %p125
        %p311 = pneg %p149
        %p312 = pneg %p146
        %p313 = pneg %p170
        %p314 = pneg %p167
        %p315 = pneg %p191
        %p316 = pneg %p188
        %p317 = pneg %p212
        %p318 = pneg %p209
        %p319 = pneg %p238
        %p320 = pneg %p235
        %s321 = sand.u32 %s225, 1
        %s322 = scalar_lea.sflag [#allocation4], %s321
        %s323 = sand.u32 %s225, 1
        %s324 = scalar_lea.vmem [#allocation3], %s323
        %p325 = scmp.lt.s32.totalorder %s23, 1
        %s326 = scalar_select %p325, %s23, 1
        %s327 = smul.addr %s326, 180
        %s328 = smul.addr %s327, 8
        %s329 = scalar_lea.vmem %s0, %s328
        %v330 = vld [vmem:[%s1] sm:$0xff]
        %v331 = vld [vmem:[%s1 + $0x8] sm:$0xff]
        %v332 = vld [vmem:[%s1 + $0x10] sm:$0xff]
        %v333 = vld [vmem:[%s1 + $0x18] sm:$0xff]
        %v334 = vld [vmem:[%s1 + $0x20] sm:$0xff]
        %v335 = vld [vmem:[%s1 + $0x28] sm:$0xff]
        %v336 = vld [vmem:[%s1 + $0x30] sm:$0xff]
        %v337 = vld [vmem:[%s1 + $0x38] sm:$0xff]
        %v338 = vld [vmem:[%s1 + $0x40] sm:$0xff]
        %v339 = vld [vmem:[%s1 + $0x48] sm:$0xff]
        %v340 = vld [vmem:[%s1 + $0x50] sm:$0xff]
        %v341 = vld [vmem:[%s1 + $0x58] sm:$0xff]
        %v342 = vld [vmem:[%s1 + $0x60] sm:$0xff]
        %v343 = vld [vmem:[%s1 + $0x68] sm:$0xff]
        %v344 = vld [vmem:[%s1 + $0x70] sm:$0xff]
        %v345 = vld [vmem:[%s1 + $0x78] sm:$0xff]
        %v346 = vld [vmem:[%s1 + $0x80] sm:$0xff]
        %v347 = vld [vmem:[%s1 + $0x88] sm:$0xff]
        %v348 = vld [vmem:[%s1 + $0x90] sm:$0xff]
        %v349 = vld [vmem:[%s1 + $0x98] sm:$0xff]
        %v350 = vld [vmem:[%s1 + $0xa0] sm:$0xff]
        %v351 = vld [vmem:[%s1 + $0xa8] sm:$0xff]
        %v352 = vld [vmem:[%s1 + $0xb0] sm:$0xff]
        %v353 = vld [vmem:[%s1 + $0xb8] sm:$0xff]
        %v354 = vld [vmem:[%s1 + $0xc0] sm:$0xff]
        %v355 = vld [vmem:[%s1 + $0xc8] sm:$0xff]
        %v356 = vld [vmem:[%s1 + $0xd0] sm:$0xff]
        %v357 = vld [vmem:[%s1 + $0xd8] sm:$0xff]
        %v358 = vld [vmem:[%s1 + $0xe0] sm:$0xff]
        %v359 = vld [vmem:[%s1 + $0xe8] sm:$0xff]
        %v360 = vld [vmem:[%s1 + $0xf0] sm:$0xff]
        %v361 = vld [vmem:[%s1 + $0xf8] sm:$0xff]
        %v362 = vld [vmem:[%s1 + $0x100] sm:$0xff]
        %v363 = vld [vmem:[%s1 + $0x108] sm:$0xff]
        %v364 = vld [vmem:[%s1 + $0x110] sm:$0xff]
        %v365 = vld [vmem:[%s1 + $0x118] sm:$0xff]
        %v366 = vld [vmem:[%s1 + $0x120] sm:$0xff]
        %v367 = vld [vmem:[%s1 + $0x128] sm:$0xff]
        %v368 = vld [vmem:[%s1 + $0x130] sm:$0xff]
        %v369 = vld [vmem:[%s1 + $0x138] sm:$0xff]
        %v370 = vld [vmem:[%s1 + $0x140] sm:$0xff]
        %v371 = vld [vmem:[%s1 + $0x148] sm:$0xff]
        %v372 = vld [vmem:[%s1 + $0x150] sm:$0xff]
        %v373 = vld [vmem:[%s1 + $0x158] sm:$0xff]
        %v374 = vld [vmem:[%s1 + $0x160] sm:$0xff]
        %v375 = vld [vmem:[%s1 + $0x168] sm:$0xff]
        %v376 = vld [vmem:[%s1 + $0x170] sm:$0xff]
        %v377 = vld [vmem:[%s1 + $0x178] sm:$0xff]
        %v378 = vld [vmem:[%s1 + $0x180] sm:$0xff]
        %v379 = vld [vmem:[%s1 + $0x188] sm:$0xff]
        %v380 = vld [vmem:[%s1 + $0x190] sm:$0xff]
        %v381 = vld [vmem:[%s1 + $0x198] sm:$0xff]
        %v382 = vld [vmem:[%s1 + $0x1a0] sm:$0xff]
        %v383 = vld [vmem:[%s1 + $0x1a8] sm:$0xff]
        %v384 = vld [vmem:[%s1 + $0x1b0] sm:$0xff]
        %v385 = vld [vmem:[%s1 + $0x1b8] sm:$0xff]
        %v386 = vld [vmem:[%s1 + $0x1c0] sm:$0xff]
        %v387 = vld [vmem:[%s1 + $0x1c8] sm:$0xff]
        %v388 = vld [vmem:[%s1 + $0x1d0] sm:$0xff]
        %v389 = vld [vmem:[%s1 + $0x1d8] sm:$0xff]
        %v390 = vld [vmem:[%s1 + $0x1e0] sm:$0xff]
        %v391 = vld [vmem:[%s1 + $0x1e8] sm:$0xff]
        %v392 = vld [vmem:[%s1 + $0x1f0] sm:$0xff]
        %v393 = vld [vmem:[%s1 + $0x1f8] sm:$0xff]
        %v394 = vld [vmem:[%s1 + $0x200] sm:$0xff]
        %v395 = vld [vmem:[%s1 + $0x208] sm:$0xff]
        %v396 = vld [vmem:[%s1 + $0x210] sm:$0xff]
        %v397 = vld [vmem:[%s1 + $0x218] sm:$0xff]
        %v398 = vld [vmem:[%s1 + $0x220] sm:$0xff]
        %v399 = vld [vmem:[%s1 + $0x228] sm:$0xff]
        %v400 = vld [vmem:[%s1 + $0x230] sm:$0xff]
        %v401 = vld [vmem:[%s1 + $0x238] sm:$0xff]
        %v402 = vld [vmem:[%s1 + $0x240] sm:$0xff]
        %v403 = vld [vmem:[%s1 + $0x248] sm:$0xff]
        %v404 = vld [vmem:[%s1 + $0x250] sm:$0xff]
        %v405 = vld [vmem:[%s1 + $0x258] sm:$0xff]
        %v406 = vld [vmem:[%s1 + $0x260] sm:$0xff]
        %v407 = vld [vmem:[%s1 + $0x268] sm:$0xff]
        %v408 = vld [vmem:[%s1 + $0x270] sm:$0xff]
        %v409 = vld [vmem:[%s1 + $0x278] sm:$0xff]
        %v410 = vld [vmem:[%s1 + $0x280] sm:$0xff]
        %v411 = vld [vmem:[%s1 + $0x288] sm:$0xff]
        %v412 = vld [vmem:[%s1 + $0x290] sm:$0xff]
        %v413 = vld [vmem:[%s1 + $0x298] sm:$0xff]
        %v414 = vld [vmem:[%s1 + $0x2a0] sm:$0xff]
        %v415 = vld [vmem:[%s1 + $0x2a8] sm:$0xff]
        %v416 = vld [vmem:[%s1 + $0x2b0] sm:$0xff]
        %v417 = vld [vmem:[%s1 + $0x2b8] sm:$0xff]
        %v418 = vld [vmem:[%s1 + $0x2c0] sm:$0xff]
        %v419 = vld [vmem:[%s1 + $0x2c8] sm:$0xff]
        %v420 = vld [vmem:[%s1 + $0x2d0] sm:$0xff]
        %v421 = vld [vmem:[%s1 + $0x2d8] sm:$0xff]
        %v422 = vld [vmem:[%s1 + $0x2e0] sm:$0xff]
        %v423 = vld [vmem:[%s1 + $0x2e8] sm:$0xff]
        %v424 = vld [vmem:[%s1 + $0x2f0] sm:$0xff]
        %v425 = vld [vmem:[%s1 + $0x2f8] sm:$0xff]
        %v426 = vld [vmem:[%s1 + $0x300] sm:$0xff]
        %v427 = vld [vmem:[%s1 + $0x308] sm:$0xff]
        %v428 = vld [vmem:[%s1 + $0x310] sm:$0xff]
        %v429 = vld [vmem:[%s1 + $0x318] sm:$0xff]
        %v430 = vld [vmem:[%s1 + $0x320] sm:$0xff]
        %v431 = vld [vmem:[%s1 + $0x328] sm:$0xff]
        %v432 = vld [vmem:[%s1 + $0x330] sm:$0xff]
        %v433 = vld [vmem:[%s1 + $0x338] sm:$0xff]
        %v434 = vld [vmem:[%s1 + $0x340] sm:$0xff]
        %v435 = vld [vmem:[%s1 + $0x348] sm:$0xff]
        %v436 = vld [vmem:[%s1 + $0x350] sm:$0xff]
        %v437 = vld [vmem:[%s1 + $0x358] sm:$0xff]
        %v438 = vld [vmem:[%s1 + $0x360] sm:$0xff]
        %v439 = vld [vmem:[%s1 + $0x368] sm:$0xff]
        %v440 = vld [vmem:[%s1 + $0x370] sm:$0xff]
        %v441 = vld [vmem:[%s1 + $0x378] sm:$0xff]
        %v442 = vld [vmem:[%s1 + $0x380] sm:$0xff]
        %v443 = vld [vmem:[%s1 + $0x388] sm:$0xff]
        %v444 = vld [vmem:[%s1 + $0x390] sm:$0xff]
        %v445 = vld [vmem:[%s1 + $0x398] sm:$0xff]
        %v446 = vld [vmem:[%s1 + $0x3a0] sm:$0xff]
        %v447 = vld [vmem:[%s1 + $0x3a8] sm:$0xff]
        %v448 = vld [vmem:[%s1 + $0x3b0] sm:$0xff]
        %v449 = vld [vmem:[%s1 + $0x3b8] sm:$0xff]
        %v450 = vld [vmem:[%s1 + $0x3c0] sm:$0xff]
        %v451 = vld [vmem:[%s1 + $0x3c8] sm:$0xff]
        %v452 = vld [vmem:[%s1 + $0x3d0] sm:$0xff]
        %v453 = vld [vmem:[%s1 + $0x3d8] sm:$0xff]
        %v454 = vld [vmem:[%s1 + $0x3e0] sm:$0xff]
        %v455 = vld [vmem:[%s1 + $0x3e8] sm:$0xff]
        %v456 = vld [vmem:[%s1 + $0x3f0] sm:$0xff]
        %v457 = vld [vmem:[%s1 + $0x3f8] sm:$0xff]
        %v458 = vld [vmem:[%s1 + $0x400] sm:$0xff]
        %v459 = vld [vmem:[%s1 + $0x408] sm:$0xff]
        %v460 = vld [vmem:[%s1 + $0x410] sm:$0xff]
        %v461 = vld [vmem:[%s1 + $0x418] sm:$0xff]
        %v462 = vld [vmem:[%s1 + $0x420] sm:$0xff]
        %v463 = vld [vmem:[%s1 + $0x428] sm:$0xff]
        %v464 = vld [vmem:[%s1 + $0x430] sm:$0xff]
        %v465 = vld [vmem:[%s1 + $0x438] sm:$0xff]
        %v466 = vld [vmem:[%s1 + $0x440] sm:$0xff]
        %v467 = vld [vmem:[%s1 + $0x448] sm:$0xff]
        %v468 = vld [vmem:[%s1 + $0x450] sm:$0xff]
        %v469 = vld [vmem:[%s1 + $0x458] sm:$0xff]
        %v470 = vld [vmem:[%s1 + $0x460] sm:$0xff]
        %v471 = vld [vmem:[%s1 + $0x468] sm:$0xff]
        %v472 = vld [vmem:[%s1 + $0x470] sm:$0xff]
        %v473 = vld [vmem:[%s1 + $0x478] sm:$0xff]
        %v474 = vld [vmem:[%s1 + $0x480] sm:$0xff]
        %v475 = vld [vmem:[%s1 + $0x488] sm:$0xff]
        %v476 = vld [vmem:[%s1 + $0x490] sm:$0xff]
        %v477 = vld [vmem:[%s1 + $0x498] sm:$0xff]
        %v478 = vld [vmem:[%s1 + $0x4a0] sm:$0xff]
        %v479 = vld [vmem:[%s1 + $0x4a8] sm:$0xff]
        %v480 = vld [vmem:[%s1 + $0x4b0] sm:$0xff]
        %v481 = vld [vmem:[%s1 + $0x4b8] sm:$0xff]
        %v482 = vld [vmem:[%s1 + $0x4c0] sm:$0xff]
        %v483 = vld [vmem:[%s1 + $0x4c8] sm:$0xff]
        %v484 = vld [vmem:[%s1 + $0x4d0] sm:$0xff]
        %v485 = vld [vmem:[%s1 + $0x4d8] sm:$0xff]
        %v486 = vld [vmem:[%s1 + $0x4e0] sm:$0xff]
        %v487 = vld [vmem:[%s1 + $0x4e8] sm:$0xff]
        %v488 = vld [vmem:[%s1 + $0x4f0] sm:$0xff]
        %v489 = vld [vmem:[%s1 + $0x4f8] sm:$0xff]
        %v490 = vld [vmem:[%s1 + $0x500] sm:$0xff]
        %v491 = vld [vmem:[%s1 + $0x508] sm:$0xff]
        %v492 = vld [vmem:[%s1 + $0x510] sm:$0xff]
        %v493 = vld [vmem:[%s1 + $0x518] sm:$0xff]
        %v494 = vld [vmem:[%s1 + $0x520] sm:$0xff]
        %v495 = vld [vmem:[%s1 + $0x528] sm:$0xff]
        %v496 = vld [vmem:[%s1 + $0x530] sm:$0xff]
        %v497 = vld [vmem:[%s1 + $0x538] sm:$0xff]
        %v498 = vld [vmem:[%s1 + $0x540] sm:$0xff]
        %v499 = vld [vmem:[%s1 + $0x548] sm:$0xff]
        %v500 = vld [vmem:[%s1 + $0x550] sm:$0xff]
        %v501 = vld [vmem:[%s1 + $0x558] sm:$0xff]
        %v502 = vld [vmem:[%s1 + $0x560] sm:$0xff]
        %v503 = vld [vmem:[%s1 + $0x568] sm:$0xff]
        %v504 = vld [vmem:[%s1 + $0x570] sm:$0xff]
        %v505 = vld [vmem:[%s1 + $0x578] sm:$0xff]
        %v506 = vld [vmem:[%s1 + $0x580] sm:$0xff]
        %v507 = vld [vmem:[%s1 + $0x588] sm:$0xff]
        %v508 = vld [vmem:[%s1 + $0x590] sm:$0xff]
        %v509 = vld [vmem:[%s1 + $0x598] sm:$0xff]
        %v510 = vld [vmem:[%s1 + $0x5a0] sm:$0xff]
        %v511 = vld [vmem:[%s1 + $0x5a8] sm:$0xff]
        %v512 = vld [vmem:[%s1 + $0x5b0] sm:$0xff]
        %v513 = vld [vmem:[%s1 + $0x5b8] sm:$0xff]
        %v514 = vld [vmem:[%s1 + $0x5c0] sm:$0xff]
        %v515 = vld [vmem:[%s1 + $0x5c8] sm:$0xff]
        %v516 = vld [vmem:[%s1 + $0x5d0] sm:$0xff]
        %v517 = vld [vmem:[%s1 + $0x5d8] sm:$0xff]
        %v518 = vld [vmem:[%s1 + $0x5e0] sm:$0xff]
        %v519 = vld [vmem:[%s1 + $0x5e8] sm:$0xff]
        %v520 = vld [vmem:[%s1 + $0x5f0] sm:$0xff]
        %v521 = vld [vmem:[%s1 + $0x5f8] sm:$0xff]
        %v522 = vld [vmem:[%s1 + $0x600] sm:$0xff]
        %v523 = vld [vmem:[%s1 + $0x608] sm:$0xff]
        %v524 = vld [vmem:[%s1 + $0x610] sm:$0xff]
        %v525 = vld [vmem:[%s1 + $0x618] sm:$0xff]
        %v526 = vld [vmem:[%s1 + $0x620] sm:$0xff]
        %v527 = vld [vmem:[%s1 + $0x628] sm:$0xff]
        %v528 = vld [vmem:[%s1 + $0x630] sm:$0xff]
        %v529 = vld [vmem:[%s1 + $0x638] sm:$0xff]
        %v530 = vld [vmem:[%s1 + $0x640] sm:$0xff]
        %v531 = vld [vmem:[%s1 + $0x648] sm:$0xff]
        %v532 = vld [vmem:[%s1 + $0x650] sm:$0xff]
        %v533 = vld [vmem:[%s1 + $0x658] sm:$0xff]
        %v534 = vld [vmem:[%s1 + $0x660] sm:$0xff]
        %v535 = vld [vmem:[%s1 + $0x668] sm:$0xff]
        %v536 = vld [vmem:[%s1 + $0x670] sm:$0xff]
        %v537 = vld [vmem:[%s1 + $0x678] sm:$0xff]
        %v538 = vld [vmem:[%s1 + $0x680] sm:$0xff]
        %v539 = vld [vmem:[%s1 + $0x688] sm:$0xff]
        %v540 = vld [vmem:[%s1 + $0x690] sm:$0xff]
        %v541 = vld [vmem:[%s1 + $0x698] sm:$0xff]
        %v542 = vld [vmem:[%s1 + $0x6a0] sm:$0xff]
        %v543 = vld [vmem:[%s1 + $0x6a8] sm:$0xff]
        %v544 = vld [vmem:[%s1 + $0x6b0] sm:$0xff]
        %v545 = vld [vmem:[%s1 + $0x6b8] sm:$0xff]
        %v546 = vld [vmem:[%s1 + $0x6c0] sm:$0xff]
        %v547 = vld [vmem:[%s1 + $0x6c8] sm:$0xff]
        %v548 = vld [vmem:[%s1 + $0x6d0] sm:$0xff]
        %v549 = vld [vmem:[%s1 + $0x6d8] sm:$0xff]
        %v550 = vld [vmem:[%s1 + $0x6e0] sm:$0xff]
        %v551 = vld [vmem:[%s1 + $0x6e8] sm:$0xff]
        %v552 = vld [vmem:[%s1 + $0x6f0] sm:$0xff]
        %v553 = vld [vmem:[%s1 + $0x6f8] sm:$0xff]
        %v554 = vld [vmem:[%s1 + $0x700] sm:$0xff]
        %v555 = vld [vmem:[%s1 + $0x708] sm:$0xff]
        %v556 = vld [vmem:[%s1 + $0x710] sm:$0xff]
        %v557 = vld [vmem:[%s1 + $0x718] sm:$0xff]
        %v558 = vld [vmem:[%s1 + $0x720] sm:$0xff]
        %v559 = vld [vmem:[%s1 + $0x728] sm:$0xff]
        %v560 = vld [vmem:[%s1 + $0x730] sm:$0xff]
        %v561 = vld [vmem:[%s1 + $0x738] sm:$0xff]
        %v562 = vld [vmem:[%s1 + $0x740] sm:$0xff]
        %v563 = vld [vmem:[%s1 + $0x748] sm:$0xff]
        %v564 = vld [vmem:[%s1 + $0x750] sm:$0xff]
        %v565 = vld [vmem:[%s1 + $0x758] sm:$0xff]
        %v566 = vld [vmem:[%s1 + $0x760] sm:$0xff]
        %v567 = vld [vmem:[%s1 + $0x768] sm:$0xff]
        %v568 = vld [vmem:[%s1 + $0x770] sm:$0xff]
        %v569 = vld [vmem:[%s1 + $0x778] sm:$0xff]
        %v570 = vld [vmem:[%s1 + $0x780] sm:$0xff]
        %v571 = vld [vmem:[%s1 + $0x788] sm:$0xff]
        %v572 = vld [vmem:[%s1 + $0x790] sm:$0xff]
        %v573 = vld [vmem:[%s1 + $0x798] sm:$0xff]
        %v574 = vld [vmem:[%s1 + $0x7a0] sm:$0xff]
        %v575 = vld [vmem:[%s1 + $0x7a8] sm:$0xff]
        %v576 = vld [vmem:[%s1 + $0x7b0] sm:$0xff]
        %v577 = vld [vmem:[%s1 + $0x7b8] sm:$0xff]
        %v578 = vld [vmem:[%s1 + $0x7c0] sm:$0xff]
        %v579 = vld [vmem:[%s1 + $0x7c8] sm:$0xff]
        %v580 = vld [vmem:[%s1 + $0x7d0] sm:$0xff]
        %v581 = vld [vmem:[%s1 + $0x7d8] sm:$0xff]
        %v582 = vld [vmem:[%s1 + $0x7e0] sm:$0xff]
        %v583 = vld [vmem:[%s1 + $0x7e8] sm:$0xff]
        %v584 = vld [vmem:[%s1 + $0x7f0] sm:$0xff]
        %v585 = vld [vmem:[%s1 + $0x7f8] sm:$0xff]
        %v586 = vld [vmem:[%s1 + $0x800] sm:$0xff]
        %v587 = vld [vmem:[%s1 + $0x808] sm:$0xff]
        %v588 = vld [vmem:[%s1 + $0x810] sm:$0xff]
        %v589 = vld [vmem:[%s1 + $0x818] sm:$0xff]
        %v590 = vld [vmem:[%s1 + $0x820] sm:$0xff]
        %v591 = vld [vmem:[%s1 + $0x828] sm:$0xff]
        %v592 = vld [vmem:[%s1 + $0x830] sm:$0xff]
        %v593 = vld [vmem:[%s1 + $0x838] sm:$0xff]
        %v594 = vld [vmem:[%s1 + $0x840] sm:$0xff]
        %v595 = vld [vmem:[%s1 + $0x848] sm:$0xff]
        %v596 = vld [vmem:[%s1 + $0x850] sm:$0xff]
        %v597 = vld [vmem:[%s1 + $0x858] sm:$0xff]
        %v598 = vld [vmem:[%s1 + $0x860] sm:$0xff]
        %v599 = vld [vmem:[%s1 + $0x868] sm:$0xff]
        %v600 = vld [vmem:[%s1 + $0x870] sm:$0xff]
        %v601 = vld [vmem:[%s1 + $0x878] sm:$0xff]
        %v602 = vld [vmem:[%s1 + $0x880] sm:$0xff]
        %v603 = vld [vmem:[%s1 + $0x888] sm:$0xff]
        %v604 = vld [vmem:[%s1 + $0x890] sm:$0xff]
        %v605 = vld [vmem:[%s1 + $0x898] sm:$0xff]
        %v606 = vld [vmem:[%s1 + $0x8a0] sm:$0xff]
        %v607 = vld [vmem:[%s1 + $0x8a8] sm:$0xff]
        %v608 = vld [vmem:[%s1 + $0x8b0] sm:$0xff]
        %v609 = vld [vmem:[%s1 + $0x8b8] sm:$0xff]
        %v610 = vld [vmem:[%s1 + $0x8c0] sm:$0xff]
        %v611 = vld [vmem:[%s1 + $0x8c8] sm:$0xff]
        %v612 = vld [vmem:[%s1 + $0x8d0] sm:$0xff]
        %v613 = vld [vmem:[%s1 + $0x8d8] sm:$0xff]
        %v614 = vld [vmem:[%s1 + $0x8e0] sm:$0xff]
        %v615 = vld [vmem:[%s1 + $0x8e8] sm:$0xff]
        %v616 = vld [vmem:[%s1 + $0x8f0] sm:$0xff]
        %v617 = vld [vmem:[%s1 + $0x8f8] sm:$0xff]
        %v618 = vld [vmem:[%s1 + $0x900] sm:$0xff]
        %v619 = vld [vmem:[%s1 + $0x908] sm:$0xff]
        %v620 = vld [vmem:[%s1 + $0x910] sm:$0xff]
        %v621 = vld [vmem:[%s1 + $0x918] sm:$0xff]
        %v622 = vld [vmem:[%s1 + $0x920] sm:$0xff]
        %v623 = vld [vmem:[%s1 + $0x928] sm:$0xff]
        %v624 = vld [vmem:[%s1 + $0x930] sm:$0xff]
        %v625 = vld [vmem:[%s1 + $0x938] sm:$0xff]
        %v626 = vld [vmem:[%s1 + $0x940] sm:$0xff]
        %v627 = vld [vmem:[%s1 + $0x948] sm:$0xff]
        %v628 = vld [vmem:[%s1 + $0x950] sm:$0xff]
        %v629 = vld [vmem:[%s1 + $0x958] sm:$0xff]
        %v630 = vld [vmem:[%s1 + $0x960] sm:$0xff]
        %v631 = vld [vmem:[%s1 + $0x968] sm:$0xff]
        %v632 = vld [vmem:[%s1 + $0x970] sm:$0xff]
        %v633 = vld [vmem:[%s1 + $0x978] sm:$0xff]
        %v634 = vld [vmem:[%s1 + $0x980] sm:$0xff]
        %v635 = vld [vmem:[%s1 + $0x988] sm:$0xff]
        %v636 = vld [vmem:[%s1 + $0x990] sm:$0xff]
        %v637 = vld [vmem:[%s1 + $0x998] sm:$0xff]
        %v638 = vld [vmem:[%s1 + $0x9a0] sm:$0xff]
        %v639 = vld [vmem:[%s1 + $0x9a8] sm:$0xff]
        %v640 = vld [vmem:[%s1 + $0x9b0] sm:$0xff]
        %v641 = vld [vmem:[%s1 + $0x9b8] sm:$0xff]
        %v642 = vld [vmem:[%s1 + $0x9c0] sm:$0xff]
        %v643 = vld [vmem:[%s1 + $0x9c8] sm:$0xff]
        %v644 = vld [vmem:[%s1 + $0x9d0] sm:$0xff]
        %v645 = vld [vmem:[%s1 + $0x9d8] sm:$0xff]
        %v646 = vld [vmem:[%s1 + $0x9e0] sm:$0xff]
        %v647 = vld [vmem:[%s1 + $0x9e8] sm:$0xff]
        %v648 = vld [vmem:[%s1 + $0x9f0] sm:$0xff]
        %v649 = vld [vmem:[%s1 + $0x9f8] sm:$0xff]
        %v650 = vld [vmem:[%s1 + $0xa00] sm:$0xff]
        %v651 = vld [vmem:[%s1 + $0xa08] sm:$0xff]
        %v652 = vld [vmem:[%s1 + $0xa10] sm:$0xff]
        %v653 = vld [vmem:[%s1 + $0xa18] sm:$0xff]
        %v654 = vld [vmem:[%s1 + $0xa20] sm:$0xff]
        %v655 = vld [vmem:[%s1 + $0xa28] sm:$0xff]
        %v656 = vld [vmem:[%s1 + $0xa30] sm:$0xff]
        %v657 = vld [vmem:[%s1 + $0xa38] sm:$0xff]
        %v658 = vld [vmem:[%s1 + $0xa40] sm:$0xff]
        %v659 = vld [vmem:[%s1 + $0xa48] sm:$0xff]
        %v660 = vld [vmem:[%s1 + $0xa50] sm:$0xff]
        %v661 = vld [vmem:[%s1 + $0xa58] sm:$0xff]
        %v662 = vld [vmem:[%s1 + $0xa60] sm:$0xff]
        %v663 = vld [vmem:[%s1 + $0xa68] sm:$0xff]
        %v664 = vld [vmem:[%s1 + $0xa70] sm:$0xff]
        %v665 = vld [vmem:[%s1 + $0xa78] sm:$0xff]
        %v666 = vld [vmem:[%s1 + $0xa80] sm:$0xff]
        %v667 = vld [vmem:[%s1 + $0xa88] sm:$0xff]
        %v668 = vld [vmem:[%s1 + $0xa90] sm:$0xff]
        %v669 = vld [vmem:[%s1 + $0xa98] sm:$0xff]
        %v670 = vld [vmem:[%s1 + $0xaa0] sm:$0xff]
        %v671 = vld [vmem:[%s1 + $0xaa8] sm:$0xff]
        %v672 = vld [vmem:[%s1 + $0xab0] sm:$0xff]
        %v673 = vld [vmem:[%s1 + $0xab8] sm:$0xff]
        %v674 = vld [vmem:[%s1 + $0xac0] sm:$0xff]
        %v675 = vld [vmem:[%s1 + $0xac8] sm:$0xff]
        %v676 = vld [vmem:[%s1 + $0xad0] sm:$0xff]
        %v677 = vld [vmem:[%s1 + $0xad8] sm:$0xff]
        %v678 = vld [vmem:[%s1 + $0xae0] sm:$0xff]
        %v679 = vld [vmem:[%s1 + $0xae8] sm:$0xff]
        %v680 = vld [vmem:[%s1 + $0xaf0] sm:$0xff]
        %v681 = vld [vmem:[%s1 + $0xaf8] sm:$0xff]
        %v682 = vld [vmem:[%s1 + $0xb00] sm:$0xff]
        %v683 = vld [vmem:[%s1 + $0xb08] sm:$0xff]
        %v684 = vld [vmem:[%s1 + $0xb10] sm:$0xff]
        %v685 = vld [vmem:[%s1 + $0xb18] sm:$0xff]
        %v686 = vld [vmem:[%s1 + $0xb20] sm:$0xff]
        %v687 = vld [vmem:[%s1 + $0xb28] sm:$0xff]
        %v688 = vld [vmem:[%s1 + $0xb30] sm:$0xff]
        %v689 = vld [vmem:[%s1 + $0xb38] sm:$0xff]
        %v690 = vld [vmem:[%s329] sm:$0xff]
        %v691 = vld [vmem:[%s329 + $0x8] sm:$0xff]
        %v692 = vld [vmem:[%s329 + $0x10] sm:$0xff]
        %v693 = vld [vmem:[%s329 + $0x18] sm:$0xff]
        %v694 = vld [vmem:[%s329 + $0x20] sm:$0xff]
        %v695 = vld [vmem:[%s329 + $0x28] sm:$0xff]
        %v696 = vld [vmem:[%s329 + $0x30] sm:$0xff]
        %v697 = vld [vmem:[%s329 + $0x38] sm:$0xff]
        %v698 = vld [vmem:[%s329 + $0x40] sm:$0xff]
        %v699 = vld [vmem:[%s329 + $0x48] sm:$0xff]
        %v700 = vld [vmem:[%s329 + $0x50] sm:$0xff]
        %v701 = vld [vmem:[%s329 + $0x58] sm:$0xff]
        %v702 = vld [vmem:[%s329 + $0x60] sm:$0xff]
        %v703 = vld [vmem:[%s329 + $0x68] sm:$0xff]
        %v704 = vld [vmem:[%s329 + $0x70] sm:$0xff]
        %v705 = vld [vmem:[%s329 + $0x78] sm:$0xff]
        %v706 = vld [vmem:[%s329 + $0x80] sm:$0xff]
        %v707 = vld [vmem:[%s329 + $0x88] sm:$0xff]
        %v708 = vld [vmem:[%s329 + $0x90] sm:$0xff]
        %v709 = vld [vmem:[%s329 + $0x98] sm:$0xff]
        %v710 = vld [vmem:[%s329 + $0xa0] sm:$0xff]
        %v711 = vld [vmem:[%s329 + $0xa8] sm:$0xff]
        %v712 = vld [vmem:[%s329 + $0xb0] sm:$0xff]
        %v713 = vld [vmem:[%s329 + $0xb8] sm:$0xff]
        %v714 = vld [vmem:[%s329 + $0xc0] sm:$0xff]
        %v715 = vld [vmem:[%s329 + $0xc8] sm:$0xff]
        %v716 = vld [vmem:[%s329 + $0xd0] sm:$0xff]
        %v717 = vld [vmem:[%s329 + $0xd8] sm:$0xff]
        %v718 = vld [vmem:[%s329 + $0xe0] sm:$0xff]
        %v719 = vld [vmem:[%s329 + $0xe8] sm:$0xff]
        %v720 = vld [vmem:[%s329 + $0xf0] sm:$0xff]
        %v721 = vld [vmem:[%s329 + $0xf8] sm:$0xff]
        %v722 = vld [vmem:[%s329 + $0x100] sm:$0xff]
        %v723 = vld [vmem:[%s329 + $0x108] sm:$0xff]
        %v724 = vld [vmem:[%s329 + $0x110] sm:$0xff]
        %v725 = vld [vmem:[%s329 + $0x118] sm:$0xff]
        %v726 = vld [vmem:[%s329 + $0x120] sm:$0xff]
        %v727 = vld [vmem:[%s329 + $0x128] sm:$0xff]
        %v728 = vld [vmem:[%s329 + $0x130] sm:$0xff]
        %v729 = vld [vmem:[%s329 + $0x138] sm:$0xff]
        %v730 = vld [vmem:[%s329 + $0x140] sm:$0xff]
        %v731 = vld [vmem:[%s329 + $0x148] sm:$0xff]
        %v732 = vld [vmem:[%s329 + $0x150] sm:$0xff]
        %v733 = vld [vmem:[%s329 + $0x158] sm:$0xff]
        %v734 = vld [vmem:[%s329 + $0x160] sm:$0xff]
        %v735 = vld [vmem:[%s329 + $0x168] sm:$0xff]
        %v736 = vld [vmem:[%s329 + $0x170] sm:$0xff]
        %v737 = vld [vmem:[%s329 + $0x178] sm:$0xff]
        %v738 = vld [vmem:[%s329 + $0x180] sm:$0xff]
        %v739 = vld [vmem:[%s329 + $0x188] sm:$0xff]
        %v740 = vld [vmem:[%s329 + $0x190] sm:$0xff]
        %v741 = vld [vmem:[%s329 + $0x198] sm:$0xff]
        %v742 = vld [vmem:[%s329 + $0x1a0] sm:$0xff]
        %v743 = vld [vmem:[%s329 + $0x1a8] sm:$0xff]
        %v744 = vld [vmem:[%s329 + $0x1b0] sm:$0xff]
        %v745 = vld [vmem:[%s329 + $0x1b8] sm:$0xff]
        %v746 = vld [vmem:[%s329 + $0x1c0] sm:$0xff]
        %v747 = vld [vmem:[%s329 + $0x1c8] sm:$0xff]
        %v748 = vld [vmem:[%s329 + $0x1d0] sm:$0xff]
        %v749 = vld [vmem:[%s329 + $0x1d8] sm:$0xff]
        %v750 = vld [vmem:[%s329 + $0x1e0] sm:$0xff]
        %v751 = vld [vmem:[%s329 + $0x1e8] sm:$0xff]
        %v752 = vld [vmem:[%s329 + $0x1f0] sm:$0xff]
        %v753 = vld [vmem:[%s329 + $0x1f8] sm:$0xff]
        %v754 = vld [vmem:[%s329 + $0x200] sm:$0xff]
        %v755 = vld [vmem:[%s329 + $0x208] sm:$0xff]
        %v756 = vld [vmem:[%s329 + $0x210] sm:$0xff]
        %v757 = vld [vmem:[%s329 + $0x218] sm:$0xff]
        %v758 = vld [vmem:[%s329 + $0x220] sm:$0xff]
        %v759 = vld [vmem:[%s329 + $0x228] sm:$0xff]
        %v760 = vld [vmem:[%s329 + $0x230] sm:$0xff]
        %v761 = vld [vmem:[%s329 + $0x238] sm:$0xff]
        %v762 = vld [vmem:[%s329 + $0x240] sm:$0xff]
        %v763 = vld [vmem:[%s329 + $0x248] sm:$0xff]
        %v764 = vld [vmem:[%s329 + $0x250] sm:$0xff]
        %v765 = vld [vmem:[%s329 + $0x258] sm:$0xff]
        %v766 = vld [vmem:[%s329 + $0x260] sm:$0xff]
        %v767 = vld [vmem:[%s329 + $0x268] sm:$0xff]
        %v768 = vld [vmem:[%s329 + $0x270] sm:$0xff]
        %v769 = vld [vmem:[%s329 + $0x278] sm:$0xff]
        %v770 = vld [vmem:[%s329 + $0x280] sm:$0xff]
        %v771 = vld [vmem:[%s329 + $0x288] sm:$0xff]
        %v772 = vld [vmem:[%s329 + $0x290] sm:$0xff]
        %v773 = vld [vmem:[%s329 + $0x298] sm:$0xff]
        %v774 = vld [vmem:[%s329 + $0x2a0] sm:$0xff]
        %v775 = vld [vmem:[%s329 + $0x2a8] sm:$0xff]
        %v776 = vld [vmem:[%s329 + $0x2b0] sm:$0xff]
        %v777 = vld [vmem:[%s329 + $0x2b8] sm:$0xff]
        %v778 = vld [vmem:[%s329 + $0x2c0] sm:$0xff]
        %v779 = vld [vmem:[%s329 + $0x2c8] sm:$0xff]
        %v780 = vld [vmem:[%s329 + $0x2d0] sm:$0xff]
        %v781 = vld [vmem:[%s329 + $0x2d8] sm:$0xff]
        %v782 = vld [vmem:[%s329 + $0x2e0] sm:$0xff]
        %v783 = vld [vmem:[%s329 + $0x2e8] sm:$0xff]
        %v784 = vld [vmem:[%s329 + $0x2f0] sm:$0xff]
        %v785 = vld [vmem:[%s329 + $0x2f8] sm:$0xff]
        %v786 = vld [vmem:[%s329 + $0x300] sm:$0xff]
        %v787 = vld [vmem:[%s329 + $0x308] sm:$0xff]
        %v788 = vld [vmem:[%s329 + $0x310] sm:$0xff]
        %v789 = vld [vmem:[%s329 + $0x318] sm:$0xff]
        %v790 = vld [vmem:[%s329 + $0x320] sm:$0xff]
        %v791 = vld [vmem:[%s329 + $0x328] sm:$0xff]
        %v792 = vld [vmem:[%s329 + $0x330] sm:$0xff]
        %v793 = vld [vmem:[%s329 + $0x338] sm:$0xff]
        %v794 = vld [vmem:[%s329 + $0x340] sm:$0xff]
        %v795 = vld [vmem:[%s329 + $0x348] sm:$0xff]
        %v796 = vld [vmem:[%s329 + $0x350] sm:$0xff]
        %v797 = vld [vmem:[%s329 + $0x358] sm:$0xff]
        %v798 = vld [vmem:[%s329 + $0x360] sm:$0xff]
        %v799 = vld [vmem:[%s329 + $0x368] sm:$0xff]
        %v800 = vld [vmem:[%s329 + $0x370] sm:$0xff]
        %v801 = vld [vmem:[%s329 + $0x378] sm:$0xff]
        %v802 = vld [vmem:[%s329 + $0x380] sm:$0xff]
        %v803 = vld [vmem:[%s329 + $0x388] sm:$0xff]
        %v804 = vld [vmem:[%s329 + $0x390] sm:$0xff]
        %v805 = vld [vmem:[%s329 + $0x398] sm:$0xff]
        %v806 = vld [vmem:[%s329 + $0x3a0] sm:$0xff]
        %v807 = vld [vmem:[%s329 + $0x3a8] sm:$0xff]
        %v808 = vld [vmem:[%s329 + $0x3b0] sm:$0xff]
        %v809 = vld [vmem:[%s329 + $0x3b8] sm:$0xff]
        %v810 = vld [vmem:[%s329 + $0x3c0] sm:$0xff]
        %v811 = vld [vmem:[%s329 + $0x3c8] sm:$0xff]
        %v812 = vld [vmem:[%s329 + $0x3d0] sm:$0xff]
        %v813 = vld [vmem:[%s329 + $0x3d8] sm:$0xff]
        %v814 = vld [vmem:[%s329 + $0x3e0] sm:$0xff]
        %v815 = vld [vmem:[%s329 + $0x3e8] sm:$0xff]
        %v816 = vld [vmem:[%s329 + $0x3f0] sm:$0xff]
        %v817 = vld [vmem:[%s329 + $0x3f8] sm:$0xff]
        %v818 = vld [vmem:[%s329 + $0x400] sm:$0xff]
        %v819 = vld [vmem:[%s329 + $0x408] sm:$0xff]
        %v820 = vld [vmem:[%s329 + $0x410] sm:$0xff]
        %v821 = vld [vmem:[%s329 + $0x418] sm:$0xff]
        %v822 = vld [vmem:[%s329 + $0x420] sm:$0xff]
        %v823 = vld [vmem:[%s329 + $0x428] sm:$0xff]
        %v824 = vld [vmem:[%s329 + $0x430] sm:$0xff]
        %v825 = vld [vmem:[%s329 + $0x438] sm:$0xff]
        %v826 = vld [vmem:[%s329 + $0x440] sm:$0xff]
        %v827 = vld [vmem:[%s329 + $0x448] sm:$0xff]
        %v828 = vld [vmem:[%s329 + $0x450] sm:$0xff]
        %v829 = vld [vmem:[%s329 + $0x458] sm:$0xff]
        %v830 = vld [vmem:[%s329 + $0x460] sm:$0xff]
        %v831 = vld [vmem:[%s329 + $0x468] sm:$0xff]
        %v832 = vld [vmem:[%s329 + $0x470] sm:$0xff]
        %v833 = vld [vmem:[%s329 + $0x478] sm:$0xff]
        %v834 = vld [vmem:[%s329 + $0x480] sm:$0xff]
        %v835 = vld [vmem:[%s329 + $0x488] sm:$0xff]
        %v836 = vld [vmem:[%s329 + $0x490] sm:$0xff]
        %v837 = vld [vmem:[%s329 + $0x498] sm:$0xff]
        %v838 = vld [vmem:[%s329 + $0x4a0] sm:$0xff]
        %v839 = vld [vmem:[%s329 + $0x4a8] sm:$0xff]
        %v840 = vld [vmem:[%s329 + $0x4b0] sm:$0xff]
        %v841 = vld [vmem:[%s329 + $0x4b8] sm:$0xff]
        %v842 = vld [vmem:[%s329 + $0x4c0] sm:$0xff]
        %v843 = vld [vmem:[%s329 + $0x4c8] sm:$0xff]
        %v844 = vld [vmem:[%s329 + $0x4d0] sm:$0xff]
        %v845 = vld [vmem:[%s329 + $0x4d8] sm:$0xff]
        %v846 = vld [vmem:[%s329 + $0x4e0] sm:$0xff]
        %v847 = vld [vmem:[%s329 + $0x4e8] sm:$0xff]
        %v848 = vld [vmem:[%s329 + $0x4f0] sm:$0xff]
        %v849 = vld [vmem:[%s329 + $0x4f8] sm:$0xff]
        %v850 = vld [vmem:[%s329 + $0x500] sm:$0xff]
        %v851 = vld [vmem:[%s329 + $0x508] sm:$0xff]
        %v852 = vld [vmem:[%s329 + $0x510] sm:$0xff]
        %v853 = vld [vmem:[%s329 + $0x518] sm:$0xff]
        %v854 = vld [vmem:[%s329 + $0x520] sm:$0xff]
        %v855 = vld [vmem:[%s329 + $0x528] sm:$0xff]
        %v856 = vld [vmem:[%s329 + $0x530] sm:$0xff]
        %v857 = vld [vmem:[%s329 + $0x538] sm:$0xff]
        %v858 = vld [vmem:[%s329 + $0x540] sm:$0xff]
        %v859 = vld [vmem:[%s329 + $0x548] sm:$0xff]
        %v860 = vld [vmem:[%s329 + $0x550] sm:$0xff]
        %v861 = vld [vmem:[%s329 + $0x558] sm:$0xff]
        %v862 = vld [vmem:[%s329 + $0x560] sm:$0xff]
        %v863 = vld [vmem:[%s329 + $0x568] sm:$0xff]
        %v864 = vld [vmem:[%s329 + $0x570] sm:$0xff]
        %v865 = vld [vmem:[%s329 + $0x578] sm:$0xff]
        %v866 = vld [vmem:[%s329 + $0x580] sm:$0xff]
        %v867 = vld [vmem:[%s329 + $0x588] sm:$0xff]
        %v868 = vld [vmem:[%s329 + $0x590] sm:$0xff]
        %v869 = vld [vmem:[%s329 + $0x598] sm:$0xff]
        %v870 = vld [vmem:[%s2] sm:$0xff]
        %v871 = vld [vmem:[%s2 + $0x8] sm:$0xff]
        %v872 = vld [vmem:[%s2 + $0x10] sm:$0xff]
        %v873 = vld [vmem:[%s2 + $0x18] sm:$0xff]
        %v874 = vld [vmem:[%s2 + $0x20] sm:$0xff]
        %v875 = vld [vmem:[%s2 + $0x28] sm:$0xff]
        %v876 = vld [vmem:[%s2 + $0x30] sm:$0xff]
        %v877 = vld [vmem:[%s2 + $0x38] sm:$0xff]
        %v878 = vld [vmem:[%s2 + $0x40] sm:$0xff]
        %v879 = vld [vmem:[%s2 + $0x48] sm:$0xff]
        %v880 = vld [vmem:[%s2 + $0x50] sm:$0xff]
        %v881 = vld [vmem:[%s2 + $0x58] sm:$0xff]
        %v882 = vld [vmem:[%s2 + $0x60] sm:$0xff]
        %v883 = vld [vmem:[%s2 + $0x68] sm:$0xff]
        %v884 = vld [vmem:[%s2 + $0x70] sm:$0xff]
        %v885 = vld [vmem:[%s2 + $0x78] sm:$0xff]
        %v886 = vld [vmem:[%s2 + $0x80] sm:$0xff]
        %v887 = vld [vmem:[%s2 + $0x88] sm:$0xff]
        %v888 = vld [vmem:[%s2 + $0x90] sm:$0xff]
        %v889 = vld [vmem:[%s2 + $0x98] sm:$0xff]
        %v890 = vld [vmem:[%s2 + $0xa0] sm:$0xff]
        %v891 = vld [vmem:[%s2 + $0xa8] sm:$0xff]
        %v892 = vld [vmem:[%s2 + $0xb0] sm:$0xff]
        %v893 = vld [vmem:[%s2 + $0xb8] sm:$0xff]
        %v894 = vld [vmem:[%s2 + $0xc0] sm:$0xff]
        %v895 = vld [vmem:[%s2 + $0xc8] sm:$0xff]
        %v896 = vld [vmem:[%s2 + $0xd0] sm:$0xff]
        %v897 = vld [vmem:[%s2 + $0xd8] sm:$0xff]
        %v898 = vld [vmem:[%s2 + $0xe0] sm:$0xff]
        %v899 = vld [vmem:[%s2 + $0xe8] sm:$0xff]
        %v900 = vld [vmem:[%s2 + $0xf0] sm:$0xff]
        %v901 = vld [vmem:[%s2 + $0xf8] sm:$0xff]
        %v902 = vld [vmem:[%s2 + $0x100] sm:$0xff]
        %v903 = vld [vmem:[%s2 + $0x108] sm:$0xff]
        %v904 = vld [vmem:[%s2 + $0x110] sm:$0xff]
        %v905 = vld [vmem:[%s2 + $0x118] sm:$0xff]
        %v906 = vld [vmem:[%s2 + $0x120] sm:$0xff]
        %v907 = vld [vmem:[%s2 + $0x128] sm:$0xff]
        %v908 = vld [vmem:[%s2 + $0x130] sm:$0xff]
        %v909 = vld [vmem:[%s2 + $0x138] sm:$0xff]
        %v910 = vld [vmem:[%s2 + $0x140] sm:$0xff]
        %v911 = vld [vmem:[%s2 + $0x148] sm:$0xff]
        %v912 = vld [vmem:[%s2 + $0x150] sm:$0xff]
        %v913 = vld [vmem:[%s2 + $0x158] sm:$0xff]
        %v914 = vld [vmem:[%s2 + $0x160] sm:$0xff]
        %v915 = vld [vmem:[%s2 + $0x168] sm:$0xff]
        %v916 = vld [vmem:[%s2 + $0x170] sm:$0xff]
        %v917 = vld [vmem:[%s2 + $0x178] sm:$0xff]
        %v918 = vld [vmem:[%s2 + $0x180] sm:$0xff]
        %v919 = vld [vmem:[%s2 + $0x188] sm:$0xff]
        %v920 = vld [vmem:[%s2 + $0x190] sm:$0xff]
        %v921 = vld [vmem:[%s2 + $0x198] sm:$0xff]
        %v922 = vld [vmem:[%s2 + $0x1a0] sm:$0xff]
        %v923 = vld [vmem:[%s2 + $0x1a8] sm:$0xff]
        %v924 = vld [vmem:[%s2 + $0x1b0] sm:$0xff]
        %v925 = vld [vmem:[%s2 + $0x1b8] sm:$0xff]
        %v926 = vld [vmem:[%s2 + $0x1c0] sm:$0xff]
        %v927 = vld [vmem:[%s2 + $0x1c8] sm:$0xff]
        %v928 = vld [vmem:[%s2 + $0x1d0] sm:$0xff]
        %v929 = vld [vmem:[%s2 + $0x1d8] sm:$0xff]
        %931 = vset.pattern.permute.xlu0 0
        %932 = vperm.xlu0 %931, %v870
        %v933 = vpop.permute.xlu0 %932
        %936 = vset.pattern.permute.xlu0 0
        %937 = vperm.xlu0 %936, %v871
        %v938 = vpop.permute.xlu0 %937
        %941 = vset.pattern.permute.xlu0 0
        %942 = vperm.xlu0 %941, %v872
        %v943 = vpop.permute.xlu0 %942
        %946 = vset.pattern.permute.xlu0 0
        %947 = vperm.xlu0 %946, %v873
        %v948 = vpop.permute.xlu0 %947
        %951 = vset.pattern.permute.xlu0 0
        %952 = vperm.xlu0 %951, %v874
        %v953 = vpop.permute.xlu0 %952
        %956 = vset.pattern.permute.xlu0 0
        %957 = vperm.xlu0 %956, %v875
        %v958 = vpop.permute.xlu0 %957
        %961 = vset.pattern.permute.xlu0 0
        %962 = vperm.xlu0 %961, %v876
        %v963 = vpop.permute.xlu0 %962
        %966 = vset.pattern.permute.xlu0 0
        %967 = vperm.xlu0 %966, %v877
        %v968 = vpop.permute.xlu0 %967
        %971 = vset.pattern.permute.xlu0 0
        %972 = vperm.xlu0 %971, %v878
        %v973 = vpop.permute.xlu0 %972
        %976 = vset.pattern.permute.xlu0 0
        %977 = vperm.xlu0 %976, %v879
        %v978 = vpop.permute.xlu0 %977
        %981 = vset.pattern.permute.xlu0 0
        %982 = vperm.xlu0 %981, %v880
        %v983 = vpop.permute.xlu0 %982
        %986 = vset.pattern.permute.xlu0 0
        %987 = vperm.xlu0 %986, %v881
        %v988 = vpop.permute.xlu0 %987
        %991 = vset.pattern.permute.xlu0 0
        %992 = vperm.xlu0 %991, %v882
        %v993 = vpop.permute.xlu0 %992
        %996 = vset.pattern.permute.xlu0 0
        %997 = vperm.xlu0 %996, %v883
        %v998 = vpop.permute.xlu0 %997
        %1001 = vset.pattern.permute.xlu0 0
        %1002 = vperm.xlu0 %1001, %v884
        %v1003 = vpop.permute.xlu0 %1002
        %1006 = vset.pattern.permute.xlu0 0
        %1007 = vperm.xlu0 %1006, %v885
        %v1008 = vpop.permute.xlu0 %1007
        %1011 = vset.pattern.permute.xlu0 0
        %1012 = vperm.xlu0 %1011, %v886
        %v1013 = vpop.permute.xlu0 %1012
        %1016 = vset.pattern.permute.xlu0 0
        %1017 = vperm.xlu0 %1016, %v887
        %v1018 = vpop.permute.xlu0 %1017
        %1021 = vset.pattern.permute.xlu0 0
        %1022 = vperm.xlu0 %1021, %v888
        %v1023 = vpop.permute.xlu0 %1022
        %1026 = vset.pattern.permute.xlu0 0
        %1027 = vperm.xlu0 %1026, %v889
        %v1028 = vpop.permute.xlu0 %1027
        %1031 = vset.pattern.permute.xlu0 0
        %1032 = vperm.xlu0 %1031, %v890
        %v1033 = vpop.permute.xlu0 %1032
        %1036 = vset.pattern.permute.xlu0 0
        %1037 = vperm.xlu0 %1036, %v891
        %v1038 = vpop.permute.xlu0 %1037
        %1041 = vset.pattern.permute.xlu0 0
        %1042 = vperm.xlu0 %1041, %v892
        %v1043 = vpop.permute.xlu0 %1042
        %1046 = vset.pattern.permute.xlu0 0
        %1047 = vperm.xlu0 %1046, %v893
        %v1048 = vpop.permute.xlu0 %1047
        %1051 = vset.pattern.permute.xlu0 0
        %1052 = vperm.xlu0 %1051, %v894
        %v1053 = vpop.permute.xlu0 %1052
        %1056 = vset.pattern.permute.xlu0 0
        %1057 = vperm.xlu0 %1056, %v895
        %v1058 = vpop.permute.xlu0 %1057
        %1061 = vset.pattern.permute.xlu0 0
        %1062 = vperm.xlu0 %1061, %v896
        %v1063 = vpop.permute.xlu0 %1062
        %1066 = vset.pattern.permute.xlu0 0
        %1067 = vperm.xlu0 %1066, %v897
        %v1068 = vpop.permute.xlu0 %1067
        %1071 = vset.pattern.permute.xlu0 0
        %1072 = vperm.xlu0 %1071, %v898
        %v1073 = vpop.permute.xlu0 %1072
        %1076 = vset.pattern.permute.xlu0 0
        %1077 = vperm.xlu0 %1076, %v899
        %v1078 = vpop.permute.xlu0 %1077
        %1081 = vset.pattern.permute.xlu0 0
        %1082 = vperm.xlu0 %1081, %v900
        %v1083 = vpop.permute.xlu0 %1082
        %1086 = vset.pattern.permute.xlu0 0
        %1087 = vperm.xlu0 %1086, %v901
        %v1088 = vpop.permute.xlu0 %1087
        %1091 = vset.pattern.permute.xlu0 0
        %1092 = vperm.xlu0 %1091, %v902
        %v1093 = vpop.permute.xlu0 %1092
        %1096 = vset.pattern.permute.xlu0 0
        %1097 = vperm.xlu0 %1096, %v903
        %v1098 = vpop.permute.xlu0 %1097
        %1101 = vset.pattern.permute.xlu0 0
        %1102 = vperm.xlu0 %1101, %v904
        %v1103 = vpop.permute.xlu0 %1102
        %1106 = vset.pattern.permute.xlu0 0
        %1107 = vperm.xlu0 %1106, %v905
        %v1108 = vpop.permute.xlu0 %1107
        %1111 = vset.pattern.permute.xlu0 0
        %1112 = vperm.xlu0 %1111, %v906
        %v1113 = vpop.permute.xlu0 %1112
        %1116 = vset.pattern.permute.xlu0 0
        %1117 = vperm.xlu0 %1116, %v907
        %v1118 = vpop.permute.xlu0 %1117
        %1121 = vset.pattern.permute.xlu0 0
        %1122 = vperm.xlu0 %1121, %v908
        %v1123 = vpop.permute.xlu0 %1122
        %1126 = vset.pattern.permute.xlu0 0
        %1127 = vperm.xlu0 %1126, %v909
        %v1128 = vpop.permute.xlu0 %1127
        %1131 = vset.pattern.permute.xlu0 0
        %1132 = vperm.xlu0 %1131, %v910
        %v1133 = vpop.permute.xlu0 %1132
        %1136 = vset.pattern.permute.xlu0 0
        %1137 = vperm.xlu0 %1136, %v911
        %v1138 = vpop.permute.xlu0 %1137
        %1141 = vset.pattern.permute.xlu0 0
        %1142 = vperm.xlu0 %1141, %v912
        %v1143 = vpop.permute.xlu0 %1142
        %1146 = vset.pattern.permute.xlu0 0
        %1147 = vperm.xlu0 %1146, %v913
        %v1148 = vpop.permute.xlu0 %1147
        %1151 = vset.pattern.permute.xlu0 0
        %1152 = vperm.xlu0 %1151, %v914
        %v1153 = vpop.permute.xlu0 %1152
        %1156 = vset.pattern.permute.xlu0 0
        %1157 = vperm.xlu0 %1156, %v915
        %v1158 = vpop.permute.xlu0 %1157
        %1161 = vset.pattern.permute.xlu0 0
        %1162 = vperm.xlu0 %1161, %v916
        %v1163 = vpop.permute.xlu0 %1162
        %1166 = vset.pattern.permute.xlu0 0
        %1167 = vperm.xlu0 %1166, %v917
        %v1168 = vpop.permute.xlu0 %1167
        %1171 = vset.pattern.permute.xlu0 0
        %1172 = vperm.xlu0 %1171, %v918
        %v1173 = vpop.permute.xlu0 %1172
        %1176 = vset.pattern.permute.xlu0 0
        %1177 = vperm.xlu0 %1176, %v919
        %v1178 = vpop.permute.xlu0 %1177
        %1181 = vset.pattern.permute.xlu0 0
        %1182 = vperm.xlu0 %1181, %v920
        %v1183 = vpop.permute.xlu0 %1182
        %1186 = vset.pattern.permute.xlu0 0
        %1187 = vperm.xlu0 %1186, %v921
        %v1188 = vpop.permute.xlu0 %1187
        %1191 = vset.pattern.permute.xlu0 0
        %1192 = vperm.xlu0 %1191, %v922
        %v1193 = vpop.permute.xlu0 %1192
        %1196 = vset.pattern.permute.xlu0 0
        %1197 = vperm.xlu0 %1196, %v923
        %v1198 = vpop.permute.xlu0 %1197
        %1201 = vset.pattern.permute.xlu0 0
        %1202 = vperm.xlu0 %1201, %v924
        %v1203 = vpop.permute.xlu0 %1202
        %1206 = vset.pattern.permute.xlu0 0
        %1207 = vperm.xlu0 %1206, %v925
        %v1208 = vpop.permute.xlu0 %1207
        %1211 = vset.pattern.permute.xlu0 0
        %1212 = vperm.xlu0 %1211, %v926
        %v1213 = vpop.permute.xlu0 %1212
        %1216 = vset.pattern.permute.xlu0 0
        %1217 = vperm.xlu0 %1216, %v927
        %v1218 = vpop.permute.xlu0 %1217
        %1221 = vset.pattern.permute.xlu0 0
        %1222 = vperm.xlu0 %1221, %v928
        %v1223 = vpop.permute.xlu0 %1222
        %1226 = vset.pattern.permute.xlu0 0
        %1227 = vperm.xlu0 %1226, %v929
        %v1228 = vpop.permute.xlu0 %1227
        %vm1230 = vcmask 654336
        %v1232 = vsel %vm1230, %v335, 0
        %v1235 = vsel %vm1230, %v341, 0
        %v1238 = vsel %vm1230, %v347, 0
        %v1241 = vsel %vm1230, %v353, 0
        %v1244 = vsel %vm1230, %v359, 0
        %v1247 = vsel %vm1230, %v365, 0
        %v1250 = vsel %vm1230, %v371, 0
        %v1253 = vsel %vm1230, %v377, 0
        %v1256 = vsel %vm1230, %v383, 0
        %v1259 = vsel %vm1230, %v389, 0
        %v1262 = vsel %vm1230, %v395, 0
        %v1265 = vsel %vm1230, %v401, 0
        %v1268 = vsel %vm1230, %v407, 0
        %v1271 = vsel %vm1230, %v413, 0
        %v1274 = vsel %vm1230, %v419, 0
        %v1277 = vsel %vm1230, %v425, 0
        %v1280 = vsel %vm1230, %v431, 0
        %v1283 = vsel %vm1230, %v437, 0
        %v1286 = vsel %vm1230, %v443, 0
        %v1289 = vsel %vm1230, %v449, 0
        %v1292 = vsel %vm1230, %v455, 0
        %v1295 = vsel %vm1230, %v461, 0
        %v1298 = vsel %vm1230, %v467, 0
        %v1301 = vsel %vm1230, %v473, 0
        %v1304 = vsel %vm1230, %v479, 0
        %v1307 = vsel %vm1230, %v485, 0
        %v1310 = vsel %vm1230, %v491, 0
        %v1313 = vsel %vm1230, %v497, 0
        %v1316 = vsel %vm1230, %v503, 0
        %v1319 = vsel %vm1230, %v509, 0
        %v1322 = vsel %vm1230, %v515, 0
        %v1325 = vsel %vm1230, %v521, 0
        %v1328 = vsel %vm1230, %v527, 0
        %v1331 = vsel %vm1230, %v533, 0
        %v1334 = vsel %vm1230, %v539, 0
        %v1337 = vsel %vm1230, %v545, 0
        %v1340 = vsel %vm1230, %v551, 0
        %v1343 = vsel %vm1230, %v557, 0
        %v1346 = vsel %vm1230, %v563, 0
        %v1349 = vsel %vm1230, %v569, 0
        %v1352 = vsel %vm1230, %v575, 0
        %v1355 = vsel %vm1230, %v581, 0
        %v1358 = vsel %vm1230, %v587, 0
        %v1361 = vsel %vm1230, %v593, 0
        %v1364 = vsel %vm1230, %v599, 0
        %v1367 = vsel %vm1230, %v605, 0
        %v1370 = vsel %vm1230, %v611, 0
        %v1373 = vsel %vm1230, %v617, 0
        %v1376 = vsel %vm1230, %v623, 0
        %v1379 = vsel %vm1230, %v629, 0
        %v1382 = vsel %vm1230, %v635, 0
        %v1385 = vsel %vm1230, %v641, 0
        %v1388 = vsel %vm1230, %v647, 0
        %v1391 = vsel %vm1230, %v653, 0
        %v1394 = vsel %vm1230, %v659, 0
        %v1397 = vsel %vm1230, %v665, 0
        %v1400 = vsel %vm1230, %v671, 0
        %v1403 = vsel %vm1230, %v677, 0
        %v1406 = vsel %vm1230, %v683, 0
        %v1409 = vsel %vm1230, %v689, 0
        %1411 = vmatprep.subr.mxu0 %v691
        %1412 = vmatpush1.msra.mxu0 %v690
        %1413 = vmatprep.subr.mxu0 %v693
        %1414 = vmatpush1.msra.mxu0 %v692
        %1415 = vmatprep.subr.mxu0 %v695
        %1416 = vmatpush1.msra.mxu0 %v694
        %1417 = vmatprep.subr.mxu0 %v697
        %1418 = vmatpush1.msra.mxu0 %v696
        %1419 = vmatprep.subr.mxu0 %v699
        %1420 = vmatpush1.msra.mxu0 %v698
        %1421 = vmatprep.subr.mxu0 %v701
        %1422 = vmatpush1.msra.mxu0 %v700
        %1423 = vmatprep.subr.mxu0 %v703
        %1424 = vmatpush1.msra.mxu0 %v702
        %1425 = vmatprep.subr.mxu0 %v705
        %1426 = vmatpush1.msra.mxu0 %v704
        %1427 = vmatprep.subr.mxu0 %v707
        %1428 = vmatpush1.msra.mxu0 %v706
        %1429 = vmatprep.subr.mxu0 %v709
        %1430 = vmatpush1.msra.mxu0 %v708
        %1431 = vmatprep.subr.mxu0 %v711
        %1432 = vmatpush1.msra.mxu0 %v710
        %1433 = vmatprep.subr.mxu0 %v713
        %1434 = vmatpush1.msra.mxu0 %v712
        %1435 = vmatprep.subr.mxu0 %v715
        %1436 = vmatpush1.msra.mxu0 %v714
        %1437 = vmatprep.subr.mxu0 %v717
        %1438 = vmatpush1.msra.mxu0 %v716
        %1439 = vmatprep.subr.mxu0 %v719
        %1440 = vmatpush1.msra.mxu0 %v718
        %1441 = vmatprep.subr.mxu0 %v721
        %1442 = vmatpush1.msra.mxu0 %v720
        %1443 = vmatprep.subr.mxu0 %v723
        %1444 = vmatpush1.msra.mxu0 %v722
        %1445 = vmatprep.subr.mxu0 %v725
        %1446 = vmatpush1.msra.mxu0 %v724
        %1447 = vmatprep.subr.mxu0 %v727
        %1448 = vmatpush1.msra.mxu0 %v726
        %1449 = vmatprep.subr.mxu0 %v729
        %1450 = vmatpush1.msra.mxu0 %v728
        %1451 = vmatprep.subr.mxu0 %v731
        %1452 = vmatpush1.msra.mxu0 %v730
        %1453 = vmatprep.subr.mxu0 %v733
        %1454 = vmatpush1.msra.mxu0 %v732
        %1455 = vmatprep.subr.mxu0 %v735
        %1456 = vmatpush1.msra.mxu0 %v734
        %1457 = vmatprep.subr.mxu0 %v737
        %1458 = vmatpush1.msra.mxu0 %v736
        %1459 = vmatprep.subr.mxu0 %v739
        %1460 = vmatpush1.msra.mxu0 %v738
        %1461 = vmatprep.subr.mxu0 %v741
        %1462 = vmatpush1.msra.mxu0 %v740
        %1463 = vmatprep.subr.mxu0 %v743
        %1464 = vmatpush1.msra.mxu0 %v742
        %1465 = vmatprep.subr.mxu0 %v745
        %1466 = vmatpush1.msra.mxu0 %v744
        %1467 = vmatprep.subr.mxu0 %v747
        %1468 = vmatpush1.msra.mxu0 %v746
        %1469 = vmatprep.subr.mxu0 %v749
        %1470 = vmatpush1.msra.mxu0 %v748
        %1471 = vmatprep.subr.mxu0 %v751
        %1472 = vmatpush1.msra.mxu0 %v750
        %1473 = vmatprep.subr.mxu0 %v753
        %1474 = vmatpush1.msra.mxu0 %v752
        %1475 = vmatprep.mubr.f32.mxu0 %v331
        %1476 = vmatmul.mubr.f32.gmra.mrb[0].mxu0 %v330
        %v1477 = vpop.f32.mrb[0].mxu0
        %v1478 = vadd.f32 %v933, %v1477
        %v1479 = vpop.f32.mrb[0].mxu0
        %v1480 = vadd.f32 %v933, %v1479
        %1481 = vmatprep.mubr.f32.mxu0 %v337
        %1482 = vmatmul.mubr.f32.gmra.mrb[0].mxu0 %v336
        %v1483 = vpop.f32.mrb[0].mxu0
        %v1484 = vadd.f32 %v938, %v1483
        %v1485 = vpop.f32.mrb[0].mxu0
        %v1486 = vadd.f32 %v938, %v1485
        %1487 = vmatprep.mubr.f32.mxu0 %v343
        %1488 = vmatmul.mubr.f32.gmra.mrb[0].mxu0 %v342
        %v1489 = vpop.f32.mrb[0].mxu0
        %v1490 = vadd.f32 %v943, %v1489
        %v1491 = vpop.f32.mrb[0].mxu0
        %v1492 = vadd.f32 %v943, %v1491
        %1493 = vmatprep.mubr.f32.mxu0 %v349
        %1494 = vmatmul.mubr.f32.gmra.mrb[0].mxu0 %v348
        %v1495 = vpop.f32.mrb[0].mxu0
        %v1496 = vadd.f32 %v948, %v1495
        %v1497 = vpop.f32.mrb[0].mxu0
        %v1498 = vadd.f32 %v948, %v1497
        %1499 = vmatprep.mubr.f32.mxu0 %v355
        %1500 = vmatmul.mubr.f32.gmra.mrb[0].mxu0 %v354
        %v1501 = vpop.f32.mrb[0].mxu0
        %v1502 = vadd.f32 %v953, %v1501
        %v1503 = vpop.f32.mrb[0].mxu0
        %v1504 = vadd.f32 %v953, %v1503
        %1505 = vmatprep.mubr.f32.mxu0 %v361
        %1506 = vmatmul.mubr.f32.gmra.mrb[0].mxu0 %v360
        %v1507 = vpop.f32.mrb[0].mxu0
        %v1508 = vadd.f32 %v958, %v1507
        %v1509 = vpop.f32.mrb[0].mxu0
        %v1510 = vadd.f32 %v958, %v1509
        %1511 = vmatprep.mubr.f32.mxu0 %v367
        %1512 = vmatmul.mubr.f32.gmra.mrb[0].mxu0 %v366
        %v1513 = vpop.f32.mrb[0].mxu0
        %v1514 = vadd.f32 %v963, %v1513
        %v1515 = vpop.f32.mrb[0].mxu0
        %v1516 = vadd.f32 %v963, %v1515
        %1517 = vmatprep.mubr.f32.mxu0 %v373
        %1518 = vmatmul.mubr.f32.gmra.mrb[0].mxu0 %v372
        %v1519 = vpop.f32.mrb[0].mxu0
        %v1520 = vadd.f32 %v968, %v1519
        %v1521 = vpop.f32.mrb[0].mxu0
        %v1522 = vadd.f32 %v968, %v1521
        %1523 = vmatprep.mubr.f32.mxu0 %v379
        %1524 = vmatmul.mubr.f32.gmra.mrb[0].mxu0 %v378
        %v1525 = vpop.f32.mrb[0].mxu0
        %v1526 = vadd.f32 %v973, %v1525
        %v1527 = vpop.f32.mrb[0].mxu0
        %v1528 = vadd.f32 %v973, %v1527
        %1529 = vmatprep.mubr.f32.mxu0 %v385
        %1530 = vmatmul.mubr.f32.gmra.mrb[0].mxu0 %v384
        %v1531 = vpop.f32.mrb[0].mxu0
        %v1532 = vadd.f32 %v978, %v1531
        %v1533 = vpop.f32.mrb[0].mxu0
        %v1534 = vadd.f32 %v978, %v1533
        %1535 = vmatprep.mubr.f32.mxu0 %v391
        %1536 = vmatmul.mubr.f32.gmra.mrb[0].mxu0 %v390
        %v1537 = vpop.f32.mrb[0].mxu0
        %v1538 = vadd.f32 %v983, %v1537
        %v1539 = vpop.f32.mrb[0].mxu0
        %v1540 = vadd.f32 %v983, %v1539
        %1541 = vmatprep.mubr.f32.mxu0 %v397
        %1542 = vmatmul.mubr.f32.gmra.mrb[0].mxu0 %v396
        %v1543 = vpop.f32.mrb[0].mxu0
        %v1544 = vadd.f32 %v988, %v1543
        %v1545 = vpop.f32.mrb[0].mxu0
        %v1546 = vadd.f32 %v988, %v1545
        %1547 = vmatprep.mubr.f32.mxu0 %v403
        %1548 = vmatmul.mubr.f32.gmra.mrb[0].mxu0 %v402
        %v1549 = vpop.f32.mrb[0].mxu0
        %v1550 = vadd.f32 %v993, %v1549
        %v1551 = vpop.f32.mrb[0].mxu0
        %v1552 = vadd.f32 %v993, %v1551
        %1553 = vmatprep.mubr.f32.mxu0 %v409
        %1554 = vmatmul.mubr.f32.gmra.mrb[0].mxu0 %v408
        %v1555 = vpop.f32.mrb[0].mxu0
        %v1556 = vadd.f32 %v998, %v1555
        %v1557 = vpop.f32.mrb[0].mxu0
        %v1558 = vadd.f32 %v998, %v1557
        %1559 = vmatprep.mubr.f32.mxu0 %v415
        %1560 = vmatmul.mubr.f32.gmra.mrb[0].mxu0 %v414
        %v1561 = vpop.f32.mrb[0].mxu0
        %v1562 = vadd.f32 %v1003, %v1561
        %v1563 = vpop.f32.mrb[0].mxu0
        %v1564 = vadd.f32 %v1003, %v1563
        %1565 = vmatprep.mubr.f32.mxu0 %v421
        %1566 = vmatmul.mubr.f32.gmra.mrb[0].mxu0 %v420
        %v1567 = vpop.f32.mrb[0].mxu0
        %v1568 = vadd.f32 %v1008, %v1567
        %v1569 = vpop.f32.mrb[0].mxu0
        %v1570 = vadd.f32 %v1008, %v1569
        %1571 = vmatprep.mubr.f32.mxu0 %v427
        %1572 = vmatmul.mubr.f32.gmra.mrb[0].mxu0 %v426
        %v1573 = vpop.f32.mrb[0].mxu0
        %v1574 = vadd.f32 %v1013, %v1573
        %v1575 = vpop.f32.mrb[0].mxu0
        %v1576 = vadd.f32 %v1013, %v1575
        %1577 = vmatprep.mubr.f32.mxu0 %v433
        %1578 = vmatmul.mubr.f32.gmra.mrb[0].mxu0 %v432
        %v1579 = vpop.f32.mrb[0].mxu0
        %v1580 = vadd.f32 %v1018, %v1579
        %v1581 = vpop.f32.mrb[0].mxu0
        %v1582 = vadd.f32 %v1018, %v1581
        %1583 = vmatprep.mubr.f32.mxu0 %v439
        %1584 = vmatmul.mubr.f32.gmra.mrb[0].mxu0 %v438
        %v1585 = vpop.f32.mrb[0].mxu0
        %v1586 = vadd.f32 %v1023, %v1585
        %v1587 = vpop.f32.mrb[0].mxu0
        %v1588 = vadd.f32 %v1023, %v1587
        %1589 = vmatprep.mubr.f32.mxu0 %v445
        %1590 = vmatmul.mubr.f32.gmra.mrb[0].mxu0 %v444
        %v1591 = vpop.f32.mrb[0].mxu0
        %v1592 = vadd.f32 %v1028, %v1591
        %v1593 = vpop.f32.mrb[0].mxu0
        %v1594 = vadd.f32 %v1028, %v1593
        %1595 = vmatprep.mubr.f32.mxu0 %v451
        %1596 = vmatmul.mubr.f32.gmra.mrb[0].mxu0 %v450
        %v1597 = vpop.f32.mrb[0].mxu0
        %v1598 = vadd.f32 %v1033, %v1597
        %v1599 = vpop.f32.mrb[0].mxu0
        %v1600 = vadd.f32 %v1033, %v1599
        %1601 = vmatprep.mubr.f32.mxu0 %v457
        %1602 = vmatmul.mubr.f32.gmra.mrb[0].mxu0 %v456
        %v1603 = vpop.f32.mrb[0].mxu0
        %v1604 = vadd.f32 %v1038, %v1603
        %v1605 = vpop.f32.mrb[0].mxu0
        %v1606 = vadd.f32 %v1038, %v1605
        %1607 = vmatprep.mubr.f32.mxu0 %v463
        %1608 = vmatmul.mubr.f32.gmra.mrb[0].mxu0 %v462
        %v1609 = vpop.f32.mrb[0].mxu0
        %v1610 = vadd.f32 %v1043, %v1609
        %v1611 = vpop.f32.mrb[0].mxu0
        %v1612 = vadd.f32 %v1043, %v1611
        %1613 = vmatprep.mubr.f32.mxu0 %v469
        %1614 = vmatmul.mubr.f32.gmra.mrb[0].mxu0 %v468
        %v1615 = vpop.f32.mrb[0].mxu0
        %v1616 = vadd.f32 %v1048, %v1615
        %v1617 = vpop.f32.mrb[0].mxu0
        %v1618 = vadd.f32 %v1048, %v1617
        %1619 = vmatprep.mubr.f32.mxu0 %v475
        %1620 = vmatmul.mubr.f32.gmra.mrb[0].mxu0 %v474
        %v1621 = vpop.f32.mrb[0].mxu0
        %v1622 = vadd.f32 %v1053, %v1621
        %v1623 = vpop.f32.mrb[0].mxu0
        %v1624 = vadd.f32 %v1053, %v1623
        %1625 = vmatprep.mubr.f32.mxu0 %v481
        %1626 = vmatmul.mubr.f32.gmra.mrb[0].mxu0 %v480
        %v1627 = vpop.f32.mrb[0].mxu0
        %v1628 = vadd.f32 %v1058, %v1627
        %v1629 = vpop.f32.mrb[0].mxu0
        %v1630 = vadd.f32 %v1058, %v1629
        %1631 = vmatprep.mubr.f32.mxu0 %v487
        %1632 = vmatmul.mubr.f32.gmra.mrb[0].mxu0 %v486
        %v1633 = vpop.f32.mrb[0].mxu0
        %v1634 = vadd.f32 %v1063, %v1633
        %v1635 = vpop.f32.mrb[0].mxu0
        %v1636 = vadd.f32 %v1063, %v1635
        %1637 = vmatprep.mubr.f32.mxu0 %v493
        %1638 = vmatmul.mubr.f32.gmra.mrb[0].mxu0 %v492
        %v1639 = vpop.f32.mrb[0].mxu0
        %v1640 = vadd.f32 %v1068, %v1639
        %v1641 = vpop.f32.mrb[0].mxu0
        %v1642 = vadd.f32 %v1068, %v1641
        %1643 = vmatprep.mubr.f32.mxu0 %v499
        %1644 = vmatmul.mubr.f32.gmra.mrb[0].mxu0 %v498
        %v1645 = vpop.f32.mrb[0].mxu0
        %v1646 = vadd.f32 %v1073, %v1645
        %v1647 = vpop.f32.mrb[0].mxu0
        %v1648 = vadd.f32 %v1073, %v1647
        %1649 = vmatprep.mubr.f32.mxu0 %v505
        %1650 = vmatmul.mubr.f32.gmra.mrb[0].mxu0 %v504
        %v1651 = vpop.f32.mrb[0].mxu0
        %v1652 = vadd.f32 %v1078, %v1651
        %v1653 = vpop.f32.mrb[0].mxu0
        %v1654 = vadd.f32 %v1078, %v1653
        %1655 = vmatprep.mubr.f32.mxu0 %v511
        %1656 = vmatmul.mubr.f32.gmra.mrb[0].mxu0 %v510
        %v1657 = vpop.f32.mrb[0].mxu0
        %v1658 = vadd.f32 %v1083, %v1657
        %v1659 = vpop.f32.mrb[0].mxu0
        %v1660 = vadd.f32 %v1083, %v1659
        %1661 = vmatprep.mubr.f32.mxu0 %v517
        %1662 = vmatmul.mubr.f32.gmra.mrb[0].mxu0 %v516
        %v1663 = vpop.f32.mrb[0].mxu0
        %v1664 = vadd.f32 %v1088, %v1663
        %v1665 = vpop.f32.mrb[0].mxu0
        %v1666 = vadd.f32 %v1088, %v1665
        %1667 = vmatprep.mubr.f32.mxu0 %v523
        %1668 = vmatmul.mubr.f32.gmra.mrb[0].mxu0 %v522
        %v1669 = vpop.f32.mrb[0].mxu0
        %v1670 = vadd.f32 %v1093, %v1669
        %v1671 = vpop.f32.mrb[0].mxu0
        %v1672 = vadd.f32 %v1093, %v1671
        %1673 = vmatprep.mubr.f32.mxu0 %v529
        %1674 = vmatmul.mubr.f32.gmra.mrb[0].mxu0 %v528
        %v1675 = vpop.f32.mrb[0].mxu0
        %v1676 = vadd.f32 %v1098, %v1675
        %v1677 = vpop.f32.mrb[0].mxu0
        %v1678 = vadd.f32 %v1098, %v1677
        %1679 = vmatprep.mubr.f32.mxu0 %v535
        %1680 = vmatmul.mubr.f32.gmra.mrb[0].mxu0 %v534
        %v1681 = vpop.f32.mrb[0].mxu0
        %v1682 = vadd.f32 %v1103, %v1681
        %v1683 = vpop.f32.mrb[0].mxu0
        %v1684 = vadd.f32 %v1103, %v1683
        %1685 = vmatprep.mubr.f32.mxu0 %v541
        %1686 = vmatmul.mubr.f32.gmra.mrb[0].mxu0 %v540
        %v1687 = vpop.f32.mrb[0].mxu0
        %v1688 = vadd.f32 %v1108, %v1687
        %v1689 = vpop.f32.mrb[0].mxu0
        %v1690 = vadd.f32 %v1108, %v1689
        %1691 = vmatprep.mubr.f32.mxu0 %v547
        %1692 = vmatmul.mubr.f32.gmra.mrb[0].mxu0 %v546
        %v1693 = vpop.f32.mrb[0].mxu0
        %v1694 = vadd.f32 %v1113, %v1693
        %v1695 = vpop.f32.mrb[0].mxu0
        %v1696 = vadd.f32 %v1113, %v1695
        %1697 = vmatprep.mubr.f32.mxu0 %v553
        %1698 = vmatmul.mubr.f32.gmra.mrb[0].mxu0 %v552
        %v1699 = vpop.f32.mrb[0].mxu0
        %v1700 = vadd.f32 %v1118, %v1699
        %v1701 = vpop.f32.mrb[0].mxu0
        %v1702 = vadd.f32 %v1118, %v1701
        %1703 = vmatprep.mubr.f32.mxu0 %v559
        %1704 = vmatmul.mubr.f32.gmra.mrb[0].mxu0 %v558
        %v1705 = vpop.f32.mrb[0].mxu0
        %v1706 = vadd.f32 %v1123, %v1705
        %v1707 = vpop.f32.mrb[0].mxu0
        %v1708 = vadd.f32 %v1123, %v1707
        %1709 = vmatprep.mubr.f32.mxu0 %v565
        %1710 = vmatmul.mubr.f32.gmra.mrb[0].mxu0 %v564
        %v1711 = vpop.f32.mrb[0].mxu0
        %v1712 = vadd.f32 %v1128, %v1711
        %v1713 = vpop.f32.mrb[0].mxu0
        %v1714 = vadd.f32 %v1128, %v1713
        %1715 = vmatprep.mubr.f32.mxu0 %v571
        %1716 = vmatmul.mubr.f32.gmra.mrb[0].mxu0 %v570
        %v1717 = vpop.f32.mrb[0].mxu0
        %v1718 = vadd.f32 %v1133, %v1717
        %v1719 = vpop.f32.mrb[0].mxu0
        %v1720 = vadd.f32 %v1133, %v1719
        %1721 = vmatprep.mubr.f32.mxu0 %v577
        %1722 = vmatmul.mubr.f32.gmra.mrb[0].mxu0 %v576
        %v1723 = vpop.f32.mrb[0].mxu0
        %v1724 = vadd.f32 %v1138, %v1723
        %v1725 = vpop.f32.mrb[0].mxu0
        %v1726 = vadd.f32 %v1138, %v1725
        %1727 = vmatprep.mubr.f32.mxu0 %v583
        %1728 = vmatmul.mubr.f32.gmra.mrb[0].mxu0 %v582
        %v1729 = vpop.f32.mrb[0].mxu0
        %v1730 = vadd.f32 %v1143, %v1729
        %v1731 = vpop.f32.mrb[0].mxu0
        %v1732 = vadd.f32 %v1143, %v1731
        %1733 = vmatprep.mubr.f32.mxu0 %v589
        %1734 = vmatmul.mubr.f32.gmra.mrb[0].mxu0 %v588
        %v1735 = vpop.f32.mrb[0].mxu0
        %v1736 = vadd.f32 %v1148, %v1735
        %v1737 = vpop.f32.mrb[0].mxu0
        %v1738 = vadd.f32 %v1148, %v1737
        %1739 = vmatprep.mubr.f32.mxu0 %v595
        %1740 = vmatmul.mubr.f32.gmra.mrb[0].mxu0 %v594
        %v1741 = vpop.f32.mrb[0].mxu0
        %v1742 = vadd.f32 %v1153, %v1741
        %v1743 = vpop.f32.mrb[0].mxu0
        %v1744 = vadd.f32 %v1153, %v1743
        %1745 = vmatprep.mubr.f32.mxu0 %v601
        %1746 = vmatmul.mubr.f32.gmra.mrb[0].mxu0 %v600
        %v1747 = vpop.f32.mrb[0].mxu0
        %v1748 = vadd.f32 %v1158, %v1747
        %v1749 = vpop.f32.mrb[0].mxu0
        %v1750 = vadd.f32 %v1158, %v1749
        %1751 = vmatprep.mubr.f32.mxu0 %v607
        %1752 = vmatmul.mubr.f32.gmra.mrb[0].mxu0 %v606
        %v1753 = vpop.f32.mrb[0].mxu0
        %v1754 = vadd.f32 %v1163, %v1753
        %v1755 = vpop.f32.mrb[0].mxu0
        %v1756 = vadd.f32 %v1163, %v1755
        %1757 = vmatprep.mubr.f32.mxu0 %v613
        %1758 = vmatmul.mubr.f32.gmra.mrb[0].mxu0 %v612
        %v1759 = vpop.f32.mrb[0].mxu0
        %v1760 = vadd.f32 %v1168, %v1759
        %v1761 = vpop.f32.mrb[0].mxu0
        %v1762 = vadd.f32 %v1168, %v1761
        %1763 = vmatprep.mubr.f32.mxu0 %v619
        %1764 = vmatmul.mubr.f32.gmra.mrb[0].mxu0 %v618
        %v1765 = vpop.f32.mrb[0].mxu0
        %v1766 = vadd.f32 %v1173, %v1765
        %v1767 = vpop.f32.mrb[0].mxu0
        %v1768 = vadd.f32 %v1173, %v1767
        %1769 = vmatprep.mubr.f32.mxu0 %v625
        %1770 = vmatmul.mubr.f32.gmra.mrb[0].mxu0 %v624
        %v1771 = vpop.f32.mrb[0].mxu0
        %v1772 = vadd.f32 %v1178, %v1771
        %v1773 = vpop.f32.mrb[0].mxu0
        %v1774 = vadd.f32 %v1178, %v1773
        %1775 = vmatprep.mubr.f32.mxu0 %v631
        %1776 = vmatmul.mubr.f32.gmra.mrb[0].mxu0 %v630
        %v1777 = vpop.f32.mrb[0].mxu0
        %v1778 = vadd.f32 %v1183, %v1777
        %v1779 = vpop.f32.mrb[0].mxu0
        %v1780 = vadd.f32 %v1183, %v1779
        %1781 = vmatprep.mubr.f32.mxu0 %v637
        %1782 = vmatmul.mubr.f32.gmra.mrb[0].mxu0 %v636
        %v1783 = vpop.f32.mrb[0].mxu0
        %v1784 = vadd.f32 %v1188, %v1783
        %v1785 = vpop.f32.mrb[0].mxu0
        %v1786 = vadd.f32 %v1188, %v1785
        %1787 = vmatprep.mubr.f32.mxu0 %v643
        %1788 = vmatmul.mubr.f32.gmra.mrb[0].mxu0 %v642
        %v1789 = vpop.f32.mrb[0].mxu0
        %v1790 = vadd.f32 %v1193, %v1789
        %v1791 = vpop.f32.mrb[0].mxu0
        %v1792 = vadd.f32 %v1193, %v1791
        %1793 = vmatprep.mubr.f32.mxu0 %v649
        %1794 = vmatmul.mubr.f32.gmra.mrb[0].mxu0 %v648
        %v1795 = vpop.f32.mrb[0].mxu0
        %v1796 = vadd.f32 %v1198, %v1795
        %v1797 = vpop.f32.mrb[0].mxu0
        %v1798 = vadd.f32 %v1198, %v1797
        %1799 = vmatprep.mubr.f32.mxu0 %v655
        %1800 = vmatmul.mubr.f32.gmra.mrb[0].mxu0 %v654
        %v1801 = vpop.f32.mrb[0].mxu0
        %v1802 = vadd.f32 %v1203, %v1801
        %v1803 = vpop.f32.mrb[0].mxu0
        %v1804 = vadd.f32 %v1203, %v1803
        %1805 = vmatprep.mubr.f32.mxu0 %v661
        %1806 = vmatmul.mubr.f32.gmra.mrb[0].mxu0 %v660
        %v1807 = vpop.f32.mrb[0].mxu0
        %v1808 = vadd.f32 %v1208, %v1807
        %v1809 = vpop.f32.mrb[0].mxu0
        %v1810 = vadd.f32 %v1208, %v1809
        %1811 = vmatprep.mubr.f32.mxu0 %v667
        %1812 = vmatmul.mubr.f32.gmra.mrb[0].mxu0 %v666
        %v1813 = vpop.f32.mrb[0].mxu0
        %v1814 = vadd.f32 %v1213, %v1813
        %v1815 = vpop.f32.mrb[0].mxu0
        %v1816 = vadd.f32 %v1213, %v1815
        %1817 = vmatprep.mubr.f32.mxu0 %v673
        %1818 = vmatmul.mubr.f32.gmra.mrb[0].mxu0 %v672
        %v1819 = vpop.f32.mrb[0].mxu0
        %v1820 = vadd.f32 %v1218, %v1819
        %v1821 = vpop.f32.mrb[0].mxu0
        %v1822 = vadd.f32 %v1218, %v1821
        %1823 = vmatprep.mubr.f32.mxu0 %v679
        %1824 = vmatmul.mubr.f32.gmra.mrb[0].mxu0 %v678
        %v1825 = vpop.f32.mrb[0].mxu0
        %v1826 = vadd.f32 %v1223, %v1825
        %v1827 = vpop.f32.mrb[0].mxu0
        %v1828 = vadd.f32 %v1223, %v1827
        %1829 = vmatprep.mubr.f32.mxu0 %v685
        %1830 = vmatmul.mubr.f32.gmra.mrb[0].mxu0 %v684
        %v1831 = vpop.f32.mrb[0].mxu0
        %v1832 = vadd.f32 %v1228, %v1831
        %v1833 = vpop.f32.mrb[0].mxu0
        %v1834 = vadd.f32 %v1228, %v1833
        %1835 = vdwg.mxu0
        %1836 = vmatprep.subr.mxu0 %v755
        %1837 = vmatpush1.msra.mxu0 %v754
        %1838 = vmatprep.subr.mxu0 %v757
        %1839 = vmatpush1.msra.mxu0 %v756
        %1840 = vmatprep.subr.mxu0 %v759
        %1841 = vmatpush1.msra.mxu0 %v758
        %1842 = vmatprep.subr.mxu0 %v761
        %1843 = vmatpush1.msra.mxu0 %v760
        %1844 = vmatprep.subr.mxu0 %v763
        %1845 = vmatpush1.msra.mxu0 %v762
        %1846 = vmatprep.subr.mxu0 %v765
        %1847 = vmatpush1.msra.mxu0 %v764
        %1848 = vmatprep.subr.mxu0 %v767
        %1849 = vmatpush1.msra.mxu0 %v766
        %1850 = vmatprep.subr.mxu0 %v769
        %1851 = vmatpush1.msra.mxu0 %v768
        %1852 = vmatprep.subr.mxu0 %v771
        %1853 = vmatpush1.msra.mxu0 %v770
        %1854 = vmatprep.subr.mxu0 %v773
        %1855 = vmatpush1.msra.mxu0 %v772
        %1856 = vmatprep.subr.mxu0 %v775
        %1857 = vmatpush1.msra.mxu0 %v774
        %1858 = vmatprep.subr.mxu0 %v777
        %1859 = vmatpush1.msra.mxu0 %v776
        %1860 = vmatprep.subr.mxu0 %v779
        %1861 = vmatpush1.msra.mxu0 %v778
        %1862 = vmatprep.subr.mxu0 %v781
        %1863 = vmatpush1.msra.mxu0 %v780
        %1864 = vmatprep.subr.mxu0 %v783
        %1865 = vmatpush1.msra.mxu0 %v782
        %1866 = vmatprep.subr.mxu0 %v785
        %1867 = vmatpush1.msra.mxu0 %v784
        %1868 = vmatprep.subr.mxu0 %v787
        %1869 = vmatpush1.msra.mxu0 %v786
        %1870 = vmatprep.subr.mxu0 %v789
        %1871 = vmatpush1.msra.mxu0 %v788
        %1872 = vmatprep.subr.mxu0 %v791
        %1873 = vmatpush1.msra.mxu0 %v790
        %1874 = vmatprep.subr.mxu0 %v793
        %1875 = vmatpush1.msra.mxu0 %v792
        %1876 = vmatprep.subr.mxu0 %v795
        %1877 = vmatpush1.msra.mxu0 %v794
        %1878 = vmatprep.subr.mxu0 %v797
        %1879 = vmatpush1.msra.mxu0 %v796
        %1880 = vmatprep.subr.mxu0 %v799
        %1881 = vmatpush1.msra.mxu0 %v798
        %1882 = vmatprep.subr.mxu0 %v801
        %1883 = vmatpush1.msra.mxu0 %v800
        %1884 = vmatprep.subr.mxu0 %v803
        %1885 = vmatpush1.msra.mxu0 %v802
        %1886 = vmatprep.subr.mxu0 %v805
        %1887 = vmatpush1.msra.mxu0 %v804
        %1888 = vmatprep.subr.mxu0 %v807
        %1889 = vmatpush1.msra.mxu0 %v806
        %1890 = vmatprep.subr.mxu0 %v809
        %1891 = vmatpush1.msra.mxu0 %v808
        %1892 = vmatprep.subr.mxu0 %v811
        %1893 = vmatpush1.msra.mxu0 %v810
        %1894 = vmatprep.subr.mxu0 %v813
        %1895 = vmatpush1.msra.mxu0 %v812
        %1896 = vmatprep.subr.mxu0 %v815
        %1897 = vmatpush1.msra.mxu0 %v814
        %1898 = vmatprep.subr.mxu0 %v817
        %1899 = vmatpush1.msra.mxu0 %v816
        %1900 = vmatprep.mubr.f32.mxu0 %v333
        %1901 = vmatmul.mubr.f32.gmra.mrb[0].mxu0 %v332
        %v1902 = vpop.f32.mrb[0].mxu0
        %v1903 = vadd.f32 %v1478, %v1902
        %v1904 = vpop.f32.mrb[0].mxu0
        %v1905 = vadd.f32 %v1480, %v1904
        %1906 = vmatprep.mubr.f32.mxu0 %v339
        %1907 = vmatmul.mubr.f32.gmra.mrb[0].mxu0 %v338
        %v1908 = vpop.f32.mrb[0].mxu0
        %v1909 = vadd.f32 %v1484, %v1908
        %v1910 = vpop.f32.mrb[0].mxu0
        %v1911 = vadd.f32 %v1486, %v1910
        %1912 = vmatprep.mubr.f32.mxu0 %v345
        %1913 = vmatmul.mubr.f32.gmra.mrb[0].mxu0 %v344
        %v1914 = vpop.f32.mrb[0].mxu0
        %v1915 = vadd.f32 %v1490, %v1914
        %v1916 = vpop.f32.mrb[0].mxu0
        %v1917 = vadd.f32 %v1492, %v1916
        %1918 = vmatprep.mubr.f32.mxu0 %v351
        %1919 = vmatmul.mubr.f32.gmra.mrb[0].mxu0 %v350
        %v1920 = vpop.f32.mrb[0].mxu0
        %v1921 = vadd.f32 %v1496, %v1920
        %v1922 = vpop.f32.mrb[0].mxu0
        %v1923 = vadd.f32 %v1498, %v1922
        %1924 = vmatprep.mubr.f32.mxu0 %v357
        %1925 = vmatmul.mubr.f32.gmra.mrb[0].mxu0 %v356
        %v1926 = vpop.f32.mrb[0].mxu0
        %v1927 = vadd.f32 %v1502, %v1926
        %v1928 = vpop.f32.mrb[0].mxu0
        %v1929 = vadd.f32 %v1504, %v1928
        %1930 = vmatprep.mubr.f32.mxu0 %v363
        %1931 = vmatmul.mubr.f32.gmra.mrb[0].mxu0 %v362
        %v1932 = vpop.f32.mrb[0].mxu0
        %v1933 = vadd.f32 %v1508, %v1932
        %v1934 = vpop.f32.mrb[0].mxu0
        %v1935 = vadd.f32 %v1510, %v1934
        %1936 = vmatprep.mubr.f32.mxu0 %v369
        %1937 = vmatmul.mubr.f32.gmra.mrb[0].mxu0 %v368
        %v1938 = vpop.f32.mrb[0].mxu0
        %v1939 = vadd.f32 %v1514, %v1938
        %v1940 = vpop.f32.mrb[0].mxu0
        %v1941 = vadd.f32 %v1516, %v1940
        %1942 = vmatprep.mubr.f32.mxu0 %v375
        %1943 = vmatmul.mubr.f32.gmra.mrb[0].mxu0 %v374
        %v1944 = vpop.f32.mrb[0].mxu0
        %v1945 = vadd.f32 %v1520, %v1944
        %v1946 = vpop.f32.mrb[0].mxu0
        %v1947 = vadd.f32 %v1522, %v1946
        %1948 = vmatprep.mubr.f32.mxu0 %v381
        %1949 = vmatmul.mubr.f32.gmra.mrb[0].mxu0 %v380
        %v1950 = vpop.f32.mrb[0].mxu0
        %v1951 = vadd.f32 %v1526, %v1950
        %v1952 = vpop.f32.mrb[0].mxu0
        %v1953 = vadd.f32 %v1528, %v1952
        %1954 = vmatprep.mubr.f32.mxu0 %v387
        %1955 = vmatmul.mubr.f32.gmra.mrb[0].mxu0 %v386
        %v1956 = vpop.f32.mrb[0].mxu0
        %v1957 = vadd.f32 %v1532, %v1956
        %v1958 = vpop.f32.mrb[0].mxu0
        %v1959 = vadd.f32 %v1534, %v1958
        %1960 = vmatprep.mubr.f32.mxu0 %v393
        %1961 = vmatmul.mubr.f32.gmra.mrb[0].mxu0 %v392
        %v1962 = vpop.f32.mrb[0].mxu0
        %v1963 = vadd.f32 %v1538, %v1962
        %v1964 = vpop.f32.mrb[0].mxu0
        %v1965 = vadd.f32 %v1540, %v1964
        %1966 = vmatprep.mubr.f32.mxu0 %v399
        %1967 = vmatmul.mubr.f32.gmra.mrb[0].mxu0 %v398
        %v1968 = vpop.f32.mrb[0].mxu0
        %v1969 = vadd.f32 %v1544, %v1968
        %v1970 = vpop.f32.mrb[0].mxu0
        %v1971 = vadd.f32 %v1546, %v1970
        %1972 = vmatprep.mubr.f32.mxu0 %v405
        %1973 = vmatmul.mubr.f32.gmra.mrb[0].mxu0 %v404
        %v1974 = vpop.f32.mrb[0].mxu0
        %v1975 = vadd.f32 %v1550, %v1974
        %v1976 = vpop.f32.mrb[0].mxu0
        %v1977 = vadd.f32 %v1552, %v1976
        %1978 = vmatprep.mubr.f32.mxu0 %v411
        %1979 = vmatmul.mubr.f32.gmra.mrb[0].mxu0 %v410
        %v1980 = vpop.f32.mrb[0].mxu0
        %v1981 = vadd.f32 %v1556, %v1980
        %v1982 = vpop.f32.mrb[0].mxu0
        %v1983 = vadd.f32 %v1558, %v1982
        %1984 = vmatprep.mubr.f32.mxu0 %v417
        %1985 = vmatmul.mubr.f32.gmra.mrb[0].mxu0 %v416
        %v1986 = vpop.f32.mrb[0].mxu0
        %v1987 = vadd.f32 %v1562, %v1986
        %v1988 = vpop.f32.mrb[0].mxu0
        %v1989 = vadd.f32 %v1564, %v1988
        %1990 = vmatprep.mubr.f32.mxu0 %v423
        %1991 = vmatmul.mubr.f32.gmra.mrb[0].mxu0 %v422
        %v1992 = vpop.f32.mrb[0].mxu0
        %v1993 = vadd.f32 %v1568, %v1992
        %v1994 = vpop.f32.mrb[0].mxu0
        %v1995 = vadd.f32 %v1570, %v1994
        %1996 = vmatprep.mubr.f32.mxu0 %v429
        %1997 = vmatmul.mubr.f32.gmra.mrb[0].mxu0 %v428
        %v1998 = vpop.f32.mrb[0].mxu0
        %v1999 = vadd.f32 %v1574, %v1998
        %v2000 = vpop.f32.mrb[0].mxu0
        %v2001 = vadd.f32 %v1576, %v2000
        %2002 = vmatprep.mubr.f32.mxu0 %v435
        %2003 = vmatmul.mubr.f32.gmra.mrb[0].mxu0 %v434
        %v2004 = vpop.f32.mrb[0].mxu0
        %v2005 = vadd.f32 %v1580, %v2004
        %v2006 = vpop.f32.mrb[0].mxu0
        %v2007 = vadd.f32 %v1582, %v2006
        %2008 = vmatprep.mubr.f32.mxu0 %v441
        %2009 = vmatmul.mubr.f32.gmra.mrb[0].mxu0 %v440
        %v2010 = vpop.f32.mrb[0].mxu0
        %v2011 = vadd.f32 %v1586, %v2010
        %v2012 = vpop.f32.mrb[0].mxu0
        %v2013 = vadd.f32 %v1588, %v2012
        %2014 = vmatprep.mubr.f32.mxu0 %v447
        %2015 = vmatmul.mubr.f32.gmra.mrb[0].mxu0 %v446
        %v2016 = vpop.f32.mrb[0].mxu0
        %v2017 = vadd.f32 %v1592, %v2016
        %v2018 = vpop.f32.mrb[0].mxu0
        %v2019 = vadd.f32 %v1594, %v2018
        %2020 = vmatprep.mubr.f32.mxu0 %v453
        %2021 = vmatmul.mubr.f32.gmra.mrb[0].mxu0 %v452
        %v2022 = vpop.f32.mrb[0].mxu0
        %v2023 = vadd.f32 %v1598, %v2022
        %v2024 = vpop.f32.mrb[0].mxu0
        %v2025 = vadd.f32 %v1600, %v2024
        %2026 = vmatprep.mubr.f32.mxu0 %v459
        %2027 = vmatmul.mubr.f32.gmra.mrb[0].mxu0 %v458
        %v2028 = vpop.f32.mrb[0].mxu0
        %v2029 = vadd.f32 %v1604, %v2028
        %v2030 = vpop.f32.mrb[0].mxu0
        %v2031 = vadd.f32 %v1606, %v2030
        %2032 = vmatprep.mubr.f32.mxu0 %v465
        %2033 = vmatmul.mubr.f32.gmra.mrb[0].mxu0 %v464
        %v2034 = vpop.f32.mrb[0].mxu0
        %v2035 = vadd.f32 %v1610, %v2034
        %v2036 = vpop.f32.mrb[0].mxu0
        %v2037 = vadd.f32 %v1612, %v2036
        %2038 = vmatprep.mubr.f32.mxu0 %v471
        %2039 = vmatmul.mubr.f32.gmra.mrb[0].mxu0 %v470
        %v2040 = vpop.f32.mrb[0].mxu0
        %v2041 = vadd.f32 %v1616, %v2040
        %v2042 = vpop.f32.mrb[0].mxu0
        %v2043 = vadd.f32 %v1618, %v2042
        %2044 = vmatprep.mubr.f32.mxu0 %v477
        %2045 = vmatmul.mubr.f32.gmra.mrb[0].mxu0 %v476
        %v2046 = vpop.f32.mrb[0].mxu0
        %v2047 = vadd.f32 %v1622, %v2046
        %v2048 = vpop.f32.mrb[0].mxu0
        %v2049 = vadd.f32 %v1624, %v2048
        %2050 = vmatprep.mubr.f32.mxu0 %v483
        %2051 = vmatmul.mubr.f32.gmra.mrb[0].mxu0 %v482
        %v2052 = vpop.f32.mrb[0].mxu0
        %v2053 = vadd.f32 %v1628, %v2052
        %v2054 = vpop.f32.mrb[0].mxu0
        %v2055 = vadd.f32 %v1630, %v2054
        %2056 = vmatprep.mubr.f32.mxu0 %v489
        %2057 = vmatmul.mubr.f32.gmra.mrb[0].mxu0 %v488
        %v2058 = vpop.f32.mrb[0].mxu0
        %v2059 = vadd.f32 %v1634, %v2058
        %v2060 = vpop.f32.mrb[0].mxu0
        %v2061 = vadd.f32 %v1636, %v2060
        %2062 = vmatprep.mubr.f32.mxu0 %v495
        %2063 = vmatmul.mubr.f32.gmra.mrb[0].mxu0 %v494
        %v2064 = vpop.f32.mrb[0].mxu0
        %v2065 = vadd.f32 %v1640, %v2064
        %v2066 = vpop.f32.mrb[0].mxu0
        %v2067 = vadd.f32 %v1642, %v2066
        %2068 = vmatprep.mubr.f32.mxu0 %v501
        %2069 = vmatmul.mubr.f32.gmra.mrb[0].mxu0 %v500
        %v2070 = vpop.f32.mrb[0].mxu0
        %v2071 = vadd.f32 %v1646, %v2070
        %v2072 = vpop.f32.mrb[0].mxu0
        %v2073 = vadd.f32 %v1648, %v2072
        %2074 = vmatprep.mubr.f32.mxu0 %v507
        %2075 = vmatmul.mubr.f32.gmra.mrb[0].mxu0 %v506
        %v2076 = vpop.f32.mrb[0].mxu0
        %v2077 = vadd.f32 %v1652, %v2076
        %v2078 = vpop.f32.mrb[0].mxu0
        %v2079 = vadd.f32 %v1654, %v2078
        %2080 = vmatprep.mubr.f32.mxu0 %v513
        %2081 = vmatmul.mubr.f32.gmra.mrb[0].mxu0 %v512
        %v2082 = vpop.f32.mrb[0].mxu0
        %v2083 = vadd.f32 %v1658, %v2082
        %v2084 = vpop.f32.mrb[0].mxu0
        %v2085 = vadd.f32 %v1660, %v2084
        %2086 = vmatprep.mubr.f32.mxu0 %v519
        %2087 = vmatmul.mubr.f32.gmra.mrb[0].mxu0 %v518
        %v2088 = vpop.f32.mrb[0].mxu0
        %v2089 = vadd.f32 %v1664, %v2088
        %v2090 = vpop.f32.mrb[0].mxu0
        %v2091 = vadd.f32 %v1666, %v2090
        %2092 = vmatprep.mubr.f32.mxu0 %v525
        %2093 = vmatmul.mubr.f32.gmra.mrb[0].mxu0 %v524
        %v2094 = vpop.f32.mrb[0].mxu0
        %v2095 = vadd.f32 %v1670, %v2094
        %v2096 = vpop.f32.mrb[0].mxu0
        %v2097 = vadd.f32 %v1672, %v2096
        %2098 = vmatprep.mubr.f32.mxu0 %v531
        %2099 = vmatmul.mubr.f32.gmra.mrb[0].mxu0 %v530
        %v2100 = vpop.f32.mrb[0].mxu0
        %v2101 = vadd.f32 %v1676, %v2100
        %v2102 = vpop.f32.mrb[0].mxu0
        %v2103 = vadd.f32 %v1678, %v2102
        %2104 = vmatprep.mubr.f32.mxu0 %v537
        %2105 = vmatmul.mubr.f32.gmra.mrb[0].mxu0 %v536
        %v2106 = vpop.f32.mrb[0].mxu0
        %v2107 = vadd.f32 %v1682, %v2106
        %v2108 = vpop.f32.mrb[0].mxu0
        %v2109 = vadd.f32 %v1684, %v2108
        %2110 = vmatprep.mubr.f32.mxu0 %v543
        %2111 = vmatmul.mubr.f32.gmra.mrb[0].mxu0 %v542
        %v2112 = vpop.f32.mrb[0].mxu0
        %v2113 = vadd.f32 %v1688, %v2112
        %v2114 = vpop.f32.mrb[0].mxu0
        %v2115 = vadd.f32 %v1690, %v2114
        %2116 = vmatprep.mubr.f32.mxu0 %v549
        %2117 = vmatmul.mubr.f32.gmra.mrb[0].mxu0 %v548
        %v2118 = vpop.f32.mrb[0].mxu0
        %v2119 = vadd.f32 %v1694, %v2118
        %v2120 = vpop.f32.mrb[0].mxu0
        %v2121 = vadd.f32 %v1696, %v2120
        %2122 = vmatprep.mubr.f32.mxu0 %v555
        %2123 = vmatmul.mubr.f32.gmra.mrb[0].mxu0 %v554
        %v2124 = vpop.f32.mrb[0].mxu0
        %v2125 = vadd.f32 %v1700, %v2124
        %v2126 = vpop.f32.mrb[0].mxu0
        %v2127 = vadd.f32 %v1702, %v2126
        %2128 = vmatprep.mubr.f32.mxu0 %v561
        %2129 = vmatmul.mubr.f32.gmra.mrb[0].mxu0 %v560
        %v2130 = vpop.f32.mrb[0].mxu0
        %v2131 = vadd.f32 %v1706, %v2130
        %v2132 = vpop.f32.mrb[0].mxu0
        %v2133 = vadd.f32 %v1708, %v2132
        %2134 = vmatprep.mubr.f32.mxu0 %v567
        %2135 = vmatmul.mubr.f32.gmra.mrb[0].mxu0 %v566
        %v2136 = vpop.f32.mrb[0].mxu0
        %v2137 = vadd.f32 %v1712, %v2136
        %v2138 = vpop.f32.mrb[0].mxu0
        %v2139 = vadd.f32 %v1714, %v2138
        %2140 = vmatprep.mubr.f32.mxu0 %v573
        %2141 = vmatmul.mubr.f32.gmra.mrb[0].mxu0 %v572
        %v2142 = vpop.f32.mrb[0].mxu0
        %v2143 = vadd.f32 %v1718, %v2142
        %v2144 = vpop.f32.mrb[0].mxu0
        %v2145 = vadd.f32 %v1720, %v2144
        %2146 = vmatprep.mubr.f32.mxu0 %v579
        %2147 = vmatmul.mubr.f32.gmra.mrb[0].mxu0 %v578
        %v2148 = vpop.f32.mrb[0].mxu0
        %v2149 = vadd.f32 %v1724, %v2148
        %v2150 = vpop.f32.mrb[0].mxu0
        %v2151 = vadd.f32 %v1726, %v2150
        %2152 = vmatprep.mubr.f32.mxu0 %v585
        %2153 = vmatmul.mubr.f32.gmra.mrb[0].mxu0 %v584
        %v2154 = vpop.f32.mrb[0].mxu0
        %v2155 = vadd.f32 %v1730, %v2154
        %v2156 = vpop.f32.mrb[0].mxu0
        %v2157 = vadd.f32 %v1732, %v2156
        %2158 = vmatprep.mubr.f32.mxu0 %v591
        %2159 = vmatmul.mubr.f32.gmra.mrb[0].mxu0 %v590
        %v2160 = vpop.f32.mrb[0].mxu0
        %v2161 = vadd.f32 %v1736, %v2160
        %v2162 = vpop.f32.mrb[0].mxu0
        %v2163 = vadd.f32 %v1738, %v2162
        %2164 = vmatprep.mubr.f32.mxu0 %v597
        %2165 = vmatmul.mubr.f32.gmra.mrb[0].mxu0 %v596
        %v2166 = vpop.f32.mrb[0].mxu0
        %v2167 = vadd.f32 %v1742, %v2166
        %v2168 = vpop.f32.mrb[0].mxu0
        %v2169 = vadd.f32 %v1744, %v2168
        %2170 = vmatprep.mubr.f32.mxu0 %v603
        %2171 = vmatmul.mubr.f32.gmra.mrb[0].mxu0 %v602
        %v2172 = vpop.f32.mrb[0].mxu0
        %v2173 = vadd.f32 %v1748, %v2172
        %v2174 = vpop.f32.mrb[0].mxu0
        %v2175 = vadd.f32 %v1750, %v2174
        %2176 = vmatprep.mubr.f32.mxu0 %v609
        %2177 = vmatmul.mubr.f32.gmra.mrb[0].mxu0 %v608
        %v2178 = vpop.f32.mrb[0].mxu0
        %v2179 = vadd.f32 %v1754, %v2178
        %v2180 = vpop.f32.mrb[0].mxu0
        %v2181 = vadd.f32 %v1756, %v2180
        %2182 = vmatprep.mubr.f32.mxu0 %v615
        %2183 = vmatmul.mubr.f32.gmra.mrb[0].mxu0 %v614
        %v2184 = vpop.f32.mrb[0].mxu0
        %v2185 = vadd.f32 %v1760, %v2184
        %v2186 = vpop.f32.mrb[0].mxu0
        %v2187 = vadd.f32 %v1762, %v2186
        %2188 = vmatprep.mubr.f32.mxu0 %v621
        %2189 = vmatmul.mubr.f32.gmra.mrb[0].mxu0 %v620
        %v2190 = vpop.f32.mrb[0].mxu0
        %v2191 = vadd.f32 %v1766, %v2190
        %v2192 = vpop.f32.mrb[0].mxu0
        %v2193 = vadd.f32 %v1768, %v2192
        %2194 = vmatprep.mubr.f32.mxu0 %v627
        %2195 = vmatmul.mubr.f32.gmra.mrb[0].mxu0 %v626
        %v2196 = vpop.f32.mrb[0].mxu0
        %v2197 = vadd.f32 %v1772, %v2196
        %v2198 = vpop.f32.mrb[0].mxu0
        %v2199 = vadd.f32 %v1774, %v2198
        %2200 = vmatprep.mubr.f32.mxu0 %v633
        %2201 = vmatmul.mubr.f32.gmra.mrb[0].mxu0 %v632
        %v2202 = vpop.f32.mrb[0].mxu0
        %v2203 = vadd.f32 %v1778, %v2202
        %v2204 = vpop.f32.mrb[0].mxu0
        %v2205 = vadd.f32 %v1780, %v2204
        %2206 = vmatprep.mubr.f32.mxu0 %v639
        %2207 = vmatmul.mubr.f32.gmra.mrb[0].mxu0 %v638
        %v2208 = vpop.f32.mrb[0].mxu0
        %v2209 = vadd.f32 %v1784, %v2208
        %v2210 = vpop.f32.mrb[0].mxu0
        %v2211 = vadd.f32 %v1786, %v2210
        %2212 = vmatprep.mubr.f32.mxu0 %v645
        %2213 = vmatmul.mubr.f32.gmra.mrb[0].mxu0 %v644
        %v2214 = vpop.f32.mrb[0].mxu0
        %v2215 = vadd.f32 %v1790, %v2214
        %v2216 = vpop.f32.mrb[0].mxu0
        %v2217 = vadd.f32 %v1792, %v2216
        %2218 = vmatprep.mubr.f32.mxu0 %v651
        %2219 = vmatmul.mubr.f32.gmra.mrb[0].mxu0 %v650
        %v2220 = vpop.f32.mrb[0].mxu0
        %v2221 = vadd.f32 %v1796, %v2220
        %v2222 = vpop.f32.mrb[0].mxu0
        %v2223 = vadd.f32 %v1798, %v2222
        %2224 = vmatprep.mubr.f32.mxu0 %v657
        %2225 = vmatmul.mubr.f32.gmra.mrb[0].mxu0 %v656
        %v2226 = vpop.f32.mrb[0].mxu0
        %v2227 = vadd.f32 %v1802, %v2226
        %v2228 = vpop.f32.mrb[0].mxu0
        %v2229 = vadd.f32 %v1804, %v2228
        %2230 = vmatprep.mubr.f32.mxu0 %v663
        %2231 = vmatmul.mubr.f32.gmra.mrb[0].mxu0 %v662
        %v2232 = vpop.f32.mrb[0].mxu0
        %v2233 = vadd.f32 %v1808, %v2232
        %v2234 = vpop.f32.mrb[0].mxu0
        %v2235 = vadd.f32 %v1810, %v2234
        %2236 = vmatprep.mubr.f32.mxu0 %v669
        %2237 = vmatmul.mubr.f32.gmra.mrb[0].mxu0 %v668
        %v2238 = vpop.f32.mrb[0].mxu0
        %v2239 = vadd.f32 %v1814, %v2238
        %v2240 = vpop.f32.mrb[0].mxu0
        %v2241 = vadd.f32 %v1816, %v2240
        %2242 = vmatprep.mubr.f32.mxu0 %v675
        %2243 = vmatmul.mubr.f32.gmra.mrb[0].mxu0 %v674
        %v2244 = vpop.f32.mrb[0].mxu0
        %v2245 = vadd.f32 %v1820, %v2244
        %v2246 = vpop.f32.mrb[0].mxu0
        %v2247 = vadd.f32 %v1822, %v2246
        %2248 = vmatprep.mubr.f32.mxu0 %v681
        %2249 = vmatmul.mubr.f32.gmra.mrb[0].mxu0 %v680
        %v2250 = vpop.f32.mrb[0].mxu0
        %v2251 = vadd.f32 %v1826, %v2250
        %v2252 = vpop.f32.mrb[0].mxu0
        %v2253 = vadd.f32 %v1828, %v2252
        %2254 = vmatprep.mubr.f32.mxu0 %v687
        %2255 = vmatmul.mubr.f32.gmra.mrb[0].mxu0 %v686
        %v2256 = vpop.f32.mrb[0].mxu0
        %v2257 = vadd.f32 %v1832, %v2256
        %v2258 = vpop.f32.mrb[0].mxu0
        %v2259 = vadd.f32 %v1834, %v2258
        %2260 = vdwg.mxu0
        %2261 = vmatprep.subr.mxu0 %v819
        %2262 = vmatpush1.msra.mxu0 %v818
        %2263 = vmatprep.subr.mxu0 %v821
        %2264 = vmatpush1.msra.mxu0 %v820
        %2265 = vmatprep.subr.mxu0 %v823
        %2266 = vmatpush1.msra.mxu0 %v822
        %2267 = vmatprep.subr.mxu0 %v825
        %2268 = vmatpush1.msra.mxu0 %v824
        %2269 = vmatprep.subr.mxu0 %v827
        %2270 = vmatpush1.msra.mxu0 %v826
        %2271 = vmatprep.subr.mxu0 %v829
        %2272 = vmatpush1.msra.mxu0 %v828
        %2273 = vmatprep.subr.mxu0 %v831
        %2274 = vmatpush1.msra.mxu0 %v830
        %2275 = vmatprep.subr.mxu0 %v833
        %2276 = vmatpush1.msra.mxu0 %v832
        %2277 = vmatprep.subr.mxu0 %v835
        %2278 = vmatpush1.msra.mxu0 %v834
        %2279 = vmatprep.subr.mxu0 %v837
        %2280 = vmatpush1.msra.mxu0 %v836
        %2281 = vmatprep.subr.mxu0 %v839
        %2282 = vmatpush1.msra.mxu0 %v838
        %2283 = vmatprep.subr.mxu0 %v841
        %2284 = vmatpush1.msra.mxu0 %v840
        %2285 = vmatprep.subr.mxu0 %v843
        %2286 = vmatpush1.msra.mxu0 %v842
        %2287 = vmatprep.subr.mxu0 %v845
        %2288 = vmatpush1.msra.mxu0 %v844
        %2289 = vmatprep.subr.mxu0 %v847
        %2290 = vmatpush1.msra.mxu0 %v846
        %2291 = vmatprep.subr.mxu0 %v849
        %2292 = vmatpush1.msra.mxu0 %v848
        %2293 = vmatprep.subr.mxu0 %v851
        %2294 = vmatpush1.msra.mxu0 %v850
        %2295 = vmatprep.subr.mxu0 %v853
        %2296 = vmatpush1.msra.mxu0 %v852
        %2297 = vmatprep.subr.mxu0 %v855
        %2298 = vmatpush1.msra.mxu0 %v854
        %2299 = vmatprep.subr.mxu0 %v857
        %2300 = vmatpush1.msra.mxu0 %v856
        %2301 = vmatprep.subr.mxu0 %v859
        %2302 = vmatpush1.msra.mxu0 %v858
        %2303 = vmatprep.subr.mxu0 %v861
        %2304 = vmatpush1.msra.mxu0 %v860
        %2305 = vmatprep.subr.mxu0 %v863
        %2306 = vmatpush1.msra.mxu0 %v862
        %2307 = vmatprep.subr.mxu0 %v865
        %2308 = vmatpush1.msra.mxu0 %v864
        %2309 = vmatprep.subr.mxu0 %v867
        %2310 = vmatpush1.msra.mxu0 %v866
        %2311 = vmatprep.subr.mxu0 %v869
        %2312 = vmatpush1.msra.mxu0 %v868
        %2313 = vmatprep.subr.mxu0 0.0
        %2314 = vmatpush1.msra.mxu0 0.0
        %2315 = vmatprep.subr.mxu0 0.0
        %2316 = vmatpush1.msra.mxu0 0.0
        %2317 = vmatprep.subr.mxu0 0.0
        %2318 = vmatpush1.msra.mxu0 0.0
        %2319 = vmatprep.subr.mxu0 0.0
        %2320 = vmatpush1.msra.mxu0 0.0
        %2321 = vmatprep.subr.mxu0 0.0
        %2322 = vmatpush1.msra.mxu0 0.0
        %2323 = vmatprep.subr.mxu0 0.0
        %2324 = vmatpush1.msra.mxu0 0.0
        %2325 = vmatprep.mubr.f32.mxu0 %v1232
        %2326 = vmatmul.mubr.f32.gmra.mrb[0].mxu0 %v334
        %v2327 = vpop.f32.mrb[0].mxu0
        %v2328 = vadd.f32 %v1903, %v2327
        %v2329 = vpop.f32.mrb[0].mxu0
        %v2330 = vadd.f32 %v1905, %v2329
        %2331 = vmatprep.mubr.f32.mxu0 %v1235
        %2332 = vmatmul.mubr.f32.gmra.mrb[0].mxu0 %v340
        %v2333 = vpop.f32.mrb[0].mxu0
        %v2334 = vadd.f32 %v1909, %v2333
        %v2335 = vpop.f32.mrb[0].mxu0
        %v2336 = vadd.f32 %v1911, %v2335
        %2337 = vmatprep.mubr.f32.mxu0 %v1238
        %2338 = vmatmul.mubr.f32.gmra.mrb[0].mxu0 %v346
        %v2339 = vpop.f32.mrb[0].mxu0
        %v2340 = vadd.f32 %v1915, %v2339
        %v2341 = vpop.f32.mrb[0].mxu0
        %v2342 = vadd.f32 %v1917, %v2341
        %2343 = vmatprep.mubr.f32.mxu0 %v1241
        %2344 = vmatmul.mubr.f32.gmra.mrb[0].mxu0 %v352
        %v2345 = vpop.f32.mrb[0].mxu0
        %v2346 = vadd.f32 %v1921, %v2345
        %v2347 = vpop.f32.mrb[0].mxu0
        %v2348 = vadd.f32 %v1923, %v2347
        %2349 = vmatprep.mubr.f32.mxu0 %v1244
        %2350 = vmatmul.mubr.f32.gmra.mrb[0].mxu0 %v358
        %v2351 = vpop.f32.mrb[0].mxu0
        %v2352 = vadd.f32 %v1927, %v2351
        %v2353 = vpop.f32.mrb[0].mxu0
        %v2354 = vadd.f32 %v1929, %v2353
        %2355 = vmatprep.mubr.f32.mxu0 %v1247
        %2356 = vmatmul.mubr.f32.gmra.mrb[0].mxu0 %v364
        %v2357 = vpop.f32.mrb[0].mxu0
        %v2358 = vadd.f32 %v1933, %v2357
        %v2359 = vpop.f32.mrb[0].mxu0
        %v2360 = vadd.f32 %v1935, %v2359
        %2361 = vmatprep.mubr.f32.mxu0 %v1250
        %2362 = vmatmul.mubr.f32.gmra.mrb[0].mxu0 %v370
        %v2363 = vpop.f32.mrb[0].mxu0
        %v2364 = vadd.f32 %v1939, %v2363
        %v2365 = vpop.f32.mrb[0].mxu0
        %v2366 = vadd.f32 %v1941, %v2365
        %2367 = vmatprep.mubr.f32.mxu0 %v1253
        %2368 = vmatmul.mubr.f32.gmra.mrb[0].mxu0 %v376
        %v2369 = vpop.f32.mrb[0].mxu0
        %v2370 = vadd.f32 %v1945, %v2369
        %v2371 = vpop.f32.mrb[0].mxu0
        %v2372 = vadd.f32 %v1947, %v2371
        %2373 = vmatprep.mubr.f32.mxu0 %v1256
        %2374 = vmatmul.mubr.f32.gmra.mrb[0].mxu0 %v382
        %v2375 = vpop.f32.mrb[0].mxu0
        %v2376 = vadd.f32 %v1951, %v2375
        %v2377 = vpop.f32.mrb[0].mxu0
        %v2378 = vadd.f32 %v1953, %v2377
        %2379 = vmatprep.mubr.f32.mxu0 %v1259
        %2380 = vmatmul.mubr.f32.gmra.mrb[0].mxu0 %v388
        %v2381 = vpop.f32.mrb[0].mxu0
        %v2382 = vadd.f32 %v1957, %v2381
        %v2383 = vpop.f32.mrb[0].mxu0
        %v2384 = vadd.f32 %v1959, %v2383
        %2385 = vmatprep.mubr.f32.mxu0 %v1262
        %2386 = vmatmul.mubr.f32.gmra.mrb[0].mxu0 %v394
        %v2387 = vpop.f32.mrb[0].mxu0
        %v2388 = vadd.f32 %v1963, %v2387
        %v2389 = vpop.f32.mrb[0].mxu0
        %v2390 = vadd.f32 %v1965, %v2389
        %2391 = vmatprep.mubr.f32.mxu0 %v1265
        %2392 = vmatmul.mubr.f32.gmra.mrb[0].mxu0 %v400
        %v2393 = vpop.f32.mrb[0].mxu0
        %v2394 = vadd.f32 %v1969, %v2393
        %v2395 = vpop.f32.mrb[0].mxu0
        %v2396 = vadd.f32 %v1971, %v2395
        %2397 = vmatprep.mubr.f32.mxu0 %v1268
        %2398 = vmatmul.mubr.f32.gmra.mrb[0].mxu0 %v406
        %v2399 = vpop.f32.mrb[0].mxu0
        %v2400 = vadd.f32 %v1975, %v2399
        %v2401 = vpop.f32.mrb[0].mxu0
        %v2402 = vadd.f32 %v1977, %v2401
        %2403 = vmatprep.mubr.f32.mxu0 %v1271
        %2404 = vmatmul.mubr.f32.gmra.mrb[0].mxu0 %v412
        %v2405 = vpop.f32.mrb[0].mxu0
        %v2406 = vadd.f32 %v1981, %v2405
        %v2407 = vpop.f32.mrb[0].mxu0
        %v2408 = vadd.f32 %v1983, %v2407
        %2409 = vmatprep.mubr.f32.mxu0 %v1274
        %2410 = vmatmul.mubr.f32.gmra.mrb[0].mxu0 %v418
        %v2411 = vpop.f32.mrb[0].mxu0
        %v2412 = vadd.f32 %v1987, %v2411
        %v2413 = vpop.f32.mrb[0].mxu0
        %v2414 = vadd.f32 %v1989, %v2413
        %2415 = vmatprep.mubr.f32.mxu0 %v1277
        %2416 = vmatmul.mubr.f32.gmra.mrb[0].mxu0 %v424
        %v2417 = vpop.f32.mrb[0].mxu0
        %v2418 = vadd.f32 %v1993, %v2417
        %v2419 = vpop.f32.mrb[0].mxu0
        %v2420 = vadd.f32 %v1995, %v2419
        %2421 = vmatprep.mubr.f32.mxu0 %v1280
        %2422 = vmatmul.mubr.f32.gmra.mrb[0].mxu0 %v430
        %v2423 = vpop.f32.mrb[0].mxu0
        %v2424 = vadd.f32 %v1999, %v2423
        %v2425 = vpop.f32.mrb[0].mxu0
        %v2426 = vadd.f32 %v2001, %v2425
        %2427 = vmatprep.mubr.f32.mxu0 %v1283
        %2428 = vmatmul.mubr.f32.gmra.mrb[0].mxu0 %v436
        %v2429 = vpop.f32.mrb[0].mxu0
        %v2430 = vadd.f32 %v2005, %v2429
        %v2431 = vpop.f32.mrb[0].mxu0
        %v2432 = vadd.f32 %v2007, %v2431
        %2433 = vmatprep.mubr.f32.mxu0 %v1286
        %2434 = vmatmul.mubr.f32.gmra.mrb[0].mxu0 %v442
        %v2435 = vpop.f32.mrb[0].mxu0
        %v2436 = vadd.f32 %v2011, %v2435
        %v2437 = vpop.f32.mrb[0].mxu0
        %v2438 = vadd.f32 %v2013, %v2437
        %2439 = vmatprep.mubr.f32.mxu0 %v1289
        %2440 = vmatmul.mubr.f32.gmra.mrb[0].mxu0 %v448
        %v2441 = vpop.f32.mrb[0].mxu0
        %v2442 = vadd.f32 %v2017, %v2441
        %v2443 = vpop.f32.mrb[0].mxu0
        %v2444 = vadd.f32 %v2019, %v2443
        %2445 = vmatprep.mubr.f32.mxu0 %v1292
        %2446 = vmatmul.mubr.f32.gmra.mrb[0].mxu0 %v454
        %v2447 = vpop.f32.mrb[0].mxu0
        %v2448 = vadd.f32 %v2023, %v2447
        %v2449 = vpop.f32.mrb[0].mxu0
        %v2450 = vadd.f32 %v2025, %v2449
        %2451 = vmatprep.mubr.f32.mxu0 %v1295
        %2452 = vmatmul.mubr.f32.gmra.mrb[0].mxu0 %v460
        %v2453 = vpop.f32.mrb[0].mxu0
        %v2454 = vadd.f32 %v2029, %v2453
        %v2455 = vpop.f32.mrb[0].mxu0
        %v2456 = vadd.f32 %v2031, %v2455
        %2457 = vmatprep.mubr.f32.mxu0 %v1298
        %2458 = vmatmul.mubr.f32.gmra.mrb[0].mxu0 %v466
        %v2459 = vpop.f32.mrb[0].mxu0
        %v2460 = vadd.f32 %v2035, %v2459
        %v2461 = vpop.f32.mrb[0].mxu0
        %v2462 = vadd.f32 %v2037, %v2461
        %2463 = vmatprep.mubr.f32.mxu0 %v1301
        %2464 = vmatmul.mubr.f32.gmra.mrb[0].mxu0 %v472
        %v2465 = vpop.f32.mrb[0].mxu0
        %v2466 = vadd.f32 %v2041, %v2465
        %v2467 = vpop.f32.mrb[0].mxu0
        %v2468 = vadd.f32 %v2043, %v2467
        %2469 = vmatprep.mubr.f32.mxu0 %v1304
        %2470 = vmatmul.mubr.f32.gmra.mrb[0].mxu0 %v478
        %v2471 = vpop.f32.mrb[0].mxu0
        %v2472 = vadd.f32 %v2047, %v2471
        %v2473 = vpop.f32.mrb[0].mxu0
        %v2474 = vadd.f32 %v2049, %v2473
        %2475 = vmatprep.mubr.f32.mxu0 %v1307
        %2476 = vmatmul.mubr.f32.gmra.mrb[0].mxu0 %v484
        %v2477 = vpop.f32.mrb[0].mxu0
        %v2478 = vadd.f32 %v2053, %v2477
        %v2479 = vpop.f32.mrb[0].mxu0
        %v2480 = vadd.f32 %v2055, %v2479
        %2481 = vmatprep.mubr.f32.mxu0 %v1310
        %2482 = vmatmul.mubr.f32.gmra.mrb[0].mxu0 %v490
        %v2483 = vpop.f32.mrb[0].mxu0
        %v2484 = vadd.f32 %v2059, %v2483
        %v2485 = vpop.f32.mrb[0].mxu0
        %v2486 = vadd.f32 %v2061, %v2485
        %2487 = vmatprep.mubr.f32.mxu0 %v1313
        %2488 = vmatmul.mubr.f32.gmra.mrb[0].mxu0 %v496
        %v2489 = vpop.f32.mrb[0].mxu0
        %v2490 = vadd.f32 %v2065, %v2489
        %v2491 = vpop.f32.mrb[0].mxu0
        %v2492 = vadd.f32 %v2067, %v2491
        %2493 = vmatprep.mubr.f32.mxu0 %v1316
        %2494 = vmatmul.mubr.f32.gmra.mrb[0].mxu0 %v502
        %v2495 = vpop.f32.mrb[0].mxu0
        %v2496 = vadd.f32 %v2071, %v2495
        %v2497 = vpop.f32.mrb[0].mxu0
        %v2498 = vadd.f32 %v2073, %v2497
        %2499 = vmatprep.mubr.f32.mxu0 %v1319
        %2500 = vmatmul.mubr.f32.gmra.mrb[0].mxu0 %v508
        %v2501 = vpop.f32.mrb[0].mxu0
        %v2502 = vadd.f32 %v2077, %v2501
        %v2503 = vpop.f32.mrb[0].mxu0
        %v2504 = vadd.f32 %v2079, %v2503
        %2505 = vmatprep.mubr.f32.mxu0 %v1322
        %2506 = vmatmul.mubr.f32.gmra.mrb[0].mxu0 %v514
        %v2507 = vpop.f32.mrb[0].mxu0
        %v2508 = vadd.f32 %v2083, %v2507
        %v2509 = vpop.f32.mrb[0].mxu0
        %v2510 = vadd.f32 %v2085, %v2509
        %2511 = vmatprep.mubr.f32.mxu0 %v1325
        %2512 = vmatmul.mubr.f32.gmra.mrb[0].mxu0 %v520
        %v2513 = vpop.f32.mrb[0].mxu0
        %v2514 = vadd.f32 %v2089, %v2513
        %v2515 = vpop.f32.mrb[0].mxu0
        %v2516 = vadd.f32 %v2091, %v2515
        %2517 = vmatprep.mubr.f32.mxu0 %v1328
        %2518 = vmatmul.mubr.f32.gmra.mrb[0].mxu0 %v526
        %v2519 = vpop.f32.mrb[0].mxu0
        %v2520 = vadd.f32 %v2095, %v2519
        %v2521 = vpop.f32.mrb[0].mxu0
        %v2522 = vadd.f32 %v2097, %v2521
        %2523 = vmatprep.mubr.f32.mxu0 %v1331
        %2524 = vmatmul.mubr.f32.gmra.mrb[0].mxu0 %v532
        %v2525 = vpop.f32.mrb[0].mxu0
        %v2526 = vadd.f32 %v2101, %v2525
        %v2527 = vpop.f32.mrb[0].mxu0
        %v2528 = vadd.f32 %v2103, %v2527
        %2529 = vmatprep.mubr.f32.mxu0 %v1334
        %2530 = vmatmul.mubr.f32.gmra.mrb[0].mxu0 %v538
        %v2531 = vpop.f32.mrb[0].mxu0
        %v2532 = vadd.f32 %v2107, %v2531
        %v2533 = vpop.f32.mrb[0].mxu0
        %v2534 = vadd.f32 %v2109, %v2533
        %2535 = vmatprep.mubr.f32.mxu0 %v1337
        %2536 = vmatmul.mubr.f32.gmra.mrb[0].mxu0 %v544
        %v2537 = vpop.f32.mrb[0].mxu0
        %v2538 = vadd.f32 %v2113, %v2537
        %v2539 = vpop.f32.mrb[0].mxu0
        %v2540 = vadd.f32 %v2115, %v2539
        %2541 = vmatprep.mubr.f32.mxu0 %v1340
        %2542 = vmatmul.mubr.f32.gmra.mrb[0].mxu0 %v550
        %v2543 = vpop.f32.mrb[0].mxu0
        %v2544 = vadd.f32 %v2119, %v2543
        %v2545 = vpop.f32.mrb[0].mxu0
        %v2546 = vadd.f32 %v2121, %v2545
        %2547 = vmatprep.mubr.f32.mxu0 %v1343
        %2548 = vmatmul.mubr.f32.gmra.mrb[0].mxu0 %v556
        %v2549 = vpop.f32.mrb[0].mxu0
        %v2550 = vadd.f32 %v2125, %v2549
        %v2551 = vpop.f32.mrb[0].mxu0
        %v2552 = vadd.f32 %v2127, %v2551
        %2553 = vmatprep.mubr.f32.mxu0 %v1346
        %2554 = vmatmul.mubr.f32.gmra.mrb[0].mxu0 %v562
        %v2555 = vpop.f32.mrb[0].mxu0
        %v2556 = vadd.f32 %v2131, %v2555
        %v2557 = vpop.f32.mrb[0].mxu0
        %v2558 = vadd.f32 %v2133, %v2557
        %2559 = vmatprep.mubr.f32.mxu0 %v1349
        %2560 = vmatmul.mubr.f32.gmra.mrb[0].mxu0 %v568
        %v2561 = vpop.f32.mrb[0].mxu0
        %v2562 = vadd.f32 %v2137, %v2561
        %v2563 = vpop.f32.mrb[0].mxu0
        %v2564 = vadd.f32 %v2139, %v2563
        %2565 = vmatprep.mubr.f32.mxu0 %v1352
        %2566 = vmatmul.mubr.f32.gmra.mrb[0].mxu0 %v574
        %v2567 = vpop.f32.mrb[0].mxu0
        %v2568 = vadd.f32 %v2143, %v2567
        %v2569 = vpop.f32.mrb[0].mxu0
        %v2570 = vadd.f32 %v2145, %v2569
        %2571 = vmatprep.mubr.f32.mxu0 %v1355
        %2572 = vmatmul.mubr.f32.gmra.mrb[0].mxu0 %v580
        %v2573 = vpop.f32.mrb[0].mxu0
        %v2574 = vadd.f32 %v2149, %v2573
        %v2575 = vpop.f32.mrb[0].mxu0
        %v2576 = vadd.f32 %v2151, %v2575
        %2577 = vmatprep.mubr.f32.mxu0 %v1358
        %2578 = vmatmul.mubr.f32.gmra.mrb[0].mxu0 %v586
        %v2579 = vpop.f32.mrb[0].mxu0
        %v2580 = vadd.f32 %v2155, %v2579
        %v2581 = vpop.f32.mrb[0].mxu0
        %v2582 = vadd.f32 %v2157, %v2581
        %2583 = vmatprep.mubr.f32.mxu0 %v1361
        %2584 = vmatmul.mubr.f32.gmra.mrb[0].mxu0 %v592
        %v2585 = vpop.f32.mrb[0].mxu0
        %v2586 = vadd.f32 %v2161, %v2585
        %v2587 = vpop.f32.mrb[0].mxu0
        %v2588 = vadd.f32 %v2163, %v2587
        %2589 = vmatprep.mubr.f32.mxu0 %v1364
        %2590 = vmatmul.mubr.f32.gmra.mrb[0].mxu0 %v598
        %v2591 = vpop.f32.mrb[0].mxu0
        %v2592 = vadd.f32 %v2167, %v2591
        %v2593 = vpop.f32.mrb[0].mxu0
        %v2594 = vadd.f32 %v2169, %v2593
        %2595 = vmatprep.mubr.f32.mxu0 %v1367
        %2596 = vmatmul.mubr.f32.gmra.mrb[0].mxu0 %v604
        %v2597 = vpop.f32.mrb[0].mxu0
        %v2598 = vadd.f32 %v2173, %v2597
        %v2599 = vpop.f32.mrb[0].mxu0
        %v2600 = vadd.f32 %v2175, %v2599
        %2601 = vmatprep.mubr.f32.mxu0 %v1370
        %2602 = vmatmul.mubr.f32.gmra.mrb[0].mxu0 %v610
        %v2603 = vpop.f32.mrb[0].mxu0
        %v2604 = vadd.f32 %v2179, %v2603
        %v2605 = vpop.f32.mrb[0].mxu0
        %v2606 = vadd.f32 %v2181, %v2605
        %2607 = vmatprep.mubr.f32.mxu0 %v1373
        %2608 = vmatmul.mubr.f32.gmra.mrb[0].mxu0 %v616
        %v2609 = vpop.f32.mrb[0].mxu0
        %v2610 = vadd.f32 %v2185, %v2609
        %v2611 = vpop.f32.mrb[0].mxu0
        %v2612 = vadd.f32 %v2187, %v2611
        %2613 = vmatprep.mubr.f32.mxu0 %v1376
        %2614 = vmatmul.mubr.f32.gmra.mrb[0].mxu0 %v622
        %v2615 = vpop.f32.mrb[0].mxu0
        %v2616 = vadd.f32 %v2191, %v2615
        %v2617 = vpop.f32.mrb[0].mxu0
        %v2618 = vadd.f32 %v2193, %v2617
        %2619 = vmatprep.mubr.f32.mxu0 %v1379
        %2620 = vmatmul.mubr.f32.gmra.mrb[0].mxu0 %v628
        %v2621 = vpop.f32.mrb[0].mxu0
        %v2622 = vadd.f32 %v2197, %v2621
        %v2623 = vpop.f32.mrb[0].mxu0
        %v2624 = vadd.f32 %v2199, %v2623
        %2625 = vmatprep.mubr.f32.mxu0 %v1382
        %2626 = vmatmul.mubr.f32.gmra.mrb[0].mxu0 %v634
        %v2627 = vpop.f32.mrb[0].mxu0
        %v2628 = vadd.f32 %v2203, %v2627
        %v2629 = vpop.f32.mrb[0].mxu0
        %v2630 = vadd.f32 %v2205, %v2629
        %2631 = vmatprep.mubr.f32.mxu0 %v1385
        %2632 = vmatmul.mubr.f32.gmra.mrb[0].mxu0 %v640
        %v2633 = vpop.f32.mrb[0].mxu0
        %v2634 = vadd.f32 %v2209, %v2633
        %v2635 = vpop.f32.mrb[0].mxu0
        %v2636 = vadd.f32 %v2211, %v2635
        %2637 = vmatprep.mubr.f32.mxu0 %v1388
        %2638 = vmatmul.mubr.f32.gmra.mrb[0].mxu0 %v646
        %v2639 = vpop.f32.mrb[0].mxu0
        %v2640 = vadd.f32 %v2215, %v2639
        %v2641 = vpop.f32.mrb[0].mxu0
        %v2642 = vadd.f32 %v2217, %v2641
        %2643 = vmatprep.mubr.f32.mxu0 %v1391
        %2644 = vmatmul.mubr.f32.gmra.mrb[0].mxu0 %v652
        %v2645 = vpop.f32.mrb[0].mxu0
        %v2646 = vadd.f32 %v2221, %v2645
        %v2647 = vpop.f32.mrb[0].mxu0
        %v2648 = vadd.f32 %v2223, %v2647
        %2649 = vmatprep.mubr.f32.mxu0 %v1394
        %2650 = vmatmul.mubr.f32.gmra.mrb[0].mxu0 %v658
        %v2651 = vpop.f32.mrb[0].mxu0
        %v2652 = vadd.f32 %v2227, %v2651
        %v2653 = vpop.f32.mrb[0].mxu0
        %v2654 = vadd.f32 %v2229, %v2653
        %2655 = vmatprep.mubr.f32.mxu0 %v1397
        %2656 = vmatmul.mubr.f32.gmra.mrb[0].mxu0 %v664
        %v2657 = vpop.f32.mrb[0].mxu0
        %v2658 = vadd.f32 %v2233, %v2657
        %v2659 = vpop.f32.mrb[0].mxu0
        %v2660 = vadd.f32 %v2235, %v2659
        %2661 = vmatprep.mubr.f32.mxu0 %v1400
        %2662 = vmatmul.mubr.f32.gmra.mrb[0].mxu0 %v670
        %v2663 = vpop.f32.mrb[0].mxu0
        %v2664 = vadd.f32 %v2239, %v2663
        %v2665 = vpop.f32.mrb[0].mxu0
        %v2666 = vadd.f32 %v2241, %v2665
        %2667 = vmatprep.mubr.f32.mxu0 %v1403
        %2668 = vmatmul.mubr.f32.gmra.mrb[0].mxu0 %v676
        %v2669 = vpop.f32.mrb[0].mxu0
        %v2670 = vadd.f32 %v2245, %v2669
        %v2671 = vpop.f32.mrb[0].mxu0
        %v2672 = vadd.f32 %v2247, %v2671
        %2673 = vmatprep.mubr.f32.mxu0 %v1406
        %2674 = vmatmul.mubr.f32.gmra.mrb[0].mxu0 %v682
        %v2675 = vpop.f32.mrb[0].mxu0
        %v2676 = vadd.f32 %v2251, %v2675
        %v2677 = vpop.f32.mrb[0].mxu0
        %v2678 = vadd.f32 %v2253, %v2677
        %2679 = vmatprep.mubr.f32.mxu0 %v1409
        %2680 = vmatmul.mubr.f32.gmra.mrb[0].mxu0 %v688
        %v2681 = vpop.f32.mrb[0].mxu0
        %v2682 = vadd.f32 %v2257, %v2681
        %v2683 = vpop.f32.mrb[0].mxu0
        %v2684 = vadd.f32 %v2259, %v2683
        %2685 = vdwg.mxu0
        %v2686 = vmax.f32 %v2328, 0.0
        %v2687 = vmax.f32 %v2330, 0.0
        %v2688 = vmax.f32 %v2334, 0.0
        %v2689 = vmax.f32 %v2336, 0.0
        %v2690 = vmax.f32 %v2340, 0.0
        %v2691 = vmax.f32 %v2342, 0.0
        %v2692 = vmax.f32 %v2346, 0.0
        %v2693 = vmax.f32 %v2348, 0.0
        %v2694 = vmax.f32 %v2352, 0.0
        %v2695 = vmax.f32 %v2354, 0.0
        %v2696 = vmax.f32 %v2358, 0.0
        %v2697 = vmax.f32 %v2360, 0.0
        %v2698 = vmax.f32 %v2364, 0.0
        %v2699 = vmax.f32 %v2366, 0.0
        %v2700 = vmax.f32 %v2370, 0.0
        %v2701 = vmax.f32 %v2372, 0.0
        %v2702 = vmax.f32 %v2376, 0.0
        %v2703 = vmax.f32 %v2378, 0.0
        %v2704 = vmax.f32 %v2382, 0.0
        %v2705 = vmax.f32 %v2384, 0.0
        %v2706 = vmax.f32 %v2388, 0.0
        %v2707 = vmax.f32 %v2390, 0.0
        %v2708 = vmax.f32 %v2394, 0.0
        %v2709 = vmax.f32 %v2396, 0.0
        %v2710 = vmax.f32 %v2400, 0.0
        %v2711 = vmax.f32 %v2402, 0.0
        %v2712 = vmax.f32 %v2406, 0.0
        %v2713 = vmax.f32 %v2408, 0.0
        %v2714 = vmax.f32 %v2412, 0.0
        %v2715 = vmax.f32 %v2414, 0.0
        %v2716 = vmax.f32 %v2418, 0.0
        %v2717 = vmax.f32 %v2420, 0.0
        %v2718 = vmax.f32 %v2424, 0.0
        %v2719 = vmax.f32 %v2426, 0.0
        %v2720 = vmax.f32 %v2430, 0.0
        %v2721 = vmax.f32 %v2432, 0.0
        %v2722 = vmax.f32 %v2436, 0.0
        %v2723 = vmax.f32 %v2438, 0.0
        %v2724 = vmax.f32 %v2442, 0.0
        %v2725 = vmax.f32 %v2444, 0.0
        %v2726 = vmax.f32 %v2448, 0.0
        %v2727 = vmax.f32 %v2450, 0.0
        %v2728 = vmax.f32 %v2454, 0.0
        %v2729 = vmax.f32 %v2456, 0.0
        %v2730 = vmax.f32 %v2460, 0.0
        %v2731 = vmax.f32 %v2462, 0.0
        %v2732 = vmax.f32 %v2466, 0.0
        %v2733 = vmax.f32 %v2468, 0.0
        %v2734 = vmax.f32 %v2472, 0.0
        %v2735 = vmax.f32 %v2474, 0.0
        %v2736 = vmax.f32 %v2478, 0.0
        %v2737 = vmax.f32 %v2480, 0.0
        %v2738 = vmax.f32 %v2484, 0.0
        %v2739 = vmax.f32 %v2486, 0.0
        %v2740 = vmax.f32 %v2490, 0.0
        %v2741 = vmax.f32 %v2492, 0.0
        %v2742 = vmax.f32 %v2496, 0.0
        %v2743 = vmax.f32 %v2498, 0.0
        %v2744 = vmax.f32 %v2502, 0.0
        %v2745 = vmax.f32 %v2504, 0.0
        %v2746 = vmax.f32 %v2508, 0.0
        %v2747 = vmax.f32 %v2510, 0.0
        %v2748 = vmax.f32 %v2514, 0.0
        %v2749 = vmax.f32 %v2516, 0.0
        %v2750 = vmax.f32 %v2520, 0.0
        %v2751 = vmax.f32 %v2522, 0.0
        %v2752 = vmax.f32 %v2526, 0.0
        %v2753 = vmax.f32 %v2528, 0.0
        %v2754 = vmax.f32 %v2532, 0.0
        %v2755 = vmax.f32 %v2534, 0.0
        %v2756 = vmax.f32 %v2538, 0.0
        %v2757 = vmax.f32 %v2540, 0.0
        %v2758 = vmax.f32 %v2544, 0.0
        %v2759 = vmax.f32 %v2546, 0.0
        %v2760 = vmax.f32 %v2550, 0.0
        %v2761 = vmax.f32 %v2552, 0.0
        %v2762 = vmax.f32 %v2556, 0.0
        %v2763 = vmax.f32 %v2558, 0.0
        %v2764 = vmax.f32 %v2562, 0.0
        %v2765 = vmax.f32 %v2564, 0.0
        %v2766 = vmax.f32 %v2568, 0.0
        %v2767 = vmax.f32 %v2570, 0.0
        %v2768 = vmax.f32 %v2574, 0.0
        %v2769 = vmax.f32 %v2576, 0.0
        %v2770 = vmax.f32 %v2580, 0.0
        %v2771 = vmax.f32 %v2582, 0.0
        %v2772 = vmax.f32 %v2586, 0.0
        %v2773 = vmax.f32 %v2588, 0.0
        %v2774 = vmax.f32 %v2592, 0.0
        %v2775 = vmax.f32 %v2594, 0.0
        %v2776 = vmax.f32 %v2598, 0.0
        %v2777 = vmax.f32 %v2600, 0.0
        %v2778 = vmax.f32 %v2604, 0.0
        %v2779 = vmax.f32 %v2606, 0.0
        %v2780 = vmax.f32 %v2610, 0.0
        %v2781 = vmax.f32 %v2612, 0.0
        %v2782 = vmax.f32 %v2616, 0.0
        %v2783 = vmax.f32 %v2618, 0.0
        %v2784 = vmax.f32 %v2622, 0.0
        %v2785 = vmax.f32 %v2624, 0.0
        %v2786 = vmax.f32 %v2628, 0.0
        %v2787 = vmax.f32 %v2630, 0.0
        %v2788 = vmax.f32 %v2634, 0.0
        %v2789 = vmax.f32 %v2636, 0.0
        %v2790 = vmax.f32 %v2640, 0.0
        %v2791 = vmax.f32 %v2642, 0.0
        %v2792 = vmax.f32 %v2646, 0.0
        %v2793 = vmax.f32 %v2648, 0.0
        %v2794 = vmax.f32 %v2652, 0.0
        %v2795 = vmax.f32 %v2654, 0.0
        %v2796 = vmax.f32 %v2658, 0.0
        %v2797 = vmax.f32 %v2660, 0.0
        %v2798 = vmax.f32 %v2664, 0.0
        %v2799 = vmax.f32 %v2666, 0.0
        %v2800 = vmax.f32 %v2670, 0.0
        %v2801 = vmax.f32 %v2672, 0.0
        %v2802 = vmax.f32 %v2676, 0.0
        %v2803 = vmax.f32 %v2678, 0.0
        %v2804 = vmax.f32 %v2682, 0.0
        %v2805 = vmax.f32 %v2684, 0.0
        %v2806 = vmax.f32 %v2686, %v2698
        %v2807 = vmax.f32 %v2687, %v2699
        %v2808 = vmax.f32 %v2688, %v2700
        %v2809 = vmax.f32 %v2689, %v2701
        %v2810 = vmax.f32 %v2690, %v2702
        %v2811 = vmax.f32 %v2691, %v2703
        %v2812 = vmax.f32 %v2692, %v2704
        %v2813 = vmax.f32 %v2693, %v2705
        %v2814 = vmax.f32 %v2694, %v2706
        %v2815 = vmax.f32 %v2695, %v2707
        %v2816 = vmax.f32 %v2696, %v2708
        %v2817 = vmax.f32 %v2697, %v2709
        %v2818 = vmax.f32 %v2806, %v2710
        %v2819 = vmax.f32 %v2807, %v2711
        %v2820 = vmax.f32 %v2808, %v2712
        %v2821 = vmax.f32 %v2809, %v2713
        %v2822 = vmax.f32 %v2810, %v2714
        %v2823 = vmax.f32 %v2811, %v2715
        %v2824 = vmax.f32 %v2812, %v2716
        %v2825 = vmax.f32 %v2813, %v2717
        %v2826 = vmax.f32 %v2814, %v2718
        %v2827 = vmax.f32 %v2815, %v2719
        %v2828 = vmax.f32 %v2816, %v2720
        %v2829 = vmax.f32 %v2817, %v2721
        %v2830 = vmax.f32 %v2818, %v2722
        %v2831 = vmax.f32 %v2819, %v2723
        %v2832 = vmax.f32 %v2820, %v2724
        %v2833 = vmax.f32 %v2821, %v2725
        %v2834 = vmax.f32 %v2822, %v2726
        %v2835 = vmax.f32 %v2823, %v2727
        %v2836 = vmax.f32 %v2824, %v2728
        %v2837 = vmax.f32 %v2825, %v2729
        %v2838 = vmax.f32 %v2826, %v2730
        %v2839 = vmax.f32 %v2827, %v2731
        %v2840 = vmax.f32 %v2828, %v2732
        %v2841 = vmax.f32 %v2829, %v2733
        %v2842 = vmax.f32 %v2830, %v2734
        %v2843 = vmax.f32 %v2831, %v2735
        %v2844 = vmax.f32 %v2832, %v2736
        %v2845 = vmax.f32 %v2833, %v2737
        %v2846 = vmax.f32 %v2834, %v2738
        %v2847 = vmax.f32 %v2835, %v2739
        %v2848 = vmax.f32 %v2836, %v2740
        %v2849 = vmax.f32 %v2837, %v2741
        %v2850 = vmax.f32 %v2838, %v2742
        %v2851 = vmax.f32 %v2839, %v2743
        %v2852 = vmax.f32 %v2840, %v2744
        %v2853 = vmax.f32 %v2841, %v2745
        %v2854 = vmax.f32 %v2842, %v2746
        %v2855 = vmax.f32 %v2843, %v2747
        %v2856 = vmax.f32 %v2844, %v2748
        %v2857 = vmax.f32 %v2845, %v2749
        %v2858 = vmax.f32 %v2846, %v2750
        %v2859 = vmax.f32 %v2847, %v2751
        %v2860 = vmax.f32 %v2848, %v2752
        %v2861 = vmax.f32 %v2849, %v2753
        %v2862 = vmax.f32 %v2850, %v2754
        %v2863 = vmax.f32 %v2851, %v2755
        %v2864 = vmax.f32 %v2852, %v2756
        %v2865 = vmax.f32 %v2853, %v2757
        %v2866 = vmax.f32 %v2854, %v2758
        %v2867 = vmax.f32 %v2855, %v2759
        %v2868 = vmax.f32 %v2856, %v2760
        %v2869 = vmax.f32 %v2857, %v2761
        %v2870 = vmax.f32 %v2858, %v2762
        %v2871 = vmax.f32 %v2859, %v2763
        %v2872 = vmax.f32 %v2860, %v2764
        %v2873 = vmax.f32 %v2861, %v2765
        %v2874 = vmax.f32 %v2862, %v2766
        %v2875 = vmax.f32 %v2863, %v2767
        %v2876 = vmax.f32 %v2864, %v2768
        %v2877 = vmax.f32 %v2865, %v2769
        %v2878 = vmax.f32 %v2866, %v2770
        %v2879 = vmax.f32 %v2867, %v2771
        %v2880 = vmax.f32 %v2868, %v2772
        %v2881 = vmax.f32 %v2869, %v2773
        %v2882 = vmax.f32 %v2870, %v2774
        %v2883 = vmax.f32 %v2871, %v2775
        %v2884 = vmax.f32 %v2872, %v2776
        %v2885 = vmax.f32 %v2873, %v2777
        %v2886 = vmax.f32 %v2874, %v2778
        %v2887 = vmax.f32 %v2875, %v2779
        %v2888 = vmax.f32 %v2876, %v2780
        %v2889 = vmax.f32 %v2877, %v2781
        %v2890 = vmax.f32 %v2878, %v2782
        %v2891 = vmax.f32 %v2879, %v2783
        %v2892 = vmax.f32 %v2880, %v2784
        %v2893 = vmax.f32 %v2881, %v2785
        %v2894 = vmax.f32 %v2882, %v2786
        %v2895 = vmax.f32 %v2883, %v2787
        %v2896 = vmax.f32 %v2884, %v2788
        %v2897 = vmax.f32 %v2885, %v2789
        %v2898 = vmax.f32 %v2886, %v2790
        %v2899 = vmax.f32 %v2887, %v2791
        %v2900 = vmax.f32 %v2888, %v2792
        %v2901 = vmax.f32 %v2889, %v2793
        %v2902 = vmax.f32 %v2890, %v2794
        %v2903 = vmax.f32 %v2891, %v2795
        %v2904 = vmax.f32 %v2892, %v2796
        %v2905 = vmax.f32 %v2893, %v2797
        %v2906 = vmax.f32 %v2894, %v2798
        %v2907 = vmax.f32 %v2895, %v2799
        %v2908 = vmax.f32 %v2896, %v2800
        %v2909 = vmax.f32 %v2897, %v2801
        %v2910 = vmax.f32 %v2898, %v2802
        %v2911 = vmax.f32 %v2899, %v2803
        %v2912 = vmax.f32 %v2900, %v2804
        %v2913 = vmax.f32 %v2901, %v2805
        %2914 = vst [vmem:[#allocation2] sm:$0xff] %v2902
        %vm2915 = vcmask 244736
        %2916 = vst.msk [vmem:[#allocation2 + $0x8] sm:$0xff] %vm2915, %v2903
        %2917 = vst [vmem:[#allocation2 + $0x10] sm:$0xff] %v2904
        %2918 = vst.msk [vmem:[#allocation2 + $0x18] sm:$0xff] %vm2915, %v2905
        %2919 = vst [vmem:[#allocation2 + $0x20] sm:$0xff] %v2906
        %2920 = vst.msk [vmem:[#allocation2 + $0x28] sm:$0xff] %vm2915, %v2907
        %2921 = vst [vmem:[#allocation2 + $0x30] sm:$0xff] %v2908
        %2922 = vst.msk [vmem:[#allocation2 + $0x38] sm:$0xff] %vm2915, %v2909
        %2923 = vst [vmem:[#allocation2 + $0x40] sm:$0xff] %v2910
        %2924 = vst.msk [vmem:[#allocation2 + $0x48] sm:$0xff] %vm2915, %v2911
        %2925 = vst [vmem:[#allocation2 + $0x50] sm:$0xff] %v2912
        %2926 = vst.msk [vmem:[#allocation2 + $0x58] sm:$0xff] %vm2915, %v2913
        %2939 = vrot.lane.b32.xlu0 %v2902, 127
        %v2940 = vpop.permute.xlu0 %2939
        %2941 = vrot.lane.b32.xlu0 %v2903, 127
        %v2942 = vpop.permute.xlu0 %2941
        %2943 = vrot.lane.b32.xlu0 %v2904, 127
        %v2944 = vpop.permute.xlu0 %2943
        %2945 = vrot.lane.b32.xlu0 %v2905, 127
        %v2946 = vpop.permute.xlu0 %2945
        %2947 = vrot.lane.b32.xlu0 %v2906, 127
        %v2948 = vpop.permute.xlu0 %2947
        %2949 = vrot.lane.b32.xlu0 %v2907, 127
        %v2950 = vpop.permute.xlu0 %2949
        %2951 = vrot.lane.b32.xlu0 %v2908, 127
        %v2952 = vpop.permute.xlu0 %2951
        %2953 = vrot.lane.b32.xlu0 %v2909, 127
        %v2954 = vpop.permute.xlu0 %2953
        %2955 = vrot.lane.b32.xlu0 %v2910, 127
        %v2956 = vpop.permute.xlu0 %2955
        %2957 = vrot.lane.b32.xlu0 %v2911, 127
        %v2958 = vpop.permute.xlu0 %2957
        %2959 = vrot.lane.b32.xlu0 %v2912, 127
        %v2960 = vpop.permute.xlu0 %2959
        %2961 = vrot.lane.b32.xlu0 %v2913, 127
        %v2962 = vpop.permute.xlu0 %2961
        %vm2963 = vcmask 1039360
        %v2964 = vsel %vm2963, %v2940, %v2942
        %v2965 = vsel %vm2963, %v2944, %v2946
        %v2966 = vsel %vm2963, %v2948, %v2950
        %v2967 = vsel %vm2963, %v2952, %v2954
        %v2968 = vsel %vm2963, %v2956, %v2958
        %v2969 = vsel %vm2963, %v2960, %v2962
        %2982 = vst [vmem:[#allocation2 + $0x60] sm:$0xff] %v2964
        %2983 = vst.msk [vmem:[#allocation2 + $0x68] sm:$0xff] %vm2915, %v2942
        %2984 = vst [vmem:[#allocation2 + $0x70] sm:$0xff] %v2965
        %2985 = vst.msk [vmem:[#allocation2 + $0x78] sm:$0xff] %vm2915, %v2946
        %2986 = vst [vmem:[#allocation2 + $0x80] sm:$0xff] %v2966
        %2987 = vst.msk [vmem:[#allocation2 + $0x88] sm:$0xff] %vm2915, %v2950
        %2988 = vst [vmem:[#allocation2 + $0x90] sm:$0xff] %v2967
        %2989 = vst.msk [vmem:[#allocation2 + $0x98] sm:$0xff] %vm2915, %v2954
        %2990 = vst [vmem:[#allocation2 + $0xa0] sm:$0xff] %v2968
        %2991 = vst.msk [vmem:[#allocation2 + $0xa8] sm:$0xff] %vm2915, %v2958
        %2992 = vst [vmem:[#allocation2 + $0xb0] sm:$0xff] %v2969
        %2993 = vst.msk [vmem:[#allocation2 + $0xb8] sm:$0xff] %vm2915, %v2962
        %2994 = vrot.lane.b32.xlu0 %v2902, 126
        %v2995 = vpop.permute.xlu0 %2994
        %2996 = vrot.lane.b32.xlu0 %v2903, 126
        %v2997 = vpop.permute.xlu0 %2996
        %2998 = vrot.lane.b32.xlu0 %v2904, 126
        %v2999 = vpop.permute.xlu0 %2998
        %3000 = vrot.lane.b32.xlu0 %v2905, 126
        %v3001 = vpop.permute.xlu0 %3000
        %3002 = vrot.lane.b32.xlu0 %v2906, 126
        %v3003 = vpop.permute.xlu0 %3002
        %3004 = vrot.lane.b32.xlu0 %v2907, 126
        %v3005 = vpop.permute.xlu0 %3004
        %3006 = vrot.lane.b32.xlu0 %v2908, 126
        %v3007 = vpop.permute.xlu0 %3006
        %3008 = vrot.lane.b32.xlu0 %v2909, 126
        %v3009 = vpop.permute.xlu0 %3008
        %3010 = vrot.lane.b32.xlu0 %v2910, 126
        %v3011 = vpop.permute.xlu0 %3010
        %3012 = vrot.lane.b32.xlu0 %v2911, 126
        %v3013 = vpop.permute.xlu0 %3012
        %3014 = vrot.lane.b32.xlu0 %v2912, 126
        %v3015 = vpop.permute.xlu0 %3014
        %3016 = vrot.lane.b32.xlu0 %v2913, 126
        %v3017 = vpop.permute.xlu0 %3016
        %vm3018 = vcmask 1031168
        %v3019 = vsel %vm3018, %v2995, %v2997
        %v3020 = vsel %vm3018, %v2999, %v3001
        %v3021 = vsel %vm3018, %v3003, %v3005
        %v3022 = vsel %vm3018, %v3007, %v3009
        %v3023 = vsel %vm3018, %v3011, %v3013
        %v3024 = vsel %vm3018, %v3015, %v3017
        %3037 = vst [vmem:[#allocation2 + $0xc0] sm:$0xff] %v3019
        %3038 = vst.msk [vmem:[#allocation2 + $0xc8] sm:$0xff] %vm2915, %v2997
        %3039 = vst [vmem:[#allocation2 + $0xd0] sm:$0xff] %v3020
        %3040 = vst.msk [vmem:[#allocation2 + $0xd8] sm:$0xff] %vm2915, %v3001
        %3041 = vst [vmem:[#allocation2 + $0xe0] sm:$0xff] %v3021
        %3042 = vst.msk [vmem:[#allocation2 + $0xe8] sm:$0xff] %vm2915, %v3005
        %3043 = vst [vmem:[#allocation2 + $0xf0] sm:$0xff] %v3022
        %3044 = vst.msk [vmem:[#allocation2 + $0xf8] sm:$0xff] %vm2915, %v3009
        %3045 = vst [vmem:[#allocation2 + $0x100] sm:$0xff] %v3023
        %3046 = vst.msk [vmem:[#allocation2 + $0x108] sm:$0xff] %vm2915, %v3013
        %3047 = vst [vmem:[#allocation2 + $0x110] sm:$0xff] %v3024
        %3048 = vst.msk [vmem:[#allocation2 + $0x118] sm:$0xff] %vm2915, %v3017
        %3049 = vrot.lane.b32.xlu0 %v2902, 125
        %v3050 = vpop.permute.xlu0 %3049
        %3051 = vrot.lane.b32.xlu0 %v2903, 125
        %v3052 = vpop.permute.xlu0 %3051
        %3053 = vrot.lane.b32.xlu0 %v2904, 125
        %v3054 = vpop.permute.xlu0 %3053
        %3055 = vrot.lane.b32.xlu0 %v2905, 125
        %v3056 = vpop.permute.xlu0 %3055
        %3057 = vrot.lane.b32.xlu0 %v2906, 125
        %v3058 = vpop.permute.xlu0 %3057
        %3059 = vrot.lane.b32.xlu0 %v2907, 125
        %v3060 = vpop.permute.xlu0 %3059
        %3061 = vrot.lane.b32.xlu0 %v2908, 125
        %v3062 = vpop.permute.xlu0 %3061
        %3063 = vrot.lane.b32.xlu0 %v2909, 125
        %v3064 = vpop.permute.xlu0 %3063
        %3065 = vrot.lane.b32.xlu0 %v2910, 125
        %v3066 = vpop.permute.xlu0 %3065
        %3067 = vrot.lane.b32.xlu0 %v2911, 125
        %v3068 = vpop.permute.xlu0 %3067
        %3069 = vrot.lane.b32.xlu0 %v2912, 125
        %v3070 = vpop.permute.xlu0 %3069
        %3071 = vrot.lane.b32.xlu0 %v2913, 125
        %v3072 = vpop.permute.xlu0 %3071
        %vm3073 = vcmask 1022976
        %v3074 = vsel %vm3073, %v3050, %v3052
        %v3075 = vsel %vm3073, %v3054, %v3056
        %v3076 = vsel %vm3073, %v3058, %v3060
        %v3077 = vsel %vm3073, %v3062, %v3064
        %v3078 = vsel %vm3073, %v3066, %v3068
        %v3079 = vsel %vm3073, %v3070, %v3072
        %3092 = vst [vmem:[#allocation2 + $0x120] sm:$0xff] %v3074
        %3093 = vst.msk [vmem:[#allocation2 + $0x128] sm:$0xff] %vm2915, %v3052
        %3094 = vst [vmem:[#allocation2 + $0x130] sm:$0xff] %v3075
        %3095 = vst.msk [vmem:[#allocation2 + $0x138] sm:$0xff] %vm2915, %v3056
        %3096 = vst [vmem:[#allocation2 + $0x140] sm:$0xff] %v3076
        %3097 = vst.msk [vmem:[#allocation2 + $0x148] sm:$0xff] %vm2915, %v3060
        %3098 = vst [vmem:[#allocation2 + $0x150] sm:$0xff] %v3077
        %3099 = vst.msk [vmem:[#allocation2 + $0x158] sm:$0xff] %vm2915, %v3064
        %3100 = vst [vmem:[#allocation2 + $0x160] sm:$0xff] %v3078
        %3101 = vst.msk [vmem:[#allocation2 + $0x168] sm:$0xff] %vm2915, %v3068
        %3102 = vst [vmem:[#allocation2 + $0x170] sm:$0xff] %v3079
        %3103 = vst.msk [vmem:[#allocation2 + $0x178] sm:$0xff] %vm2915, %v3072
        %3104 = vrot.lane.b32.xlu0 %v2902, 124
        %v3105 = vpop.permute.xlu0 %3104
        %3106 = vrot.lane.b32.xlu0 %v2903, 124
        %v3107 = vpop.permute.xlu0 %3106
        %3108 = vrot.lane.b32.xlu0 %v2904, 124
        %v3109 = vpop.permute.xlu0 %3108
        %3110 = vrot.lane.b32.xlu0 %v2905, 124
        %v3111 = vpop.permute.xlu0 %3110
        %3112 = vrot.lane.b32.xlu0 %v2906, 124
        %v3113 = vpop.permute.xlu0 %3112
        %3114 = vrot.lane.b32.xlu0 %v2907, 124
        %v3115 = vpop.permute.xlu0 %3114
        %3116 = vrot.lane.b32.xlu0 %v2908, 124
        %v3117 = vpop.permute.xlu0 %3116
        %3118 = vrot.lane.b32.xlu0 %v2909, 124
        %v3119 = vpop.permute.xlu0 %3118
        %3120 = vrot.lane.b32.xlu0 %v2910, 124
        %v3121 = vpop.permute.xlu0 %3120
        %3122 = vrot.lane.b32.xlu0 %v2911, 124
        %v3123 = vpop.permute.xlu0 %3122
        %3124 = vrot.lane.b32.xlu0 %v2912, 124
        %v3125 = vpop.permute.xlu0 %3124
        %3126 = vrot.lane.b32.xlu0 %v2913, 124
        %v3127 = vpop.permute.xlu0 %3126
        %vm3128 = vcmask 1014784
        %v3129 = vsel %vm3128, %v3105, %v3107
        %v3130 = vsel %vm3128, %v3109, %v3111
        %v3131 = vsel %vm3128, %v3113, %v3115
        %v3132 = vsel %vm3128, %v3117, %v3119
        %v3133 = vsel %vm3128, %v3121, %v3123
        %v3134 = vsel %vm3128, %v3125, %v3127
        %3147 = vst [vmem:[#allocation2 + $0x180] sm:$0xff] %v3129
        %3148 = vst.msk [vmem:[#allocation2 + $0x188] sm:$0xff] %vm2915, %v3107
        %3149 = vst [vmem:[#allocation2 + $0x190] sm:$0xff] %v3130
        %3150 = vst.msk [vmem:[#allocation2 + $0x198] sm:$0xff] %vm2915, %v3111
        %3151 = vst [vmem:[#allocation2 + $0x1a0] sm:$0xff] %v3131
        %3152 = vst.msk [vmem:[#allocation2 + $0x1a8] sm:$0xff] %vm2915, %v3115
        %3153 = vst [vmem:[#allocation2 + $0x1b0] sm:$0xff] %v3132
        %3154 = vst.msk [vmem:[#allocation2 + $0x1b8] sm:$0xff] %vm2915, %v3119
        %3155 = vst [vmem:[#allocation2 + $0x1c0] sm:$0xff] %v3133
        %3156 = vst.msk [vmem:[#allocation2 + $0x1c8] sm:$0xff] %vm2915, %v3123
        %3157 = vst [vmem:[#allocation2 + $0x1d0] sm:$0xff] %v3134
        %3158 = vst.msk [vmem:[#allocation2 + $0x1d8] sm:$0xff] %vm2915, %v3127
        %3159 = vrot.lane.b32.xlu0 %v2902, 123
        %v3160 = vpop.permute.xlu0 %3159
        %3161 = vrot.lane.b32.xlu0 %v2903, 123
        %v3162 = vpop.permute.xlu0 %3161
        %3163 = vrot.lane.b32.xlu0 %v2904, 123
        %v3164 = vpop.permute.xlu0 %3163
        %3165 = vrot.lane.b32.xlu0 %v2905, 123
        %v3166 = vpop.permute.xlu0 %3165
        %3167 = vrot.lane.b32.xlu0 %v2906, 123
        %v3168 = vpop.permute.xlu0 %3167
        %3169 = vrot.lane.b32.xlu0 %v2907, 123
        %v3170 = vpop.permute.xlu0 %3169
        %3171 = vrot.lane.b32.xlu0 %v2908, 123
        %v3172 = vpop.permute.xlu0 %3171
        %3173 = vrot.lane.b32.xlu0 %v2909, 123
        %v3174 = vpop.permute.xlu0 %3173
        %3175 = vrot.lane.b32.xlu0 %v2910, 123
        %v3176 = vpop.permute.xlu0 %3175
        %3177 = vrot.lane.b32.xlu0 %v2911, 123
        %v3178 = vpop.permute.xlu0 %3177
        %3179 = vrot.lane.b32.xlu0 %v2912, 123
        %v3180 = vpop.permute.xlu0 %3179
        %3181 = vrot.lane.b32.xlu0 %v2913, 123
        %v3182 = vpop.permute.xlu0 %3181
        %vm3183 = vcmask 1006592
        %v3184 = vsel %vm3183, %v3160, %v3162
        %v3185 = vsel %vm3183, %v3164, %v3166
        %v3186 = vsel %vm3183, %v3168, %v3170
        %v3187 = vsel %vm3183, %v3172, %v3174
        %v3188 = vsel %vm3183, %v3176, %v3178
        %v3189 = vsel %vm3183, %v3180, %v3182
        %3202 = vst [vmem:[#allocation2 + $0x1e0] sm:$0xff] %v3184
        %3203 = vst.msk [vmem:[#allocation2 + $0x1e8] sm:$0xff] %vm2915, %v3162
        %3204 = vst [vmem:[#allocation2 + $0x1f0] sm:$0xff] %v3185
        %3205 = vst.msk [vmem:[#allocation2 + $0x1f8] sm:$0xff] %vm2915, %v3166
        %3206 = vst [vmem:[#allocation2 + $0x200] sm:$0xff] %v3186
        %3207 = vst.msk [vmem:[#allocation2 + $0x208] sm:$0xff] %vm2915, %v3170
        %3208 = vst [vmem:[#allocation2 + $0x210] sm:$0xff] %v3187
        %3209 = vst.msk [vmem:[#allocation2 + $0x218] sm:$0xff] %vm2915, %v3174
        %3210 = vst [vmem:[#allocation2 + $0x220] sm:$0xff] %v3188
        %3211 = vst.msk [vmem:[#allocation2 + $0x228] sm:$0xff] %vm2915, %v3178
        %3212 = vst [vmem:[#allocation2 + $0x230] sm:$0xff] %v3189
        %3213 = vst.msk [vmem:[#allocation2 + $0x238] sm:$0xff] %vm2915, %v3182
        %3214 = vrot.lane.b32.xlu0 %v2902, 122
        %v3215 = vpop.permute.xlu0 %3214
        %3216 = vrot.lane.b32.xlu0 %v2903, 122
        %v3217 = vpop.permute.xlu0 %3216
        %3218 = vrot.lane.b32.xlu0 %v2904, 122
        %v3219 = vpop.permute.xlu0 %3218
        %3220 = vrot.lane.b32.xlu0 %v2905, 122
        %v3221 = vpop.permute.xlu0 %3220
        %3222 = vrot.lane.b32.xlu0 %v2906, 122
        %v3223 = vpop.permute.xlu0 %3222
        %3224 = vrot.lane.b32.xlu0 %v2907, 122
        %v3225 = vpop.permute.xlu0 %3224
        %3226 = vrot.lane.b32.xlu0 %v2908, 122
        %v3227 = vpop.permute.xlu0 %3226
        %3228 = vrot.lane.b32.xlu0 %v2909, 122
        %v3229 = vpop.permute.xlu0 %3228
        %3230 = vrot.lane.b32.xlu0 %v2910, 122
        %v3231 = vpop.permute.xlu0 %3230
        %3232 = vrot.lane.b32.xlu0 %v2911, 122
        %v3233 = vpop.permute.xlu0 %3232
        %3234 = vrot.lane.b32.xlu0 %v2912, 122
        %v3235 = vpop.permute.xlu0 %3234
        %3236 = vrot.lane.b32.xlu0 %v2913, 122
        %v3237 = vpop.permute.xlu0 %3236
        %vm3238 = vcmask 998400
        %v3239 = vsel %vm3238, %v3215, %v3217
        %v3240 = vsel %vm3238, %v3219, %v3221
        %v3241 = vsel %vm3238, %v3223, %v3225
        %v3242 = vsel %vm3238, %v3227, %v3229
        %v3243 = vsel %vm3238, %v3231, %v3233
        %v3244 = vsel %vm3238, %v3235, %v3237
        %3257 = vst [vmem:[#allocation2 + $0x240] sm:$0xff] %v3239
        %3258 = vst.msk [vmem:[#allocation2 + $0x248] sm:$0xff] %vm2915, %v3217
        %3259 = vst [vmem:[#allocation2 + $0x250] sm:$0xff] %v3240
        %3260 = vst.msk [vmem:[#allocation2 + $0x258] sm:$0xff] %vm2915, %v3221
        %3261 = vst [vmem:[#allocation2 + $0x260] sm:$0xff] %v3241
        %3262 = vst.msk [vmem:[#allocation2 + $0x268] sm:$0xff] %vm2915, %v3225
        %3263 = vst [vmem:[#allocation2 + $0x270] sm:$0xff] %v3242
        %3264 = vst.msk [vmem:[#allocation2 + $0x278] sm:$0xff] %vm2915, %v3229
        %3265 = vst [vmem:[#allocation2 + $0x280] sm:$0xff] %v3243
        %3266 = vst.msk [vmem:[#allocation2 + $0x288] sm:$0xff] %vm2915, %v3233
        %3267 = vst [vmem:[#allocation2 + $0x290] sm:$0xff] %v3244
        %3268 = vst.msk [vmem:[#allocation2 + $0x298] sm:$0xff] %vm2915, %v3237
        %3269 = vrot.lane.b32.xlu0 %v2902, 121
        %v3270 = vpop.permute.xlu0 %3269
        %3271 = vrot.lane.b32.xlu0 %v2903, 121
        %v3272 = vpop.permute.xlu0 %3271
        %3273 = vrot.lane.b32.xlu0 %v2904, 121
        %v3274 = vpop.permute.xlu0 %3273
        %3275 = vrot.lane.b32.xlu0 %v2905, 121
        %v3276 = vpop.permute.xlu0 %3275
        %3277 = vrot.lane.b32.xlu0 %v2906, 121
        %v3278 = vpop.permute.xlu0 %3277
        %3279 = vrot.lane.b32.xlu0 %v2907, 121
        %v3280 = vpop.permute.xlu0 %3279
        %3281 = vrot.lane.b32.xlu0 %v2908, 121
        %v3282 = vpop.permute.xlu0 %3281
        %3283 = vrot.lane.b32.xlu0 %v2909, 121
        %v3284 = vpop.permute.xlu0 %3283
        %3285 = vrot.lane.b32.xlu0 %v2910, 121
        %v3286 = vpop.permute.xlu0 %3285
        %3287 = vrot.lane.b32.xlu0 %v2911, 121
        %v3288 = vpop.permute.xlu0 %3287
        %3289 = vrot.lane.b32.xlu0 %v2912, 121
        %v3290 = vpop.permute.xlu0 %3289
        %3291 = vrot.lane.b32.xlu0 %v2913, 121
        %v3292 = vpop.permute.xlu0 %3291
        %vm3293 = vcmask 990208
        %v3294 = vsel %vm3293, %v3270, %v3272
        %v3295 = vsel %vm3293, %v3274, %v3276
        %v3296 = vsel %vm3293, %v3278, %v3280
        %v3297 = vsel %vm3293, %v3282, %v3284
        %v3298 = vsel %vm3293, %v3286, %v3288
        %v3299 = vsel %vm3293, %v3290, %v3292
        %3312 = vst [vmem:[#allocation2 + $0x2a0] sm:$0xff] %v3294
        %3313 = vst.msk [vmem:[#allocation2 + $0x2a8] sm:$0xff] %vm2915, %v3272
        %3314 = vst [vmem:[#allocation2 + $0x2b0] sm:$0xff] %v3295
        %3315 = vst.msk [vmem:[#allocation2 + $0x2b8] sm:$0xff] %vm2915, %v3276
        %3316 = vst [vmem:[#allocation2 + $0x2c0] sm:$0xff] %v3296
        %3317 = vst.msk [vmem:[#allocation2 + $0x2c8] sm:$0xff] %vm2915, %v3280
        %3318 = vst [vmem:[#allocation2 + $0x2d0] sm:$0xff] %v3297
        %3319 = vst.msk [vmem:[#allocation2 + $0x2d8] sm:$0xff] %vm2915, %v3284
        %3320 = vst [vmem:[#allocation2 + $0x2e0] sm:$0xff] %v3298
        %3321 = vst.msk [vmem:[#allocation2 + $0x2e8] sm:$0xff] %vm2915, %v3288
        %3322 = vst [vmem:[#allocation2 + $0x2f0] sm:$0xff] %v3299
        %3323 = vst.msk [vmem:[#allocation2 + $0x2f8] sm:$0xff] %vm2915, %v3292
        %3324 = vrot.lane.b32.xlu0 %v2902, 120
        %v3325 = vpop.permute.xlu0 %3324
        %3326 = vrot.lane.b32.xlu0 %v2903, 120
        %v3327 = vpop.permute.xlu0 %3326
        %3328 = vrot.lane.b32.xlu0 %v2904, 120
        %v3329 = vpop.permute.xlu0 %3328
        %3330 = vrot.lane.b32.xlu0 %v2905, 120
        %v3331 = vpop.permute.xlu0 %3330
        %3332 = vrot.lane.b32.xlu0 %v2906, 120
        %v3333 = vpop.permute.xlu0 %3332
        %3334 = vrot.lane.b32.xlu0 %v2907, 120
        %v3335 = vpop.permute.xlu0 %3334
        %3336 = vrot.lane.b32.xlu0 %v2908, 120
        %v3337 = vpop.permute.xlu0 %3336
        %3338 = vrot.lane.b32.xlu0 %v2909, 120
        %v3339 = vpop.permute.xlu0 %3338
        %3340 = vrot.lane.b32.xlu0 %v2910, 120
        %v3341 = vpop.permute.xlu0 %3340
        %3342 = vrot.lane.b32.xlu0 %v2911, 120
        %v3343 = vpop.permute.xlu0 %3342
        %3344 = vrot.lane.b32.xlu0 %v2912, 120
        %v3345 = vpop.permute.xlu0 %3344
        %3346 = vrot.lane.b32.xlu0 %v2913, 120
        %v3347 = vpop.permute.xlu0 %3346
        %vm3348 = vcmask 982016
        %v3349 = vsel %vm3348, %v3325, %v3327
        %v3350 = vsel %vm3348, %v3329, %v3331
        %v3351 = vsel %vm3348, %v3333, %v3335
        %v3352 = vsel %vm3348, %v3337, %v3339
        %v3353 = vsel %vm3348, %v3341, %v3343
        %v3354 = vsel %vm3348, %v3345, %v3347
        %3367 = vst [vmem:[#allocation2 + $0x300] sm:$0xff] %v3349
        %3368 = vst.msk [vmem:[#allocation2 + $0x308] sm:$0xff] %vm2915, %v3327
        %3369 = vst [vmem:[#allocation2 + $0x310] sm:$0xff] %v3350
        %3370 = vst.msk [vmem:[#allocation2 + $0x318] sm:$0xff] %vm2915, %v3331
        %3371 = vst [vmem:[#allocation2 + $0x320] sm:$0xff] %v3351
        %3372 = vst.msk [vmem:[#allocation2 + $0x328] sm:$0xff] %vm2915, %v3335
        %3373 = vst [vmem:[#allocation2 + $0x330] sm:$0xff] %v3352
        %3374 = vst.msk [vmem:[#allocation2 + $0x338] sm:$0xff] %vm2915, %v3339
        %3375 = vst [vmem:[#allocation2 + $0x340] sm:$0xff] %v3353
        %3376 = vst.msk [vmem:[#allocation2 + $0x348] sm:$0xff] %vm2915, %v3343
        %3377 = vst [vmem:[#allocation2 + $0x350] sm:$0xff] %v3354
        %3378 = vst.msk [vmem:[#allocation2 + $0x358] sm:$0xff] %vm2915, %v3347
        %v3379 = vld [vmem:[%s3] sm:$0xff]
        %v3380 = vld [vmem:[%s3 + $0x8] sm:$0xff]
        %v3381 = vld [vmem:[%s3 + $0x10] sm:$0xff]
        %v3382 = vld [vmem:[%s3 + $0x18] sm:$0xff]
        %v3383 = vld [vmem:[%s3 + $0x20] sm:$0xff]
        %v3384 = vld [vmem:[%s3 + $0x28] sm:$0xff]
        %v3385 = vld [vmem:[%s3 + $0x30] sm:$0xff]
        %v3386 = vld [vmem:[%s3 + $0x38] sm:$0xff]
        %v3387 = vld [vmem:[%s3 + $0x40] sm:$0xff]
        %v3388 = vld [vmem:[%s3 + $0x48] sm:$0xff]
        %v3389 = vld [vmem:[%s3 + $0x50] sm:$0xff]
        %v3390 = vld [vmem:[%s3 + $0x58] sm:$0xff]
        %v3391 = vld [vmem:[#allocation2] sm:$0xff]
        %v3392 = vld [vmem:[#allocation2 + $0x8] sm:$0xff]
        %v3393 = vld [vmem:[#allocation2 + $0x10] sm:$0xff]
        %v3394 = vld [vmem:[#allocation2 + $0x18] sm:$0xff]
        %v3395 = vld [vmem:[#allocation2 + $0x20] sm:$0xff]
        %v3396 = vld [vmem:[#allocation2 + $0x28] sm:$0xff]
        %v3397 = vld [vmem:[#allocation2 + $0x30] sm:$0xff]
        %v3398 = vld [vmem:[#allocation2 + $0x38] sm:$0xff]
        %v3399 = vld [vmem:[#allocation2 + $0x40] sm:$0xff]
        %v3400 = vld [vmem:[#allocation2 + $0x48] sm:$0xff]
        %v3401 = vld [vmem:[#allocation2 + $0x50] sm:$0xff]
        %v3402 = vld [vmem:[#allocation2 + $0x58] sm:$0xff]
        %v3403 = vld [vmem:[#allocation2 + $0x60] sm:$0xff]
        %v3404 = vld [vmem:[#allocation2 + $0x68] sm:$0xff]
        %v3405 = vld [vmem:[#allocation2 + $0x70] sm:$0xff]
        %v3406 = vld [vmem:[#allocation2 + $0x78] sm:$0xff]
        %v3407 = vld [vmem:[#allocation2 + $0x80] sm:$0xff]
        %v3408 = vld [vmem:[#allocation2 + $0x88] sm:$0xff]
        %v3409 = vld [vmem:[#allocation2 + $0x90] sm:$0xff]
        %v3410 = vld [vmem:[#allocation2 + $0x98] sm:$0xff]
        %v3411 = vld [vmem:[#allocation2 + $0xa0] sm:$0xff]
        %v3412 = vld [vmem:[#allocation2 + $0xa8] sm:$0xff]
        %v3413 = vld [vmem:[#allocation2 + $0xb0] sm:$0xff]
        %v3414 = vld [vmem:[#allocation2 + $0xb8] sm:$0xff]
        %v3415 = vld [vmem:[#allocation2 + $0xc0] sm:$0xff]
        %v3416 = vld [vmem:[#allocation2 + $0xc8] sm:$0xff]
        %v3417 = vld [vmem:[#allocation2 + $0xd0] sm:$0xff]
        %v3418 = vld [vmem:[#allocation2 + $0xd8] sm:$0xff]
        %v3419 = vld [vmem:[#allocation2 + $0xe0] sm:$0xff]
        %v3420 = vld [vmem:[#allocation2 + $0xe8] sm:$0xff]
        %v3421 = vld [vmem:[#allocation2 + $0xf0] sm:$0xff]
        %v3422 = vld [vmem:[#allocation2 + $0xf8] sm:$0xff]
        %v3423 = vld [vmem:[#allocation2 + $0x100] sm:$0xff]
        %v3424 = vld [vmem:[#allocation2 + $0x108] sm:$0xff]
        %v3425 = vld [vmem:[#allocation2 + $0x110] sm:$0xff]
        %v3426 = vld [vmem:[#allocation2 + $0x118] sm:$0xff]
        %v3427 = vld [vmem:[#allocation2 + $0x120] sm:$0xff]
        %v3428 = vld [vmem:[#allocation2 + $0x128] sm:$0xff]
        %v3429 = vld [vmem:[#allocation2 + $0x130] sm:$0xff]
        %v3430 = vld [vmem:[#allocation2 + $0x138] sm:$0xff]
        %v3431 = vld [vmem:[#allocation2 + $0x140] sm:$0xff]
        %v3432 = vld [vmem:[#allocation2 + $0x148] sm:$0xff]
        %v3433 = vld [vmem:[#allocation2 + $0x150] sm:$0xff]
        %v3434 = vld [vmem:[#allocation2 + $0x158] sm:$0xff]
        %v3435 = vld [vmem:[#allocation2 + $0x160] sm:$0xff]
        %v3436 = vld [vmem:[#allocation2 + $0x168] sm:$0xff]
        %v3437 = vld [vmem:[#allocation2 + $0x170] sm:$0xff]
        %v3438 = vld [vmem:[#allocation2 + $0x178] sm:$0xff]
        %v3439 = vld [vmem:[#allocation2 + $0x180] sm:$0xff]
        %v3440 = vld [vmem:[#allocation2 + $0x188] sm:$0xff]
        %v3441 = vld [vmem:[#allocation2 + $0x190] sm:$0xff]
        %v3442 = vld [vmem:[#allocation2 + $0x198] sm:$0xff]
        %v3443 = vld [vmem:[#allocation2 + $0x1a0] sm:$0xff]
        %v3444 = vld [vmem:[#allocation2 + $0x1a8] sm:$0xff]
        %v3445 = vld [vmem:[#allocation2 + $0x1b0] sm:$0xff]
        %v3446 = vld [vmem:[#allocation2 + $0x1b8] sm:$0xff]
        %v3447 = vld [vmem:[#allocation2 + $0x1c0] sm:$0xff]
        %v3448 = vld [vmem:[#allocation2 + $0x1c8] sm:$0xff]
        %v3449 = vld [vmem:[#allocation2 + $0x1d0] sm:$0xff]
        %v3450 = vld [vmem:[#allocation2 + $0x1d8] sm:$0xff]
        %v3451 = vld [vmem:[#allocation2 + $0x1e0] sm:$0xff]
        %v3452 = vld [vmem:[#allocation2 + $0x1e8] sm:$0xff]
        %v3453 = vld [vmem:[#allocation2 + $0x1f0] sm:$0xff]
        %v3454 = vld [vmem:[#allocation2 + $0x1f8] sm:$0xff]
        %v3455 = vld [vmem:[#allocation2 + $0x200] sm:$0xff]
        %v3456 = vld [vmem:[#allocation2 + $0x208] sm:$0xff]
        %v3457 = vld [vmem:[#allocation2 + $0x210] sm:$0xff]
        %v3458 = vld [vmem:[#allocation2 + $0x218] sm:$0xff]
        %v3459 = vld [vmem:[#allocation2 + $0x220] sm:$0xff]
        %v3460 = vld [vmem:[#allocation2 + $0x228] sm:$0xff]
        %v3461 = vld [vmem:[#allocation2 + $0x230] sm:$0xff]
        %v3462 = vld [vmem:[#allocation2 + $0x238] sm:$0xff]
        %v3463 = vld [vmem:[#allocation2 + $0x240] sm:$0xff]
        %v3464 = vld [vmem:[#allocation2 + $0x248] sm:$0xff]
        %v3465 = vld [vmem:[#allocation2 + $0x250] sm:$0xff]
        %v3466 = vld [vmem:[#allocation2 + $0x258] sm:$0xff]
        %v3467 = vld [vmem:[#allocation2 + $0x260] sm:$0xff]
        %v3468 = vld [vmem:[#allocation2 + $0x268] sm:$0xff]
        %v3469 = vld [vmem:[#allocation2 + $0x270] sm:$0xff]
        %v3470 = vld [vmem:[#allocation2 + $0x278] sm:$0xff]
        %v3471 = vld [vmem:[#allocation2 + $0x280] sm:$0xff]
        %v3472 = vld [vmem:[#allocation2 + $0x288] sm:$0xff]
        %v3473 = vld [vmem:[#allocation2 + $0x290] sm:$0xff]
        %v3474 = vld [vmem:[#allocation2 + $0x298] sm:$0xff]
        %v3475 = vld [vmem:[#allocation2 + $0x2a0] sm:$0xff]
        %v3476 = vld [vmem:[#allocation2 + $0x2a8] sm:$0xff]
        %v3477 = vld [vmem:[#allocation2 + $0x2b0] sm:$0xff]
        %v3478 = vld [vmem:[#allocation2 + $0x2b8] sm:$0xff]
        %v3479 = vld [vmem:[#allocation2 + $0x2c0] sm:$0xff]
        %v3480 = vld [vmem:[#allocation2 + $0x2c8] sm:$0xff]
        %v3481 = vld [vmem:[#allocation2 + $0x2d0] sm:$0xff]
        %v3482 = vld [vmem:[#allocation2 + $0x2d8] sm:$0xff]
        %v3483 = vld [vmem:[#allocation2 + $0x2e0] sm:$0xff]
        %v3484 = vld [vmem:[#allocation2 + $0x2e8] sm:$0xff]
        %v3485 = vld [vmem:[#allocation2 + $0x2f0] sm:$0xff]
        %v3486 = vld [vmem:[#allocation2 + $0x2f8] sm:$0xff]
        %v3487 = vld [vmem:[#allocation2 + $0x300] sm:$0xff]
        %v3488 = vld [vmem:[#allocation2 + $0x308] sm:$0xff]
        %v3489 = vld [vmem:[#allocation2 + $0x310] sm:$0xff]
        %v3490 = vld [vmem:[#allocation2 + $0x318] sm:$0xff]
        %v3491 = vld [vmem:[#allocation2 + $0x320] sm:$0xff]
        %v3492 = vld [vmem:[#allocation2 + $0x328] sm:$0xff]
        %v3493 = vld [vmem:[#allocation2 + $0x330] sm:$0xff]
        %v3494 = vld [vmem:[#allocation2 + $0x338] sm:$0xff]
        %v3495 = vld [vmem:[#allocation2 + $0x340] sm:$0xff]
        %v3496 = vld [vmem:[#allocation2 + $0x348] sm:$0xff]
        %v3497 = vld [vmem:[#allocation2 + $0x350] sm:$0xff]
        %v3498 = vld [vmem:[#allocation2 + $0x358] sm:$0xff]
        %v3499 = vld [vmem:[%s4] sm:$0xff]
        %v3500 = vld [vmem:[%s4 + $0x8] sm:$0xff]
        %v3501 = vld [vmem:[%s4 + $0x10] sm:$0xff]
        %3503 = vset.pattern.permute.xlu0 0
        %3504 = vperm.xlu0 %3503, %v3499
        %v3505 = vpop.permute.xlu0 %3504
        %3508 = vset.pattern.permute.xlu0 0
        %3509 = vperm.xlu0 %3508, %v3500
        %v3510 = vpop.permute.xlu0 %3509
        %3513 = vset.pattern.permute.xlu0 0
        %3514 = vperm.xlu0 %3513, %v3501
        %v3515 = vpop.permute.xlu0 %3514
        %vm3517 = vcmask 392192
        %v3519 = vsel %vm3517, %v3382, 0
        %v3522 = vsel %vm3517, %v3386, 0
        %v3525 = vsel %vm3517, %v3390, 0
        %3527 = vmatprep.subr.mxu0 %v3392
        %3528 = vmatpush1.msra.mxu0 %v3391
        %3529 = vmatprep.subr.mxu0 %v3394
        %3530 = vmatpush1.msra.mxu0 %v3393
        %3531 = vmatprep.subr.mxu0 %v3396
        %3532 = vmatpush1.msra.mxu0 %v3395
        %3533 = vmatprep.subr.mxu0 %v3398
        %3534 = vmatpush1.msra.mxu0 %v3397
        %3535 = vmatprep.subr.mxu0 %v3400
        %3536 = vmatpush1.msra.mxu0 %v3399
        %3537 = vmatprep.subr.mxu0 %v3402
        %3538 = vmatpush1.msra.mxu0 %v3401
        %3539 = vmatprep.subr.mxu0 %v3404
        %3540 = vmatpush1.msra.mxu0 %v3403
        %3541 = vmatprep.subr.mxu0 %v3406
        %3542 = vmatpush1.msra.mxu0 %v3405
        %3543 = vmatprep.subr.mxu0 %v3408
        %3544 = vmatpush1.msra.mxu0 %v3407
        %3545 = vmatprep.subr.mxu0 %v3410
        %3546 = vmatpush1.msra.mxu0 %v3409
        %3547 = vmatprep.subr.mxu0 %v3412
        %3548 = vmatpush1.msra.mxu0 %v3411
        %3549 = vmatprep.subr.mxu0 %v3414
        %3550 = vmatpush1.msra.mxu0 %v3413
        %3551 = vmatprep.subr.mxu0 %v3416
        %3552 = vmatpush1.msra.mxu0 %v3415
        %3553 = vmatprep.subr.mxu0 %v3418
        %3554 = vmatpush1.msra.mxu0 %v3417
        %3555 = vmatprep.subr.mxu0 %v3420
        %3556 = vmatpush1.msra.mxu0 %v3419
        %3557 = vmatprep.subr.mxu0 %v3422
        %3558 = vmatpush1.msra.mxu0 %v3421
        %3559 = vmatprep.subr.mxu0 %v3424
        %3560 = vmatpush1.msra.mxu0 %v3423
        %3561 = vmatprep.subr.mxu0 %v3426
        %3562 = vmatpush1.msra.mxu0 %v3425
        %3563 = vmatprep.subr.mxu0 %v3428
        %3564 = vmatpush1.msra.mxu0 %v3427
        %3565 = vmatprep.subr.mxu0 %v3430
        %3566 = vmatpush1.msra.mxu0 %v3429
        %3567 = vmatprep.subr.mxu0 %v3432
        %3568 = vmatpush1.msra.mxu0 %v3431
        %3569 = vmatprep.subr.mxu0 %v3434
        %3570 = vmatpush1.msra.mxu0 %v3433
        %3571 = vmatprep.subr.mxu0 %v3436
        %3572 = vmatpush1.msra.mxu0 %v3435
        %3573 = vmatprep.subr.mxu0 %v3438
        %3574 = vmatpush1.msra.mxu0 %v3437
        %3575 = vmatprep.subr.mxu0 %v3440
        %3576 = vmatpush1.msra.mxu0 %v3439
        %3577 = vmatprep.subr.mxu0 %v3442
        %3578 = vmatpush1.msra.mxu0 %v3441
        %3579 = vmatprep.subr.mxu0 %v3444
        %3580 = vmatpush1.msra.mxu0 %v3443
        %3581 = vmatprep.subr.mxu0 %v3446
        %3582 = vmatpush1.msra.mxu0 %v3445
        %3583 = vmatprep.subr.mxu0 %v3448
        %3584 = vmatpush1.msra.mxu0 %v3447
        %3585 = vmatprep.subr.mxu0 %v3450
        %3586 = vmatpush1.msra.mxu0 %v3449
        %3587 = vmatprep.subr.mxu0 %v3452
        %3588 = vmatpush1.msra.mxu0 %v3451
        %3589 = vmatprep.subr.mxu0 %v3454
        %3590 = vmatpush1.msra.mxu0 %v3453
        %3591 = vmatprep.mubr.f32.mxu0 %v3380
        %3592 = vmatmul.mubr.f32.gmra.mrb[0].mxu0 %v3379
        %v3593 = vpop.f32.mrb[0].mxu0
        %v3594 = vadd.f32 %v3505, %v3593
        %v3595 = vpop.f32.mrb[0].mxu0
        %v3596 = vadd.f32 %v3505, %v3595
        %3597 = vmatprep.mubr.f32.mxu0 %v3384
        %3598 = vmatmul.mubr.f32.gmra.mrb[0].mxu0 %v3383
        %v3599 = vpop.f32.mrb[0].mxu0
        %v3600 = vadd.f32 %v3510, %v3599
        %v3601 = vpop.f32.mrb[0].mxu0
        %v3602 = vadd.f32 %v3510, %v3601
        %3603 = vmatprep.mubr.f32.mxu0 %v3388
        %3604 = vmatmul.mubr.f32.gmra.mrb[0].mxu0 %v3387
        %v3605 = vpop.f32.mrb[0].mxu0
        %v3606 = vadd.f32 %v3515, %v3605
        %v3607 = vpop.f32.mrb[0].mxu0
        %v3608 = vadd.f32 %v3515, %v3607
        %3609 = vdwg.mxu0
        %3610 = vmatprep.subr.mxu0 %v3456
        %3611 = vmatpush1.msra.mxu0 %v3455
        %3612 = vmatprep.subr.mxu0 %v3458
        %3613 = vmatpush1.msra.mxu0 %v3457
        %3614 = vmatprep.subr.mxu0 %v3460
        %3615 = vmatpush1.msra.mxu0 %v3459
        %3616 = vmatprep.subr.mxu0 %v3462
        %3617 = vmatpush1.msra.mxu0 %v3461
        %3618 = vmatprep.subr.mxu0 %v3464
        %3619 = vmatpush1.msra.mxu0 %v3463
        %3620 = vmatprep.subr.mxu0 %v3466
        %3621 = vmatpush1.msra.mxu0 %v3465
        %3622 = vmatprep.subr.mxu0 %v3468
        %3623 = vmatpush1.msra.mxu0 %v3467
        %3624 = vmatprep.subr.mxu0 %v3470
        %3625 = vmatpush1.msra.mxu0 %v3469
        %3626 = vmatprep.subr.mxu0 %v3472
        %3627 = vmatpush1.msra.mxu0 %v3471
        %3628 = vmatprep.subr.mxu0 %v3474
        %3629 = vmatpush1.msra.mxu0 %v3473
        %3630 = vmatprep.subr.mxu0 %v3476
        %3631 = vmatpush1.msra.mxu0 %v3475
        %3632 = vmatprep.subr.mxu0 %v3478
        %3633 = vmatpush1.msra.mxu0 %v3477
        %3634 = vmatprep.subr.mxu0 %v3480
        %3635 = vmatpush1.msra.mxu0 %v3479
        %3636 = vmatprep.subr.mxu0 %v3482
        %3637 = vmatpush1.msra.mxu0 %v3481
        %3638 = vmatprep.subr.mxu0 %v3484
        %3639 = vmatpush1.msra.mxu0 %v3483
        %3640 = vmatprep.subr.mxu0 %v3486
        %3641 = vmatpush1.msra.mxu0 %v3485
        %3642 = vmatprep.subr.mxu0 %v3488
        %3643 = vmatpush1.msra.mxu0 %v3487
        %3644 = vmatprep.subr.mxu0 %v3490
        %3645 = vmatpush1.msra.mxu0 %v3489
        %3646 = vmatprep.subr.mxu0 %v3492
        %3647 = vmatpush1.msra.mxu0 %v3491
        %3648 = vmatprep.subr.mxu0 %v3494
        %3649 = vmatpush1.msra.mxu0 %v3493
        %3650 = vmatprep.subr.mxu0 %v3496
        %3651 = vmatpush1.msra.mxu0 %v3495
        %3652 = vmatprep.subr.mxu0 %v3498
        %3653 = vmatpush1.msra.mxu0 %v3497
        %3654 = vmatprep.subr.mxu0 0.0
        %3655 = vmatpush1.msra.mxu0 0.0
        %3656 = vmatprep.subr.mxu0 0.0
        %3657 = vmatpush1.msra.mxu0 0.0
        %3658 = vmatprep.subr.mxu0 0.0
        %3659 = vmatpush1.msra.mxu0 0.0
        %3660 = vmatprep.subr.mxu0 0.0
        %3661 = vmatpush1.msra.mxu0 0.0
        %3662 = vmatprep.subr.mxu0 0.0
        %3663 = vmatpush1.msra.mxu0 0.0
        %3664 = vmatprep.subr.mxu0 0.0
        %3665 = vmatpush1.msra.mxu0 0.0
        %3666 = vmatprep.subr.mxu0 0.0
        %3667 = vmatpush1.msra.mxu0 0.0
        %3668 = vmatprep.subr.mxu0 0.0
        %3669 = vmatpush1.msra.mxu0 0.0
        %3670 = vmatprep.subr.mxu0 0.0
        %3671 = vmatpush1.msra.mxu0 0.0
        %3672 = vmatprep.subr.mxu0 0.0
        %3673 = vmatpush1.msra.mxu0 0.0
        %3674 = vmatprep.mubr.f32.mxu0 %v3519
        %3675 = vmatmul.mubr.f32.gmra.mrb[0].mxu0 %v3381
        %v3676 = vpop.f32.mrb[0].mxu0
        %v3677 = vadd.f32 %v3594, %v3676
        %v3678 = vpop.f32.mrb[0].mxu0
        %v3679 = vadd.f32 %v3596, %v3678
        %3680 = vmatprep.mubr.f32.mxu0 %v3522
        %3681 = vmatmul.mubr.f32.gmra.mrb[0].mxu0 %v3385
        %v3682 = vpop.f32.mrb[0].mxu0
        %v3683 = vadd.f32 %v3600, %v3682
        %v3684 = vpop.f32.mrb[0].mxu0
        %v3685 = vadd.f32 %v3602, %v3684
        %3686 = vmatprep.mubr.f32.mxu0 %v3525
        %3687 = vmatmul.mubr.f32.gmra.mrb[0].mxu0 %v3389
        %v3688 = vpop.f32.mrb[0].mxu0
        %v3689 = vadd.f32 %v3606, %v3688
        %v3690 = vpop.f32.mrb[0].mxu0
        %v3691 = vadd.f32 %v3608, %v3690
        %3692 = vdwg.mxu0
        %v3693 = vmax.f32 %v3677, 0.0
        %v3694 = vmax.f32 %v3679, 0.0
        %v3695 = vmax.f32 %v3683, 0.0
        %v3696 = vmax.f32 %v3685, 0.0
        %v3697 = vmax.f32 %v3689, 0.0
        %v3698 = vmax.f32 %v3691, 0.0
        %v3699 = vmax.f32 %v3693, %v3695
        %v3700 = vmax.f32 %v3694, %v3696
        %v3701 = vmax.f32 %v3699, %v3697
        %v3702 = vmax.f32 %v3700, %v3698
        %v3703 = vld [vmem:[%s5] sm:$0xff]
        %v3704 = vld [vmem:[%s5 + $0x8] sm:$0xff]
        %v3705 = vld [vmem:[%s5 + $0x10] sm:$0xff]
        %v3706 = vld [vmem:[%s5 + $0x18] sm:$0xff]
        %v3707 = vld [vmem:[%s5 + $0x20] sm:$0xff]
        %v3708 = vld [vmem:[%s5 + $0x28] sm:$0xff]
        %v3709 = vld [vmem:[%s5 + $0x30] sm:$0xff]
        %v3710 = vld [vmem:[%s5 + $0x38] sm:$0xff]
        %v3711 = vld [vmem:[%s5 + $0x40] sm:$0xff]
        %v3712 = vld [vmem:[%s5 + $0x48] sm:$0xff]
        %v3713 = vld [vmem:[%s5 + $0x50] sm:$0xff]
        %v3714 = vld [vmem:[%s5 + $0x58] sm:$0xff]
        %v3715 = vld [vmem:[%s5 + $0x60] sm:$0xff]
        %v3716 = vld [vmem:[%s5 + $0x68] sm:$0xff]
        %v3717 = vld [vmem:[%s5 + $0x70] sm:$0xff]
        %v3718 = vld [vmem:[%s5 + $0x78] sm:$0xff]
        %v3719 = vld [vmem:[%s5 + $0x80] sm:$0xff]
        %v3720 = vld [vmem:[%s5 + $0x88] sm:$0xff]
        %v3721 = vld [vmem:[%s5 + $0x90] sm:$0xff]
        %v3722 = vld [vmem:[%s5 + $0x98] sm:$0x3f]
        %s3723 = scalar_lea.vmem %s5, 160
        %v3724 = vld [vmem:[%s3723] sm:$0xff]
        %v3725 = vld [vmem:[%s3723 + $0x8] sm:$0xff]
        %v3726 = vld [vmem:[%s3723 + $0x10] sm:$0xff]
        %v3727 = vld [vmem:[%s3723 + $0x18] sm:$0xff]
        %v3728 = vld [vmem:[%s3723 + $0x20] sm:$0xff]
        %v3729 = vld [vmem:[%s3723 + $0x28] sm:$0xff]
        %v3730 = vld [vmem:[%s3723 + $0x30] sm:$0xff]
        %v3731 = vld [vmem:[%s3723 + $0x38] sm:$0xff]
        %v3732 = vld [vmem:[%s3723 + $0x40] sm:$0xff]
        %v3733 = vld [vmem:[%s3723 + $0x48] sm:$0xff]
        %v3734 = vld [vmem:[%s3723 + $0x50] sm:$0xff]
        %v3735 = vld [vmem:[%s3723 + $0x58] sm:$0xff]
        %v3736 = vld [vmem:[%s3723 + $0x60] sm:$0xff]
        %v3737 = vld [vmem:[%s3723 + $0x68] sm:$0xff]
        %v3738 = vld [vmem:[%s3723 + $0x70] sm:$0xff]
        %v3739 = vld [vmem:[%s3723 + $0x78] sm:$0xff]
        %v3740 = vld [vmem:[%s3723 + $0x80] sm:$0xff]
        %v3741 = vld [vmem:[%s3723 + $0x88] sm:$0xff]
        %v3742 = vld [vmem:[%s3723 + $0x90] sm:$0xff]
        %v3743 = vld [vmem:[%s3723 + $0x98] sm:$0x3f]
        %v3746 = vrot.slane %v3701, 1
        %v3747 = vrot.slane %v3702, 1
        %v3749 = vsel %vm2915, %v3747, 0
        %vm3751 = vcmask 1045504
        %v3753 = vsel %vm3751, %v3743, 0
        %3755 = vmatprep.subr.mxu0 0.0
        %3756 = vmatpush1.msra.mxu0 %v3724
        %3757 = vmatprep.subr.mxu0 0.0
        %3758 = vmatpush1.msra.mxu0 %v3725
        %3759 = vmatprep.subr.mxu0 0.0
        %3760 = vmatpush1.msra.mxu0 %v3726
        %3761 = vmatprep.subr.mxu0 0.0
        %3762 = vmatpush1.msra.mxu0 %v3727
        %3763 = vmatprep.subr.mxu0 0.0
        %3764 = vmatpush1.msra.mxu0 %v3728
        %3765 = vmatprep.subr.mxu0 0.0
        %3766 = vmatpush1.msra.mxu0 %v3729
        %3767 = vmatprep.subr.mxu0 0.0
        %3768 = vmatpush1.msra.mxu0 %v3730
        %3769 = vmatprep.subr.mxu0 0.0
        %3770 = vmatpush1.msra.mxu0 %v3731
        %3771 = vmatprep.subr.mxu0 0.0
        %3772 = vmatpush1.msra.mxu0 %v3732
        %3773 = vmatprep.subr.mxu0 0.0
        %3774 = vmatpush1.msra.mxu0 %v3733
        %3775 = vmatprep.subr.mxu0 0.0
        %3776 = vmatpush1.msra.mxu0 %v3734
        %3777 = vmatprep.subr.mxu0 0.0
        %3778 = vmatpush1.msra.mxu0 %v3735
        %3779 = vmatprep.subr.mxu0 0.0
        %3780 = vmatpush1.msra.mxu0 %v3736
        %3781 = vmatprep.subr.mxu0 0.0
        %3782 = vmatpush1.msra.mxu0 %v3737
        %3783 = vmatprep.subr.mxu0 0.0
        %3784 = vmatpush1.msra.mxu0 %v3738
        %3785 = vmatprep.subr.mxu0 0.0
        %3786 = vmatpush1.msra.mxu0 %v3739
        %3787 = vmatprep.subr.mxu0 0.0
        %3788 = vmatpush1.msra.mxu0 %v3740
        %3789 = vmatprep.subr.mxu0 0.0
        %3790 = vmatpush1.msra.mxu0 %v3741
        %3791 = vmatprep.subr.mxu0 0.0
        %3792 = vmatpush1.msra.mxu0 %v3742
        %3793 = vmatprep.subr.mxu0 0.0
        %3794 = vmatpush1.msra.mxu0 %v3753
        %3795 = vmatprep.subr.mxu0 0.0
        %3796 = vmatpush1.msra.mxu0 0.0
        %3797 = vmatprep.subr.mxu0 0.0
        %3798 = vmatpush1.msra.mxu0 0.0
        %3799 = vmatprep.subr.mxu0 0.0
        %3800 = vmatpush1.msra.mxu0 0.0
        %3801 = vmatprep.subr.mxu0 0.0
        %3802 = vmatpush1.msra.mxu0 0.0
        %3803 = vmatprep.subr.mxu0 0.0
        %3804 = vmatpush1.msra.mxu0 0.0
        %3805 = vmatprep.subr.mxu0 0.0
        %3806 = vmatpush1.msra.mxu0 0.0
        %3807 = vmatprep.subr.mxu0 0.0
        %3808 = vmatpush1.msra.mxu0 0.0
        %3809 = vmatprep.subr.mxu0 0.0
        %3810 = vmatpush1.msra.mxu0 0.0
        %3811 = vmatprep.subr.mxu0 0.0
        %3812 = vmatpush1.msra.mxu0 0.0
        %3813 = vmatprep.subr.mxu0 0.0
        %3814 = vmatpush1.msra.mxu0 0.0
        %3815 = vmatprep.subr.mxu0 0.0
        %3816 = vmatpush1.msra.mxu0 0.0
        %3817 = vmatprep.subr.mxu0 0.0
        %3818 = vmatpush1.msra.mxu0 0.0
        %3819 = vmatprep.mubr.f32.mxu0 %v3749
        %3820 = vmatmul.mubr.f32.gmra.mrb[0].mxu0 %v3746
        %v3821 = vpop.f32.mrb[0].mxu0
        %v3822 = vadd.f32 0.0, %v3821
        %v3823 = vpop.f32.mrb[0].mxu0
        %3824 = vdwg.mxu0
        %v3825 = vsel %vm2915, %v3702, 0
        %v3828 = vsel %vm3751, %v3722, 0
        %3830 = vmatprep.subr.mxu0 0.0
        %3831 = vmatpush1.msra.mxu0 %v3703
        %3832 = vmatprep.subr.mxu0 0.0
        %3833 = vmatpush1.msra.mxu0 %v3704
        %3834 = vmatprep.subr.mxu0 0.0
        %3835 = vmatpush1.msra.mxu0 %v3705
        %3836 = vmatprep.subr.mxu0 0.0
        %3837 = vmatpush1.msra.mxu0 %v3706
        %3838 = vmatprep.subr.mxu0 0.0
        %3839 = vmatpush1.msra.mxu0 %v3707
        %3840 = vmatprep.subr.mxu0 0.0
        %3841 = vmatpush1.msra.mxu0 %v3708
        %3842 = vmatprep.subr.mxu0 0.0
        %3843 = vmatpush1.msra.mxu0 %v3709
        %3844 = vmatprep.subr.mxu0 0.0
        %3845 = vmatpush1.msra.mxu0 %v3710
        %3846 = vmatprep.subr.mxu0 0.0
        %3847 = vmatpush1.msra.mxu0 %v3711
        %3848 = vmatprep.subr.mxu0 0.0
        %3849 = vmatpush1.msra.mxu0 %v3712
        %3850 = vmatprep.subr.mxu0 0.0
        %3851 = vmatpush1.msra.mxu0 %v3713
        %3852 = vmatprep.subr.mxu0 0.0
        %3853 = vmatpush1.msra.mxu0 %v3714
        %3854 = vmatprep.subr.mxu0 0.0
        %3855 = vmatpush1.msra.mxu0 %v3715
        %3856 = vmatprep.subr.mxu0 0.0
        %3857 = vmatpush1.msra.mxu0 %v3716
        %3858 = vmatprep.subr.mxu0 0.0
        %3859 = vmatpush1.msra.mxu0 %v3717
        %3860 = vmatprep.subr.mxu0 0.0
        %3861 = vmatpush1.msra.mxu0 %v3718
        %3862 = vmatprep.subr.mxu0 0.0
        %3863 = vmatpush1.msra.mxu0 %v3719
        %3864 = vmatprep.subr.mxu0 0.0
        %3865 = vmatpush1.msra.mxu0 %v3720
        %3866 = vmatprep.subr.mxu0 0.0
        %3867 = vmatpush1.msra.mxu0 %v3721
        %3868 = vmatprep.subr.mxu0 0.0
        %3869 = vmatpush1.msra.mxu0 %v3828
        %3870 = vmatprep.subr.mxu0 0.0
        %3871 = vmatpush1.msra.mxu0 0.0
        %3872 = vmatprep.subr.mxu0 0.0
        %3873 = vmatpush1.msra.mxu0 0.0
        %3874 = vmatprep.subr.mxu0 0.0
        %3875 = vmatpush1.msra.mxu0 0.0
        %3876 = vmatprep.subr.mxu0 0.0
        %3877 = vmatpush1.msra.mxu0 0.0
        %3878 = vmatprep.subr.mxu0 0.0
        %3879 = vmatpush1.msra.mxu0 0.0
        %3880 = vmatprep.subr.mxu0 0.0
        %3881 = vmatpush1.msra.mxu0 0.0
        %3882 = vmatprep.subr.mxu0 0.0
        %3883 = vmatpush1.msra.mxu0 0.0
        %3884 = vmatprep.subr.mxu0 0.0
        %3885 = vmatpush1.msra.mxu0 0.0
        %3886 = vmatprep.subr.mxu0 0.0
        %3887 = vmatpush1.msra.mxu0 0.0
        %3888 = vmatprep.subr.mxu0 0.0
        %3889 = vmatpush1.msra.mxu0 0.0
        %3890 = vmatprep.subr.mxu0 0.0
        %3891 = vmatpush1.msra.mxu0 0.0
        %3892 = vmatprep.subr.mxu0 0.0
        %3893 = vmatpush1.msra.mxu0 0.0
        %3894 = vmatprep.mubr.f32.mxu0 %v3825
        %3895 = vmatmul.mubr.f32.gmra.mrb[0].mxu0 %v3701
        %v3896 = vpop.f32.mrb[0].mxu0
        %v3897 = vadd.f32 %v3822, %v3896
        %v3898 = vpop.f32.mrb[0].mxu0
        %3899 = vdwg.mxu0
        %s3900 = scalar_lea.vmem %s5, 320
        %v3901 = vld [vmem:[%s3900] sm:$0xff]
        %v3902 = vld [vmem:[%s3900 + $0x8] sm:$0xff]
        %v3903 = vld [vmem:[%s3900 + $0x10] sm:$0xff]
        %v3904 = vld [vmem:[%s3900 + $0x18] sm:$0xff]
        %v3905 = vld [vmem:[%s3900 + $0x20] sm:$0xff]
        %v3906 = vld [vmem:[%s3900 + $0x28] sm:$0xff]
        %v3907 = vld [vmem:[%s3900 + $0x30] sm:$0xff]
        %v3908 = vld [vmem:[%s3900 + $0x38] sm:$0xff]
        %v3909 = vld [vmem:[%s3900 + $0x40] sm:$0xff]
        %v3910 = vld [vmem:[%s3900 + $0x48] sm:$0xff]
        %v3911 = vld [vmem:[%s3900 + $0x50] sm:$0xff]
        %v3912 = vld [vmem:[%s3900 + $0x58] sm:$0xff]
        %v3913 = vld [vmem:[%s3900 + $0x60] sm:$0xff]
        %v3914 = vld [vmem:[%s3900 + $0x68] sm:$0xff]
        %v3915 = vld [vmem:[%s3900 + $0x70] sm:$0xff]
        %v3916 = vld [vmem:[%s3900 + $0x78] sm:$0xff]
        %v3917 = vld [vmem:[%s3900 + $0x80] sm:$0xff]
        %v3918 = vld [vmem:[%s3900 + $0x88] sm:$0xff]
        %v3919 = vld [vmem:[%s3900 + $0x90] sm:$0xff]
        %v3920 = vld [vmem:[%s3900 + $0x98] sm:$0x3f]
        %v3921 = vrot.slane %v3701, 2
        %v3922 = vrot.slane %v3702, 2
        %v3924 = vsel %vm2915, %v3922, 0
        %v3927 = vsel %vm3751, %v3920, 0
        %3929 = vmatprep.subr.mxu0 0.0
        %3930 = vmatpush1.msra.mxu0 %v3901
        %3931 = vmatprep.subr.mxu0 0.0
        %3932 = vmatpush1.msra.mxu0 %v3902
        %3933 = vmatprep.subr.mxu0 0.0
        %3934 = vmatpush1.msra.mxu0 %v3903
        %3935 = vmatprep.subr.mxu0 0.0
        %3936 = vmatpush1.msra.mxu0 %v3904
        %3937 = vmatprep.subr.mxu0 0.0
        %3938 = vmatpush1.msra.mxu0 %v3905
        %3939 = vmatprep.subr.mxu0 0.0
        %3940 = vmatpush1.msra.mxu0 %v3906
        %3941 = vmatprep.subr.mxu0 0.0
        %3942 = vmatpush1.msra.mxu0 %v3907
        %3943 = vmatprep.subr.mxu0 0.0
        %3944 = vmatpush1.msra.mxu0 %v3908
        %3945 = vmatprep.subr.mxu0 0.0
        %3946 = vmatpush1.msra.mxu0 %v3909
        %3947 = vmatprep.subr.mxu0 0.0
        %3948 = vmatpush1.msra.mxu0 %v3910
        %3949 = vmatprep.subr.mxu0 0.0
        %3950 = vmatpush1.msra.mxu0 %v3911
        %3951 = vmatprep.subr.mxu0 0.0
        %3952 = vmatpush1.msra.mxu0 %v3912
        %3953 = vmatprep.subr.mxu0 0.0
        %3954 = vmatpush1.msra.mxu0 %v3913
        %3955 = vmatprep.subr.mxu0 0.0
        %3956 = vmatpush1.msra.mxu0 %v3914
        %3957 = vmatprep.subr.mxu0 0.0
        %3958 = vmatpush1.msra.mxu0 %v3915
        %3959 = vmatprep.subr.mxu0 0.0
        %3960 = vmatpush1.msra.mxu0 %v3916
        %3961 = vmatprep.subr.mxu0 0.0
        %3962 = vmatpush1.msra.mxu0 %v3917
        %3963 = vmatprep.subr.mxu0 0.0
        %3964 = vmatpush1.msra.mxu0 %v3918
        %3965 = vmatprep.subr.mxu0 0.0
        %3966 = vmatpush1.msra.mxu0 %v3919
        %3967 = vmatprep.subr.mxu0 0.0
        %3968 = vmatpush1.msra.mxu0 %v3927
        %3969 = vmatprep.subr.mxu0 0.0
        %3970 = vmatpush1.msra.mxu0 0.0
        %3971 = vmatprep.subr.mxu0 0.0
        %3972 = vmatpush1.msra.mxu0 0.0
        %3973 = vmatprep.subr.mxu0 0.0
        %3974 = vmatpush1.msra.mxu0 0.0
        %3975 = vmatprep.subr.mxu0 0.0
        %3976 = vmatpush1.msra.mxu0 0.0
        %3977 = vmatprep.subr.mxu0 0.0
        %3978 = vmatpush1.msra.mxu0 0.0
        %3979 = vmatprep.subr.mxu0 0.0
        %3980 = vmatpush1.msra.mxu0 0.0
        %3981 = vmatprep.subr.mxu0 0.0
        %3982 = vmatpush1.msra.mxu0 0.0
        %3983 = vmatprep.subr.mxu0 0.0
        %3984 = vmatpush1.msra.mxu0 0.0
        %3985 = vmatprep.subr.mxu0 0.0
        %3986 = vmatpush1.msra.mxu0 0.0
        %3987 = vmatprep.subr.mxu0 0.0
        %3988 = vmatpush1.msra.mxu0 0.0
        %3989 = vmatprep.subr.mxu0 0.0
        %3990 = vmatpush1.msra.mxu0 0.0
        %3991 = vmatprep.subr.mxu0 0.0
        %3992 = vmatpush1.msra.mxu0 0.0
        %3993 = vmatprep.mubr.f32.mxu0 %v3924
        %3994 = vmatmul.mubr.f32.gmra.mrb[0].mxu0 %v3921
        %v3995 = vpop.f32.mrb[0].mxu0
        %v3996 = vadd.f32 0.0, %v3995
        %v3997 = vpop.f32.mrb[0].mxu0
        %3998 = vdwg.mxu0
        %v3999 = vadd.f32 %v3897, %v3996
        %s4000 = scalar_lea.vmem %s5, 480
        %v4001 = vld [vmem:[%s4000] sm:$0xff]
        %v4002 = vld [vmem:[%s4000 + $0x8] sm:$0xff]
        %v4003 = vld [vmem:[%s4000 + $0x10] sm:$0xff]
        %v4004 = vld [vmem:[%s4000 + $0x18] sm:$0xff]
        %v4005 = vld [vmem:[%s4000 + $0x20] sm:$0xff]
        %v4006 = vld [vmem:[%s4000 + $0x28] sm:$0xff]
        %v4007 = vld [vmem:[%s4000 + $0x30] sm:$0xff]
        %v4008 = vld [vmem:[%s4000 + $0x38] sm:$0xff]
        %v4009 = vld [vmem:[%s4000 + $0x40] sm:$0xff]
        %v4010 = vld [vmem:[%s4000 + $0x48] sm:$0xff]
        %v4011 = vld [vmem:[%s4000 + $0x50] sm:$0xff]
        %v4012 = vld [vmem:[%s4000 + $0x58] sm:$0xff]
        %v4013 = vld [vmem:[%s4000 + $0x60] sm:$0xff]
        %v4014 = vld [vmem:[%s4000 + $0x68] sm:$0xff]
        %v4015 = vld [vmem:[%s4000 + $0x70] sm:$0xff]
        %v4016 = vld [vmem:[%s4000 + $0x78] sm:$0xff]
        %v4017 = vld [vmem:[%s4000 + $0x80] sm:$0xff]
        %v4018 = vld [vmem:[%s4000 + $0x88] sm:$0xff]
        %v4019 = vld [vmem:[%s4000 + $0x90] sm:$0xff]
        %v4020 = vld [vmem:[%s4000 + $0x98] sm:$0x3f]
        %v4021 = vrot.slane %v3701, 3
        %v4022 = vrot.slane %v3702, 3
        %v4024 = vsel %vm2915, %v4022, 0
        %v4027 = vsel %vm3751, %v4020, 0
        %4029 = vmatprep.subr.mxu0 0.0
        %4030 = vmatpush1.msra.mxu0 %v4001
        %4031 = vmatprep.subr.mxu0 0.0
        %4032 = vmatpush1.msra.mxu0 %v4002
        %4033 = vmatprep.subr.mxu0 0.0
        %4034 = vmatpush1.msra.mxu0 %v4003
        %4035 = vmatprep.subr.mxu0 0.0
        %4036 = vmatpush1.msra.mxu0 %v4004
        %4037 = vmatprep.subr.mxu0 0.0
        %4038 = vmatpush1.msra.mxu0 %v4005
        %4039 = vmatprep.subr.mxu0 0.0
        %4040 = vmatpush1.msra.mxu0 %v4006
        %4041 = vmatprep.subr.mxu0 0.0
        %4042 = vmatpush1.msra.mxu0 %v4007
        %4043 = vmatprep.subr.mxu0 0.0
        %4044 = vmatpush1.msra.mxu0 %v4008
        %4045 = vmatprep.subr.mxu0 0.0
        %4046 = vmatpush1.msra.mxu0 %v4009
        %4047 = vmatprep.subr.mxu0 0.0
        %4048 = vmatpush1.msra.mxu0 %v4010
        %4049 = vmatprep.subr.mxu0 0.0
        %4050 = vmatpush1.msra.mxu0 %v4011
        %4051 = vmatprep.subr.mxu0 0.0
        %4052 = vmatpush1.msra.mxu0 %v4012
        %4053 = vmatprep.subr.mxu0 0.0
        %4054 = vmatpush1.msra.mxu0 %v4013
        %4055 = vmatprep.subr.mxu0 0.0
        %4056 = vmatpush1.msra.mxu0 %v4014
        %4057 = vmatprep.subr.mxu0 0.0
        %4058 = vmatpush1.msra.mxu0 %v4015
        %4059 = vmatprep.subr.mxu0 0.0
        %4060 = vmatpush1.msra.mxu0 %v4016
        %4061 = vmatprep.subr.mxu0 0.0
        %4062 = vmatpush1.msra.mxu0 %v4017
        %4063 = vmatprep.subr.mxu0 0.0
        %4064 = vmatpush1.msra.mxu0 %v4018
        %4065 = vmatprep.subr.mxu0 0.0
        %4066 = vmatpush1.msra.mxu0 %v4019
        %4067 = vmatprep.subr.mxu0 0.0
        %4068 = vmatpush1.msra.mxu0 %v4027
        %4069 = vmatprep.subr.mxu0 0.0
        %4070 = vmatpush1.msra.mxu0 0.0
        %4071 = vmatprep.subr.mxu0 0.0
        %4072 = vmatpush1.msra.mxu0 0.0
        %4073 = vmatprep.subr.mxu0 0.0
        %4074 = vmatpush1.msra.mxu0 0.0
        %4075 = vmatprep.subr.mxu0 0.0
        %4076 = vmatpush1.msra.mxu0 0.0
        %4077 = vmatprep.subr.mxu0 0.0
        %4078 = vmatpush1.msra.mxu0 0.0
        %4079 = vmatprep.subr.mxu0 0.0
        %4080 = vmatpush1.msra.mxu0 0.0
        %4081 = vmatprep.subr.mxu0 0.0
        %4082 = vmatpush1.msra.mxu0 0.0
        %4083 = vmatprep.subr.mxu0 0.0
        %4084 = vmatpush1.msra.mxu0 0.0
        %4085 = vmatprep.subr.mxu0 0.0
        %4086 = vmatpush1.msra.mxu0 0.0
        %4087 = vmatprep.subr.mxu0 0.0
        %4088 = vmatpush1.msra.mxu0 0.0
        %4089 = vmatprep.subr.mxu0 0.0
        %4090 = vmatpush1.msra.mxu0 0.0
        %4091 = vmatprep.subr.mxu0 0.0
        %4092 = vmatpush1.msra.mxu0 0.0
        %4093 = vmatprep.mubr.f32.mxu0 %v4024
        %4094 = vmatmul.mubr.f32.gmra.mrb[0].mxu0 %v4021
        %v4095 = vpop.f32.mrb[0].mxu0
        %v4096 = vadd.f32 0.0, %v4095
        %v4097 = vpop.f32.mrb[0].mxu0
        %4098 = vdwg.mxu0
        %v4099 = vadd.f32 %v3999, %v4096
        %s4100 = scalar_lea.vmem %s5, 640
        %v4101 = vld [vmem:[%s4100] sm:$0xff]
        %v4102 = vld [vmem:[%s4100 + $0x8] sm:$0xff]
        %v4103 = vld [vmem:[%s4100 + $0x10] sm:$0xff]
        %v4104 = vld [vmem:[%s4100 + $0x18] sm:$0xff]
        %v4105 = vld [vmem:[%s4100 + $0x20] sm:$0xff]
        %v4106 = vld [vmem:[%s4100 + $0x28] sm:$0xff]
        %v4107 = vld [vmem:[%s4100 + $0x30] sm:$0xff]
        %v4108 = vld [vmem:[%s4100 + $0x38] sm:$0xff]
        %v4109 = vld [vmem:[%s4100 + $0x40] sm:$0xff]
        %v4110 = vld [vmem:[%s4100 + $0x48] sm:$0xff]
        %v4111 = vld [vmem:[%s4100 + $0x50] sm:$0xff]
        %v4112 = vld [vmem:[%s4100 + $0x58] sm:$0xff]
        %v4113 = vld [vmem:[%s4100 + $0x60] sm:$0xff]
        %v4114 = vld [vmem:[%s4100 + $0x68] sm:$0xff]
        %v4115 = vld [vmem:[%s4100 + $0x70] sm:$0xff]
        %v4116 = vld [vmem:[%s4100 + $0x78] sm:$0xff]
        %v4117 = vld [vmem:[%s4100 + $0x80] sm:$0xff]
        %v4118 = vld [vmem:[%s4100 + $0x88] sm:$0xff]
        %v4119 = vld [vmem:[%s4100 + $0x90] sm:$0xff]
        %v4120 = vld [vmem:[%s4100 + $0x98] sm:$0x3f]
        %v4121 = vrot.slane %v3701, 4
        %v4122 = vrot.slane %v3702, 4
        %v4124 = vsel %vm2915, %v4122, 0
        %v4127 = vsel %vm3751, %v4120, 0
        %4129 = vmatprep.subr.mxu0 0.0
        %4130 = vmatpush1.msra.mxu0 %v4101
        %4131 = vmatprep.subr.mxu0 0.0
        %4132 = vmatpush1.msra.mxu0 %v4102
        %4133 = vmatprep.subr.mxu0 0.0
        %4134 = vmatpush1.msra.mxu0 %v4103
        %4135 = vmatprep.subr.mxu0 0.0
        %4136 = vmatpush1.msra.mxu0 %v4104
        %4137 = vmatprep.subr.mxu0 0.0
        %4138 = vmatpush1.msra.mxu0 %v4105
        %4139 = vmatprep.subr.mxu0 0.0
        %4140 = vmatpush1.msra.mxu0 %v4106
        %4141 = vmatprep.subr.mxu0 0.0
        %4142 = vmatpush1.msra.mxu0 %v4107
        %4143 = vmatprep.subr.mxu0 0.0
        %4144 = vmatpush1.msra.mxu0 %v4108
        %4145 = vmatprep.subr.mxu0 0.0
        %4146 = vmatpush1.msra.mxu0 %v4109
        %4147 = vmatprep.subr.mxu0 0.0
        %4148 = vmatpush1.msra.mxu0 %v4110
        %4149 = vmatprep.subr.mxu0 0.0
        %4150 = vmatpush1.msra.mxu0 %v4111
        %4151 = vmatprep.subr.mxu0 0.0
        %4152 = vmatpush1.msra.mxu0 %v4112
        %4153 = vmatprep.subr.mxu0 0.0
        %4154 = vmatpush1.msra.mxu0 %v4113
        %4155 = vmatprep.subr.mxu0 0.0
        %4156 = vmatpush1.msra.mxu0 %v4114
        %4157 = vmatprep.subr.mxu0 0.0
        %4158 = vmatpush1.msra.mxu0 %v4115
        %4159 = vmatprep.subr.mxu0 0.0
        %4160 = vmatpush1.msra.mxu0 %v4116
        %4161 = vmatprep.subr.mxu0 0.0
        %4162 = vmatpush1.msra.mxu0 %v4117
        %4163 = vmatprep.subr.mxu0 0.0
        %4164 = vmatpush1.msra.mxu0 %v4118
        %4165 = vmatprep.subr.mxu0 0.0
        %4166 = vmatpush1.msra.mxu0 %v4119
        %4167 = vmatprep.subr.mxu0 0.0
        %4168 = vmatpush1.msra.mxu0 %v4127
        %4169 = vmatprep.subr.mxu0 0.0
        %4170 = vmatpush1.msra.mxu0 0.0
        %4171 = vmatprep.subr.mxu0 0.0
        %4172 = vmatpush1.msra.mxu0 0.0
        %4173 = vmatprep.subr.mxu0 0.0
        %4174 = vmatpush1.msra.mxu0 0.0
        %4175 = vmatprep.subr.mxu0 0.0
        %4176 = vmatpush1.msra.mxu0 0.0
        %4177 = vmatprep.subr.mxu0 0.0
        %4178 = vmatpush1.msra.mxu0 0.0
        %4179 = vmatprep.subr.mxu0 0.0
        %4180 = vmatpush1.msra.mxu0 0.0
        %4181 = vmatprep.subr.mxu0 0.0
        %4182 = vmatpush1.msra.mxu0 0.0
        %4183 = vmatprep.subr.mxu0 0.0
        %4184 = vmatpush1.msra.mxu0 0.0
        %4185 = vmatprep.subr.mxu0 0.0
        %4186 = vmatpush1.msra.mxu0 0.0
        %4187 = vmatprep.subr.mxu0 0.0
        %4188 = vmatpush1.msra.mxu0 0.0
        %4189 = vmatprep.subr.mxu0 0.0
        %4190 = vmatpush1.msra.mxu0 0.0
        %4191 = vmatprep.subr.mxu0 0.0
        %4192 = vmatpush1.msra.mxu0 0.0
        %4193 = vmatprep.mubr.f32.mxu0 %v4124
        %4194 = vmatmul.mubr.f32.gmra.mrb[0].mxu0 %v4121
        %v4195 = vpop.f32.mrb[0].mxu0
        %v4196 = vadd.f32 0.0, %v4195
        %v4197 = vpop.f32.mrb[0].mxu0
        %4198 = vdwg.mxu0
        %v4199 = vadd.f32 %v4099, %v4196
        %s4200 = scalar_lea.vmem %s5, 800
        %v4201 = vld [vmem:[%s4200] sm:$0xff]
        %v4202 = vld [vmem:[%s4200 + $0x8] sm:$0xff]
        %v4203 = vld [vmem:[%s4200 + $0x10] sm:$0xff]
        %v4204 = vld [vmem:[%s4200 + $0x18] sm:$0xff]
        %v4205 = vld [vmem:[%s4200 + $0x20] sm:$0xff]
        %v4206 = vld [vmem:[%s4200 + $0x28] sm:$0xff]
        %v4207 = vld [vmem:[%s4200 + $0x30] sm:$0xff]
        %v4208 = vld [vmem:[%s4200 + $0x38] sm:$0xff]
        %v4209 = vld [vmem:[%s4200 + $0x40] sm:$0xff]
        %v4210 = vld [vmem:[%s4200 + $0x48] sm:$0xff]
        %v4211 = vld [vmem:[%s4200 + $0x50] sm:$0xff]
        %v4212 = vld [vmem:[%s4200 + $0x58] sm:$0xff]
        %v4213 = vld [vmem:[%s4200 + $0x60] sm:$0xff]
        %v4214 = vld [vmem:[%s4200 + $0x68] sm:$0xff]
        %v4215 = vld [vmem:[%s4200 + $0x70] sm:$0xff]
        %v4216 = vld [vmem:[%s4200 + $0x78] sm:$0xff]
        %v4217 = vld [vmem:[%s4200 + $0x80] sm:$0xff]
        %v4218 = vld [vmem:[%s4200 + $0x88] sm:$0xff]
        %v4219 = vld [vmem:[%s4200 + $0x90] sm:$0xff]
        %v4220 = vld [vmem:[%s4200 + $0x98] sm:$0x3f]
        %v4221 = vrot.slane %v3701, 5
        %v4222 = vrot.slane %v3702, 5
        %v4224 = vsel %vm2915, %v4222, 0
        %v4227 = vsel %vm3751, %v4220, 0
        %4229 = vmatprep.subr.mxu0 0.0
        %4230 = vmatpush1.msra.mxu0 %v4201
        %4231 = vmatprep.subr.mxu0 0.0
        %4232 = vmatpush1.msra.mxu0 %v4202
        %4233 = vmatprep.subr.mxu0 0.0
        %4234 = vmatpush1.msra.mxu0 %v4203
        %4235 = vmatprep.subr.mxu0 0.0
        %4236 = vmatpush1.msra.mxu0 %v4204
        %4237 = vmatprep.subr.mxu0 0.0
        %4238 = vmatpush1.msra.mxu0 %v4205
        %4239 = vmatprep.subr.mxu0 0.0
        %4240 = vmatpush1.msra.mxu0 %v4206
        %4241 = vmatprep.subr.mxu0 0.0
        %4242 = vmatpush1.msra.mxu0 %v4207
        %4243 = vmatprep.subr.mxu0 0.0
        %4244 = vmatpush1.msra.mxu0 %v4208
        %4245 = vmatprep.subr.mxu0 0.0
        %4246 = vmatpush1.msra.mxu0 %v4209
        %4247 = vmatprep.subr.mxu0 0.0
        %4248 = vmatpush1.msra.mxu0 %v4210
        %4249 = vmatprep.subr.mxu0 0.0
        %4250 = vmatpush1.msra.mxu0 %v4211
        %4251 = vmatprep.subr.mxu0 0.0
        %4252 = vmatpush1.msra.mxu0 %v4212
        %4253 = vmatprep.subr.mxu0 0.0
        %4254 = vmatpush1.msra.mxu0 %v4213
        %4255 = vmatprep.subr.mxu0 0.0
        %4256 = vmatpush1.msra.mxu0 %v4214
        %4257 = vmatprep.subr.mxu0 0.0
        %4258 = vmatpush1.msra.mxu0 %v4215
        %4259 = vmatprep.subr.mxu0 0.0
        %4260 = vmatpush1.msra.mxu0 %v4216
        %4261 = vmatprep.subr.mxu0 0.0
        %4262 = vmatpush1.msra.mxu0 %v4217
        %4263 = vmatprep.subr.mxu0 0.0
        %4264 = vmatpush1.msra.mxu0 %v4218
        %4265 = vmatprep.subr.mxu0 0.0
        %4266 = vmatpush1.msra.mxu0 %v4219
        %4267 = vmatprep.subr.mxu0 0.0
        %4268 = vmatpush1.msra.mxu0 %v4227
        %4269 = vmatprep.subr.mxu0 0.0
        %4270 = vmatpush1.msra.mxu0 0.0
        %4271 = vmatprep.subr.mxu0 0.0
        %4272 = vmatpush1.msra.mxu0 0.0
        %4273 = vmatprep.subr.mxu0 0.0
        %4274 = vmatpush1.msra.mxu0 0.0
        %4275 = vmatprep.subr.mxu0 0.0
        %4276 = vmatpush1.msra.mxu0 0.0
        %4277 = vmatprep.subr.mxu0 0.0
        %4278 = vmatpush1.msra.mxu0 0.0
        %4279 = vmatprep.subr.mxu0 0.0
        %4280 = vmatpush1.msra.mxu0 0.0
        %4281 = vmatprep.subr.mxu0 0.0
        %4282 = vmatpush1.msra.mxu0 0.0
        %4283 = vmatprep.subr.mxu0 0.0
        %4284 = vmatpush1.msra.mxu0 0.0
        %4285 = vmatprep.subr.mxu0 0.0
        %4286 = vmatpush1.msra.mxu0 0.0
        %4287 = vmatprep.subr.mxu0 0.0
        %4288 = vmatpush1.msra.mxu0 0.0
        %4289 = vmatprep.subr.mxu0 0.0
        %4290 = vmatpush1.msra.mxu0 0.0
        %4291 = vmatprep.subr.mxu0 0.0
        %4292 = vmatpush1.msra.mxu0 0.0
        %4293 = vmatprep.mubr.f32.mxu0 %v4224
        %4294 = vmatmul.mubr.f32.gmra.mrb[0].mxu0 %v4221
        %v4295 = vpop.f32.mrb[0].mxu0
        %v4296 = vadd.f32 0.0, %v4295
        %v4297 = vpop.f32.mrb[0].mxu0
        %4298 = vdwg.mxu0
        %v4299 = vadd.f32 %v4199, %v4296
        %s4300 = scalar_lea.vmem %s5, 960
        %v4301 = vld [vmem:[%s4300] sm:$0xff]
        %v4302 = vld [vmem:[%s4300 + $0x8] sm:$0xff]
        %v4303 = vld [vmem:[%s4300 + $0x10] sm:$0xff]
        %v4304 = vld [vmem:[%s4300 + $0x18] sm:$0xff]
        %v4305 = vld [vmem:[%s4300 + $0x20] sm:$0xff]
        %v4306 = vld [vmem:[%s4300 + $0x28] sm:$0xff]
        %v4307 = vld [vmem:[%s4300 + $0x30] sm:$0xff]
        %v4308 = vld [vmem:[%s4300 + $0x38] sm:$0xff]
        %v4309 = vld [vmem:[%s4300 + $0x40] sm:$0xff]
        %v4310 = vld [vmem:[%s4300 + $0x48] sm:$0xff]
        %v4311 = vld [vmem:[%s4300 + $0x50] sm:$0xff]
        %v4312 = vld [vmem:[%s4300 + $0x58] sm:$0xff]
        %v4313 = vld [vmem:[%s4300 + $0x60] sm:$0xff]
        %v4314 = vld [vmem:[%s4300 + $0x68] sm:$0xff]
        %v4315 = vld [vmem:[%s4300 + $0x70] sm:$0xff]
        %v4316 = vld [vmem:[%s4300 + $0x78] sm:$0xff]
        %v4317 = vld [vmem:[%s4300 + $0x80] sm:$0xff]
        %v4318 = vld [vmem:[%s4300 + $0x88] sm:$0xff]
        %v4319 = vld [vmem:[%s4300 + $0x90] sm:$0xff]
        %v4320 = vld [vmem:[%s4300 + $0x98] sm:$0x3f]
        %v4321 = vrot.slane %v3701, 6
        %v4322 = vrot.slane %v3702, 6
        %v4324 = vsel %vm2915, %v4322, 0
        %v4327 = vsel %vm3751, %v4320, 0
        %4329 = vmatprep.subr.mxu0 0.0
        %4330 = vmatpush1.msra.mxu0 %v4301
        %4331 = vmatprep.subr.mxu0 0.0
        %4332 = vmatpush1.msra.mxu0 %v4302
        %4333 = vmatprep.subr.mxu0 0.0
        %4334 = vmatpush1.msra.mxu0 %v4303
        %4335 = vmatprep.subr.mxu0 0.0
        %4336 = vmatpush1.msra.mxu0 %v4304
        %4337 = vmatprep.subr.mxu0 0.0
        %4338 = vmatpush1.msra.mxu0 %v4305
        %4339 = vmatprep.subr.mxu0 0.0
        %4340 = vmatpush1.msra.mxu0 %v4306
        %4341 = vmatprep.subr.mxu0 0.0
        %4342 = vmatpush1.msra.mxu0 %v4307
        %4343 = vmatprep.subr.mxu0 0.0
        %4344 = vmatpush1.msra.mxu0 %v4308
        %4345 = vmatprep.subr.mxu0 0.0
        %4346 = vmatpush1.msra.mxu0 %v4309
        %4347 = vmatprep.subr.mxu0 0.0
        %4348 = vmatpush1.msra.mxu0 %v4310
        %4349 = vmatprep.subr.mxu0 0.0
        %4350 = vmatpush1.msra.mxu0 %v4311
        %4351 = vmatprep.subr.mxu0 0.0
        %4352 = vmatpush1.msra.mxu0 %v4312
        %4353 = vmatprep.subr.mxu0 0.0
        %4354 = vmatpush1.msra.mxu0 %v4313
        %4355 = vmatprep.subr.mxu0 0.0
        %4356 = vmatpush1.msra.mxu0 %v4314
        %4357 = vmatprep.subr.mxu0 0.0
        %4358 = vmatpush1.msra.mxu0 %v4315
        %4359 = vmatprep.subr.mxu0 0.0
        %4360 = vmatpush1.msra.mxu0 %v4316
        %4361 = vmatprep.subr.mxu0 0.0
        %4362 = vmatpush1.msra.mxu0 %v4317
        %4363 = vmatprep.subr.mxu0 0.0
        %4364 = vmatpush1.msra.mxu0 %v4318
        %4365 = vmatprep.subr.mxu0 0.0
        %4366 = vmatpush1.msra.mxu0 %v4319
        %4367 = vmatprep.subr.mxu0 0.0
        %4368 = vmatpush1.msra.mxu0 %v4327
        %4369 = vmatprep.subr.mxu0 0.0
        %4370 = vmatpush1.msra.mxu0 0.0
        %4371 = vmatprep.subr.mxu0 0.0
        %4372 = vmatpush1.msra.mxu0 0.0
        %4373 = vmatprep.subr.mxu0 0.0
        %4374 = vmatpush1.msra.mxu0 0.0
        %4375 = vmatprep.subr.mxu0 0.0
        %4376 = vmatpush1.msra.mxu0 0.0
        %4377 = vmatprep.subr.mxu0 0.0
        %4378 = vmatpush1.msra.mxu0 0.0
        %4379 = vmatprep.subr.mxu0 0.0
        %4380 = vmatpush1.msra.mxu0 0.0
        %4381 = vmatprep.subr.mxu0 0.0
        %4382 = vmatpush1.msra.mxu0 0.0
        %4383 = vmatprep.subr.mxu0 0.0
        %4384 = vmatpush1.msra.mxu0 0.0
        %4385 = vmatprep.subr.mxu0 0.0
        %4386 = vmatpush1.msra.mxu0 0.0
        %4387 = vmatprep.subr.mxu0 0.0
        %4388 = vmatpush1.msra.mxu0 0.0
        %4389 = vmatprep.subr.mxu0 0.0
        %4390 = vmatpush1.msra.mxu0 0.0
        %4391 = vmatprep.subr.mxu0 0.0
        %4392 = vmatpush1.msra.mxu0 0.0
        %4393 = vmatprep.mubr.f32.mxu0 %v4324
        %4394 = vmatmul.mubr.f32.gmra.mrb[0].mxu0 %v4321
        %v4395 = vpop.f32.mrb[0].mxu0
        %v4396 = vadd.f32 0.0, %v4395
        %v4397 = vpop.f32.mrb[0].mxu0
        %4398 = vdwg.mxu0
        %v4399 = vadd.f32 %v4299, %v4396
        %s4400 = scalar_lea.vmem %s5, 1120
        %v4401 = vld [vmem:[%s4400] sm:$0xff]
        %v4402 = vld [vmem:[%s4400 + $0x8] sm:$0xff]
        %v4403 = vld [vmem:[%s4400 + $0x10] sm:$0xff]
        %v4404 = vld [vmem:[%s4400 + $0x18] sm:$0xff]
        %v4405 = vld [vmem:[%s4400 + $0x20] sm:$0xff]
        %v4406 = vld [vmem:[%s4400 + $0x28] sm:$0xff]
        %v4407 = vld [vmem:[%s4400 + $0x30] sm:$0xff]
        %v4408 = vld [vmem:[%s4400 + $0x38] sm:$0xff]
        %v4409 = vld [vmem:[%s4400 + $0x40] sm:$0xff]
        %v4410 = vld [vmem:[%s4400 + $0x48] sm:$0xff]
        %v4411 = vld [vmem:[%s4400 + $0x50] sm:$0xff]
        %v4412 = vld [vmem:[%s4400 + $0x58] sm:$0xff]
        %v4413 = vld [vmem:[%s4400 + $0x60] sm:$0xff]
        %v4414 = vld [vmem:[%s4400 + $0x68] sm:$0xff]
        %v4415 = vld [vmem:[%s4400 + $0x70] sm:$0xff]
        %v4416 = vld [vmem:[%s4400 + $0x78] sm:$0xff]
        %v4417 = vld [vmem:[%s4400 + $0x80] sm:$0xff]
        %v4418 = vld [vmem:[%s4400 + $0x88] sm:$0xff]
        %v4419 = vld [vmem:[%s4400 + $0x90] sm:$0xff]
        %v4420 = vld [vmem:[%s4400 + $0x98] sm:$0x3f]
        %v4421 = vrot.slane %v3701, 7
        %v4422 = vrot.slane %v3702, 7
        %v4424 = vsel %vm2915, %v4422, 0
        %v4427 = vsel %vm3751, %v4420, 0
        %4429 = vmatprep.subr.mxu0 0.0
        %4430 = vmatpush1.msra.mxu0 %v4401
        %4431 = vmatprep.subr.mxu0 0.0
        %4432 = vmatpush1.msra.mxu0 %v4402
        %4433 = vmatprep.subr.mxu0 0.0
        %4434 = vmatpush1.msra.mxu0 %v4403
        %4435 = vmatprep.subr.mxu0 0.0
        %4436 = vmatpush1.msra.mxu0 %v4404
        %4437 = vmatprep.subr.mxu0 0.0
        %4438 = vmatpush1.msra.mxu0 %v4405
        %4439 = vmatprep.subr.mxu0 0.0
        %4440 = vmatpush1.msra.mxu0 %v4406
        %4441 = vmatprep.subr.mxu0 0.0
        %4442 = vmatpush1.msra.mxu0 %v4407
        %4443 = vmatprep.subr.mxu0 0.0
        %4444 = vmatpush1.msra.mxu0 %v4408
        %4445 = vmatprep.subr.mxu0 0.0
        %4446 = vmatpush1.msra.mxu0 %v4409
        %4447 = vmatprep.subr.mxu0 0.0
        %4448 = vmatpush1.msra.mxu0 %v4410
        %4449 = vmatprep.subr.mxu0 0.0
        %4450 = vmatpush1.msra.mxu0 %v4411
        %4451 = vmatprep.subr.mxu0 0.0
        %4452 = vmatpush1.msra.mxu0 %v4412
        %4453 = vmatprep.subr.mxu0 0.0
        %4454 = vmatpush1.msra.mxu0 %v4413
        %4455 = vmatprep.subr.mxu0 0.0
        %4456 = vmatpush1.msra.mxu0 %v4414
        %4457 = vmatprep.subr.mxu0 0.0
        %4458 = vmatpush1.msra.mxu0 %v4415
        %4459 = vmatprep.subr.mxu0 0.0
        %4460 = vmatpush1.msra.mxu0 %v4416
        %4461 = vmatprep.subr.mxu0 0.0
        %4462 = vmatpush1.msra.mxu0 %v4417
        %4463 = vmatprep.subr.mxu0 0.0
        %4464 = vmatpush1.msra.mxu0 %v4418
        %4465 = vmatprep.subr.mxu0 0.0
        %4466 = vmatpush1.msra.mxu0 %v4419
        %4467 = vmatprep.subr.mxu0 0.0
        %4468 = vmatpush1.msra.mxu0 %v4427
        %4469 = vmatprep.subr.mxu0 0.0
        %4470 = vmatpush1.msra.mxu0 0.0
        %4471 = vmatprep.subr.mxu0 0.0
        %4472 = vmatpush1.msra.mxu0 0.0
        %4473 = vmatprep.subr.mxu0 0.0
        %4474 = vmatpush1.msra.mxu0 0.0
        %4475 = vmatprep.subr.mxu0 0.0
        %4476 = vmatpush1.msra.mxu0 0.0
        %4477 = vmatprep.subr.mxu0 0.0
        %4478 = vmatpush1.msra.mxu0 0.0
        %4479 = vmatprep.subr.mxu0 0.0
        %4480 = vmatpush1.msra.mxu0 0.0
        %4481 = vmatprep.subr.mxu0 0.0
        %4482 = vmatpush1.msra.mxu0 0.0
        %4483 = vmatprep.subr.mxu0 0.0
        %4484 = vmatpush1.msra.mxu0 0.0
        %4485 = vmatprep.subr.mxu0 0.0
        %4486 = vmatpush1.msra.mxu0 0.0
        %4487 = vmatprep.subr.mxu0 0.0
        %4488 = vmatpush1.msra.mxu0 0.0
        %4489 = vmatprep.subr.mxu0 0.0
        %4490 = vmatpush1.msra.mxu0 0.0
        %4491 = vmatprep.subr.mxu0 0.0
        %4492 = vmatpush1.msra.mxu0 0.0
        %4493 = vmatprep.mubr.f32.mxu0 %v4424
        %4494 = vmatmul.mubr.f32.gmra.mrb[0].mxu0 %v4421
        %v4495 = vpop.f32.mrb[0].mxu0
        %v4496 = vadd.f32 0.0, %v4495
        %v4497 = vpop.f32.mrb[0].mxu0
        %4498 = vdwg.mxu0
        %v4499 = vadd.f32 %v4399, %v4496
        %v4500 = vld [vmem:[%s6] sm:$0x1]
        %v4501 = vadd.f32 %v4499, %v4500
        %v4502 = vmax.f32 %v4501, 0.0
        %v4503 = vld [vmem:[%s7] sm:$0xff]
        %v4504 = vld [vmem:[%s7 + $0x8] sm:$0xff]
        %v4505 = vld [vmem:[%s7 + $0x10] sm:$0xff]
        %v4506 = vld [vmem:[%s7 + $0x18] sm:$0xff]
        %v4507 = vld [vmem:[%s7 + $0x20] sm:$0xff]
        %v4508 = vld [vmem:[%s7 + $0x28] sm:$0xff]
        %v4509 = vld [vmem:[%s7 + $0x30] sm:$0xff]
        %v4510 = vld [vmem:[%s7 + $0x38] sm:$0xff]
        %v4511 = vld [vmem:[%s7 + $0x40] sm:$0xff]
        %v4512 = vld [vmem:[%s7 + $0x48] sm:$0xff]
        %v4513 = vld [vmem:[%s7 + $0x50] sm:$0xff]
        %v4514 = vld [vmem:[%s7 + $0x58] sm:$0xff]
        %v4515 = vld [vmem:[%s7 + $0x60] sm:$0xff]
        %v4516 = vld [vmem:[%s7 + $0x68] sm:$0xff]
        %v4517 = vld [vmem:[%s7 + $0x70] sm:$0xff]
        %v4518 = vld [vmem:[%s7 + $0x78] sm:$0xff]
        %v4519 = vld [vmem:[%s8] sm:$0x1]
        %4520 = vmatprep.subr.mxu0 0.0
        %4521 = vmatpush1.msra.mxu0 %v4503
        %4522 = vmatprep.subr.mxu0 0.0
        %4523 = vmatpush1.msra.mxu0 %v4504
        %4524 = vmatprep.subr.mxu0 0.0
        %4525 = vmatpush1.msra.mxu0 %v4505
        %4526 = vmatprep.subr.mxu0 0.0
        %4527 = vmatpush1.msra.mxu0 %v4506
        %4528 = vmatprep.subr.mxu0 0.0
        %4529 = vmatpush1.msra.mxu0 %v4507
        %4530 = vmatprep.subr.mxu0 0.0
        %4531 = vmatpush1.msra.mxu0 %v4508
        %4532 = vmatprep.subr.mxu0 0.0
        %4533 = vmatpush1.msra.mxu0 %v4509
        %4534 = vmatprep.subr.mxu0 0.0
        %4535 = vmatpush1.msra.mxu0 %v4510
        %4536 = vmatprep.subr.mxu0 0.0
        %4537 = vmatpush1.msra.mxu0 %v4511
        %4538 = vmatprep.subr.mxu0 0.0
        %4539 = vmatpush1.msra.mxu0 %v4512
        %4540 = vmatprep.subr.mxu0 0.0
        %4541 = vmatpush1.msra.mxu0 %v4513
        %4542 = vmatprep.subr.mxu0 0.0
        %4543 = vmatpush1.msra.mxu0 %v4514
        %4544 = vmatprep.subr.mxu0 0.0
        %4545 = vmatpush1.msra.mxu0 %v4515
        %4546 = vmatprep.subr.mxu0 0.0
        %4547 = vmatpush1.msra.mxu0 %v4516
        %4548 = vmatprep.subr.mxu0 0.0
        %4549 = vmatpush1.msra.mxu0 %v4517
        %4550 = vmatprep.subr.mxu0 0.0
        %4551 = vmatpush1.msra.mxu0 %v4518
        %4552 = vmatprep.subr.mxu0 0.0
        %4553 = vmatpush1.msra.mxu0 0.0
        %4554 = vmatprep.subr.mxu0 0.0
        %4555 = vmatpush1.msra.mxu0 0.0
        %4556 = vmatprep.subr.mxu0 0.0
        %4557 = vmatpush1.msra.mxu0 0.0
        %4558 = vmatprep.subr.mxu0 0.0
        %4559 = vmatpush1.msra.mxu0 0.0
        %4560 = vmatprep.subr.mxu0 0.0
        %4561 = vmatpush1.msra.mxu0 0.0
        %4562 = vmatprep.subr.mxu0 0.0
        %4563 = vmatpush1.msra.mxu0 0.0
        %4564 = vmatprep.subr.mxu0 0.0
        %4565 = vmatpush1.msra.mxu0 0.0
        %4566 = vmatprep.subr.mxu0 0.0
        %4567 = vmatpush1.msra.mxu0 0.0
        %4568 = vmatprep.subr.mxu0 0.0
        %4569 = vmatpush1.msra.mxu0 0.0
        %4570 = vmatprep.subr.mxu0 0.0
        %4571 = vmatpush1.msra.mxu0 0.0
        %4572 = vmatprep.subr.mxu0 0.0
        %4573 = vmatpush1.msra.mxu0 0.0
        %4574 = vmatprep.subr.mxu0 0.0
        %4575 = vmatpush1.msra.mxu0 0.0
        %4576 = vmatprep.subr.mxu0 0.0
        %4577 = vmatpush1.msra.mxu0 0.0
        %4578 = vmatprep.subr.mxu0 0.0
        %4579 = vmatpush1.msra.mxu0 0.0
        %4580 = vmatprep.subr.mxu0 0.0
        %4581 = vmatpush1.msra.mxu0 0.0
        %4582 = vmatprep.subr.mxu0 0.0
        %4583 = vmatpush1.msra.mxu0 0.0
        %4584 = vmatprep.mubr.f32.mxu0 0.0
        %4585 = vmatmul.mubr.f32.gmra.mrb[0].mxu0 %v4502
        %v4586 = vpop.f32.mrb[0].mxu0
        %v4587 = vadd.f32 %v4519, %v4586
        %v4588 = vpop.f32.mrb[0].mxu0
        %4589 = vdwg.mxu0
        %vm4590 = vcmask 16384
        %v4591 = vsel %vm4590, %v4587, -inf
        %4592 = vmax.xlane.f32.xlu0 %v4591
        %v4593 = vpop.xlane.xlu0 %4592
        %v4594 = vsub.f32 %v4587, %v4593
        %v4595 = vmul.f32 %v4594, 1.442695
        %v4596 = vpow.pop %v4595
        %v4597 = vsel %vm4590, %v4596, 0.0
        %4598 = vadd.xlane.f32.xlu0 %v4597
        %v4599 = vpop.xlane.xlu0 %4598
        %v4600 = vrcp.pop %v4599
        %v4601 = vmul.f32 %v4596, %v4600
        %4602 = vst.msk [vmem:[%s324] sm:$0x1] %vm4590, %v4601
        %s4603 = sand.u32 %s225, 1
        %s4604 = scalar_lea.sflag [#allocation4], %s4603
        %s4605 = sand.u32 %s225, 1
        %s4606 = scalar_lea.vmem [#allocation3], %s4605
        // Predicated region
        $region57: #{feature_extractor_forward.1} parent=55 // pred_check
          %p4607 = pneg %p235
        $region58: #{feature_extractor_forward.1} parent=55 // pred_check_branch
          %4609 = sbr.rel (%p4607) target = $region60
        $region59: #{feature_extractor_forward.1} parent=55 // pred_region
          %s4611 = ssub.s32 16, 16
          %4612 = vsyncadd %s4604, %s4611
          %s4613 = smul.addr %s23, 16
          %s4614 = scalar_lea.hbm %s9, %s4613
          %s4616 = sshll.u32 %s4606, 4
          %s4617 = int_to_ptr.vmem [resolvable:$true] %s4616
          %4619 = dma.vmem_to_hbm [thread:$0]  %s4617, 16, %s4614, %s4604
        $region60: #{feature_extractor_forward.1} parent=55 // pred_fallthru
          _
      $region56: #{feature_extractor_forward.1} parent=5 // pred_fallthru
        _
      %p4620 = scmp.le.s32.totalorder 2, %s18
      // Predicated region
      $region61: #{feature_extractor_forward.1} parent=5 // pred_check
        %p4621 = pneg %p4620
      $region62: #{feature_extractor_forward.1} parent=5 // pred_check_branch
        %4623 = sbr.rel (%p4621) target = $region64
      $region63: #{feature_extractor_forward.1} parent=5 // pred_region
        %s4624 = ssub.s32 %s18, 2
        // Predicated region
        $region65: #{feature_extractor_forward.1} parent=63 // pred_check
          %p4625 = pneg %p241
        $region66: #{feature_extractor_forward.1} parent=63 // pred_check_branch
          %4627 = sbr.rel (%p4625) target = $region68
        $region67: #{feature_extractor_forward.1} parent=63 // pred_region
          %s4628 = sand.u32 %s226, 1
          %s4629 = scalar_lea.sflag [#allocation4], %s4628
          %s4630 = sand.u32 %s226, 1
          %s4631 = scalar_lea.vmem [#allocation3], %s4630
          %4632 = dma.done %s4629, 16
        $region68: #{feature_extractor_forward.1} parent=63 // pred_fallthru
          _
      $region64: #{feature_extractor_forward.1} parent=5 // pred_fallthru
        _
    $region6: #{feature_extractor_forward.1} parent=1 // loop_footer
      %s22 = sadd.s32 1, %s18
    $region7: #{feature_extractor_forward.1} parent=1 // loop_footer_branch
      %17 = sbr.rel target = $region3
    $region8: #{feature_extractor_forward.1} parent=1 // loop_exit
      _
    %4633 = vsyncpa [#allocation4], 1
    %s4634 = scalar_lea.sflag [#allocation4], 1
    %4635 = vsyncpa %s4634, 1

</llo_original>
